<compile_context>
chip_gen: v7x
topology: tpu7x:2x2x1
jax: 0.10.0
libtpu: 0.0.40
codegen_flags: <defaults>
</compile_context>

<pallas_src>
import functools

import jax
import jax.numpy as jnp
from jax.experimental import pallas as pl
from jax.experimental.pallas import tpu as pltpu


def _round_up(x, m):
    return (x + m - 1) // m * m


def _cdiv(a, b):
    return -(-a // b)


def _choose_tile_m(M, max_tile_m):
    """Pick (tile_m, padded_M) for the M (rows) grid axis.

    - tile_m is a multiple of 16 (bf16 sublane packing; avoids degenerate
      sub-16-sublane blocks at tiny M),
    - tile_m ~= M / n_steps, so tail padding is small (no round_up(M, tile_m)
      blow-up),
    - when M is large enough, n_steps is forced even and >= 2 so the two v7x
      TensorCores get balanced work under dimension_semantics=("parallel",).
    """
    n = max(1, _cdiv(M, max_tile_m))
    if M > 16:
        n = max(n, 2)            # keep both v7x TensorCores busy
        if n % 2:
            n += 1               # balanced two-core split
    tm = _round_up(_cdiv(M, n), 16)
    n = _cdiv(M, tm)
    return tm, n * tm


_VMEM_LIMIT = 40 * 1024 * 1024   # > v5e's 16 MiB default, < v7x's 64 MiB physical


# ----------------------------------------------------------------------------
# Kernel 1: out = relu?(x @ w + b).  bf16 MXU operands, f32 accumulate and
# bias/ReLU epilogue, store cast to out_dtype (bf16 for conv activations).
# w is pre-padded so N is a multiple of 128 (lane-dense output block).
# ----------------------------------------------------------------------------
def _matmul_bias_kernel(x_ref, w_ref, b_ref, o_ref, *, apply_relu):
    acc = jnp.dot(x_ref[...], w_ref[...], preferred_element_type=jnp.float32)
    acc = acc + b_ref[...]                       # (1, Np) bias broadcasts over rows
    if apply_relu:
        acc = jnp.maximum(acc, 0.0)
    o_ref[...] = acc.astype(o_ref.dtype)         # bf16 store for conv activations


def matmul_bias(x_bf16, w_bf16, b_f32, *, apply_relu, out_dtype=jnp.bfloat16,
                max_tile_m=512):
    """x:(M,K) bf16, w:(K,Np) bf16 with Np%128==0, b:(1,Np) f32 -> (M,Np)."""
    M, K = x_bf16.shape
    Kw, Np = w_bf16.shape
    assert K == Kw and Np % 128 == 0, (K, Kw, Np)
    xb = x_bf16 if x_bf16.dtype == jnp.bfloat16 else x_bf16.astype(jnp.bfloat16)
    tm, Mp = _choose_tile_m(M, max_tile_m)
    if Mp != M:
        xb = jnp.pad(xb, ((0, Mp - M), (0, 0)))
    out_bytes = jnp.dtype(out_dtype).itemsize
    cost = pl.CostEstimate(
        flops=2 * Mp * K * Np,
        transcendentals=0,
        bytes_accessed=Mp * K * 2 + K * Np * 2 + Np * 4 + Mp * Np * out_bytes)
    out = pl.pallas_call(
        functools.partial(_matmul_bias_kernel, apply_relu=apply_relu),
        out_shape=jax.ShapeDtypeStruct((Mp, Np), out_dtype),
        grid=(Mp // tm,),
        in_specs=[
            pl.BlockSpec((tm, K), lambda i: (i, 0)),
            pl.BlockSpec((K, Np), lambda i: (0, 0)),
            pl.BlockSpec((1, Np), lambda i: (0, 0)),
        ],
        out_specs=pl.BlockSpec((tm, Np), lambda i: (i, 0)),
        compiler_params=pltpu.CompilerParams(
            dimension_semantics=("parallel",),
            vmem_limit_bytes=_VMEM_LIMIT),
        cost_estimate=cost,
    )(xb, w_bf16, b_f32)
    return out[:M]


# ----------------------------------------------------------------------------
# Kernel 2: fused FC head:  out = relu(x @ W1 + b1) @ W2 + b2
# The (tile_m, 256) hidden activation stays in VMEM/vregs; only the final
# (tile_m, 128)-padded logits are written back to HBM.
# ----------------------------------------------------------------------------
def _fused_fc_kernel(x_ref, w1_ref, b1_ref, w2_ref, b2_ref, o_ref):
    h = jnp.dot(x_ref[...], w1_ref[...], preferred_element_type=jnp.float32)
    h = jnp.maximum(h + b1_ref[...], 0.0)                     # f32 epilogue
    out = jnp.dot(h.astype(jnp.bfloat16), w2_ref[...],
                  preferred_element_type=jnp.float32)
    o_ref[...] = out + b2_ref[...]


def fused_fc(x_bf16, w1_bf16, b1_f32, w2_bf16, b2_f32, max_tile_m=1024):
    """x:(M,K) bf16, w1:(K,H) bf16, w2:(H,Np) bf16, Np%128==0 -> (M,Np) f32."""
    M, K = x_bf16.shape
    Kw, H = w1_bf16.shape
    Hw, Np = w2_bf16.shape
    assert K == Kw and H == Hw and Np % 128 == 0
    xb = x_bf16 if x_bf16.dtype == jnp.bfloat16 else x_bf16.astype(jnp.bfloat16)
    tm, Mp = _choose_tile_m(M, max_tile_m)
    if Mp != M:
        xb = jnp.pad(xb, ((0, Mp - M), (0, 0)))
    cost = pl.CostEstimate(
        flops=2 * Mp * K * H + 2 * Mp * H * Np,
        transcendentals=0,
        bytes_accessed=(Mp * K * 2 + K * H * 2 + H * 4
                        + H * Np * 2 + Np * 4 + Mp * Np * 4))
    out = pl.pallas_call(
        _fused_fc_kernel,
        out_shape=jax.ShapeDtypeStruct((Mp, Np), jnp.float32),
        grid=(Mp // tm,),
        in_specs=[
            pl.BlockSpec((tm, K), lambda i: (i, 0)),
            pl.BlockSpec((K, H), lambda i: (0, 0)),
            pl.BlockSpec((1, H), lambda i: (0, 0)),
            pl.BlockSpec((H, Np), lambda i: (0, 0)),
            pl.BlockSpec((1, Np), lambda i: (0, 0)),
        ],
        out_specs=pl.BlockSpec((tm, Np), lambda i: (i, 0)),
        compiler_params=pltpu.CompilerParams(
            dimension_semantics=("parallel",),
            vmem_limit_bytes=_VMEM_LIMIT),
        cost_estimate=cost,
    )(xb, w1_bf16, b1_f32, w2_bf16, b2_f32)
    return out[:M]


# ----------------------------------------------------------------------------
# Conv2d = NHWC im2col (plain-JAX strided slices, bf16) + Pallas matmul kernel.
# TODO(synk): move the conv1 patch extraction into the kernel (DMA the padded
#   98x98 image into VMEM, build (tm,64) patch rows in-kernel) once lane-strided
#   in-kernel gathers are practical; for now XLA fuses the slices+stack.
# ----------------------------------------------------------------------------
def _im2col_nhwc(x, ksize, stride, padding):
    """x:(B,H,W,C) -> (B*OH*OW, KH*KW*C) patches, column order (kh,kw,c)."""
    if padding:
        x = jnp.pad(x, ((0, 0), (padding, padding), (padding, padding), (0, 0)))
    B, Hp, Wp, C = x.shape
    OH = (Hp - ksize) // stride + 1
    OW = (Wp - ksize) // stride + 1
    slices = [
        x[:, kh:kh + stride * OH:stride, kw:kw + stride * OW:stride, :]
        for kh in range(ksize) for kw in range(ksize)
    ]
    patches = jnp.stack(slices, axis=3)              # (B, OH, OW, KH*KW, C)
    return patches.reshape(B * OH * OW, ksize * ksize * C), OH, OW


def conv2d_nhwc(x, w_mat_bf16, b_f32, ksize, stride, padding, cout):
    """x:(B,H,W,Cin) NHWC bf16, w_mat:(KH*KW*Cin, Np) bf16 -> (B,OH,OW,cout) bf16."""
    B = x.shape[0]
    cols, OH, OW = _im2col_nhwc(x, ksize, stride, padding)
    out = matmul_bias(cols, w_mat_bf16, b_f32, apply_relu=True,
                      out_dtype=jnp.bfloat16)
    # Channel trim of the 128-lane-padded output is folded by XLA into the
    # consumer's gather/reshape (no separate HBM pass).
    return out[:, :cout].reshape(B, OH, OW, cout)


# ----------------------------------------------------------------------------
# Parameters (PyTorch layout) + one-time conversion to kernel layout.
# ----------------------------------------------------------------------------
def init_qnetwork_params(key, action_space_size):
    ks = jax.random.split(key, 8)

    def w(k, shape, fan_in):
        return jax.random.normal(k, shape, jnp.float32) * (1.0 / jnp.sqrt(fan_in))

    return {
        "conv1_w": w(ks[0], (16, 1, 8, 8), 1 * 8 * 8),
        "conv1_b": w(ks[1], (16,), 1 * 8 * 8),
        "conv2_w": w(ks[2], (32, 16, 4, 4), 16 * 4 * 4),
        "conv2_b": w(ks[3], (32,), 16 * 4 * 4),
        "fc1_w":   w(ks[4], (256, 3200), 3200),
        "fc1_b":   w(ks[5], (256,), 3200),
        "fc2_w":   w(ks[6], (action_space_size, 256), 256),
        "fc2_b":   w(ks[7], (action_space_size,), 256),
    }


def prepare_params(p):
    """One-time: transpose to (K,N), pad N to x128, cast weights to bf16."""
    def pad_n(w2d, b1d):
        K, N = w2d.shape
        Np = _round_up(N, 128)
        w = jnp.pad(w2d, ((0, 0), (0, Np - N))).astype(jnp.bfloat16)
        b = jnp.pad(b1d, (0, Np - N)).reshape(1, Np).astype(jnp.float32)
        return w, b

    # Conv weights OIHW -> (KH,KW,Cin,Cout) -> (KH*KW*Cin, Cout), matching the
    # NHWC im2col column order (kh, kw, c).
    c1 = p["conv1_w"].transpose(2, 3, 1, 0).reshape(8 * 8 * 1, 16)
    c2 = p["conv2_w"].transpose(2, 3, 1, 0).reshape(4 * 4 * 16, 32)
    c1w, c1b = pad_n(c1, p["conv1_b"])
    c2w, c2b = pad_n(c2, p["conv2_b"])

    # fc1: PyTorch flattens NCHW as (C,H,W); our NHWC flatten is (H,W,C).
    # Permute fc1's input dimension once so results match exactly.
    f1 = p["fc1_w"].reshape(256, 32, 10, 10).transpose(0, 2, 3, 1)
    f1w = f1.reshape(256, 3200).T.astype(jnp.bfloat16)          # (3200, 256)
    f1b = p["fc1_b"].reshape(1, 256).astype(jnp.float32)

    f2w, f2b = pad_n(p["fc2_w"].T, p["fc2_b"])                  # (256, 128pad)

    return {"c1w": c1w, "c1b": c1b, "c2w": c2w, "c2b": c2b,
            "f1w": f1w, "f1b": f1b, "f2w": f2w, "f2b": f2b}


# ----------------------------------------------------------------------------
# Forward pass
# ----------------------------------------------------------------------------
def qnetwork_forward(pp, x, n_actions):
    # Single bf16 cast of the raw image: all downstream activations stay bf16
    # between pallas_calls (no per-stage cast passes).
    prop = x.reshape(-1, 1, 96, 96).transpose(0, 2, 3, 1).astype(jnp.bfloat16)
    prop = conv2d_nhwc(prop, pp["c1w"], pp["c1b"], 8, 4, 1, 16)  # (B,23,23,16) bf16
    prop = conv2d_nhwc(prop, pp["c2w"], pp["c2b"], 4, 2, 0, 32)  # (B,10,10,32) bf16
    flat = prop.reshape(-1, 10 * 10 * 32)                        # (B,3200) HWC order
    out = fused_fc(flat, pp["f1w"], pp["f1b"], pp["f2w"], pp["f2b"])  # (B,128pad) f32
    return out[:, :n_actions]


# ----------------------------------------------------------------------------
# Pure-JAX reference (for correctness check only)
# ----------------------------------------------------------------------------
def qnetwork_ref(params, x):
    hp = jax.lax.Precision.HIGHEST
    prop = x.reshape(-1, 1, 96, 96)
    prop = jax.lax.conv_general_dilated(
        prop, params["conv1_w"], (4, 4), [(1, 1), (1, 1)],
        dimension_numbers=("NCHW", "OIHW", "NCHW"), precision=hp)
    prop = jax.nn.relu(prop + params["conv1_b"][None, :, None, None])
    prop = jax.lax.conv_general_dilated(
        prop, params["conv2_w"], (2, 2), [(0, 0), (0, 0)],
        dimension_numbers=("NCHW", "OIHW", "NCHW"), precision=hp)
    prop = jax.nn.relu(prop + params["conv2_b"][None, :, None, None])
    flat = prop.reshape(-1, 32 * 10 * 10)
    prop = jax.nn.relu(jnp.dot(flat, params["fc1_w"].T, precision=hp)
                       + params["fc1_b"])
    return jnp.dot(prop, params["fc2_w"].T, precision=hp) + params["fc2_b"]


if __name__ == "__main__":
    ACTION_SPACE = 4
    BATCH = 2

    key = jax.random.PRNGKey(0)
    k_param, k_x = jax.random.split(key)
    params = init_qnetwork_params(k_param, ACTION_SPACE)
    # Input: batch of 96x96 single-channel observations (forward implies 96x96).
    x = jax.random.normal(k_x, (BATCH, 1, 96, 96), jnp.float32)

    prepped = prepare_params(params)                 # one-time weight prep
    fwd = jax.jit(functools.partial(qnetwork_forward, n_actions=ACTION_SPACE))

    out = jax.block_until_ready(fwd(prepped, x))
    ref = jax.block_until_ready(qnetwork_ref(params, x))

    assert out.shape == (BATCH, ACTION_SPACE), out.shape
    assert bool(jnp.all(jnp.isfinite(out)))
    max_diff = float(jnp.max(jnp.abs(out - ref)))
    # bf16 MXU operands / bf16 intermediate activations with f32 accumulation:
    # slightly looser tolerance than pure f32.
    assert bool(jnp.allclose(out, ref, rtol=2e-2, atol=2e-2)), (
        "max abs diff:", max_diff)

    print("KERNEL_OK")
</pallas_src>

<mosaic_0001>
module attributes {stable_mosaic.version = 11 : i64} {
  func.func @_matmul_bias_kernel(%arg0: i32, %arg1: memref<272x64xbf16, #tpu.memory_space<vmem>>, %arg2: memref<64x128xbf16, #tpu.memory_space<vmem>>, %arg3: memref<1x128xf32, #tpu.memory_space<vmem>>, %arg4: memref<272x128xbf16, #tpu.memory_space<vmem>>) attributes {dimension_semantics = [#tpu.dimension_semantics<parallel>], iteration_bounds = array<i64: 4>, scalar_prefetch = 0 : i64, scratch_operands = 0 : i64, tpu.core_type = #tpu.core_type<tc>, window_params = [{transform_indices = @transform_0, window_bounds = array<i64: 272, 64>}, {pipeline_mode = #tpu.pipeline_mode<synchronous>, transform_indices = @transform_1, window_bounds = array<i64: 64, 128>}, {pipeline_mode = #tpu.pipeline_mode<synchronous>, transform_indices = @transform_2, window_bounds = array<i64: 1, 128>}, {transform_indices = @transform_3, window_bounds = array<i64: 272, 128>}]} {
    %c0 = arith.constant 0 : index
    %c0_0 = arith.constant 0 : index
    %0 = vector.load %arg1[%c0, %c0_0] : memref<272x64xbf16, #tpu.memory_space<vmem>>, vector<272x64xbf16>
    %c0_1 = arith.constant 0 : index
    %c0_2 = arith.constant 0 : index
    %1 = vector.load %arg2[%c0_1, %c0_2] : memref<64x128xbf16, #tpu.memory_space<vmem>>, vector<64x128xbf16>
    %cst = arith.constant dense<0.000000e+00> : vector<272x128xf32>
    %2 = tpu.matmul %0, %1, %cst {dimension_numbers = #tpu.dot_dimension_numbers<[1], [0], [0], [1], [0, 0, 1, 1], [], []>} : vector<272x64xbf16>, vector<64x128xbf16>, vector<272x128xf32> -> vector<272x128xf32>
    %c0_3 = arith.constant 0 : index
    %c0_4 = arith.constant 0 : index
    %3 = vector.load %arg3[%c0_3, %c0_4] : memref<1x128xf32, #tpu.memory_space<vmem>>, vector<1x128xf32>
    %4 = vector.broadcast %3 : vector<1x128xf32> to vector<272x128xf32>
    %5 = arith.addf %2, %4 : vector<272x128xf32>
    %cst_5 = arith.constant 0.000000e+00 : f32
    %6 = vector.broadcast %cst_5 : f32 to vector<272x128xf32>
    %7 = arith.maximumf %5, %6 : vector<272x128xf32>
    %8 = arith.truncf %7 : vector<272x128xf32> to vector<272x128xbf16>
    %c0_6 = arith.constant 0 : index
    %c0_7 = arith.constant 0 : index
    %9 = vector.load %arg4[%c0_6, %c0_7] : memref<272x128xbf16, #tpu.memory_space<vmem>>, vector<272x128xbf16>
    tpu.vector_store %arg4[%c0_6, %c0_7], %8 {strides = array<i32>} : memref<272x128xbf16, #tpu.memory_space<vmem>>, vector<272x128xbf16>,
    return
  }
  func.func @transform_0(%arg0: i32) -> (i32, i32) {
    %c0_i32 = arith.constant 0 : i32
    %c0_i32_0 = arith.constant 0 : i32
    return %arg0, %c0_i32 : i32, i32
  }
  func.func @transform_1(%arg0: i32) -> (i32, i32) {
    %c0_i32 = arith.constant 0 : i32
    %c0_i32_0 = arith.constant 0 : i32
    %c0_i32_1 = arith.constant 0 : i32
    return %c0_i32, %c0_i32_0 : i32, i32
  }
  func.func @transform_2(%arg0: i32) -> (i32, i32) {
    %c0_i32 = arith.constant 0 : i32
    %c0_i32_0 = arith.constant 0 : i32
    %c0_i32_1 = arith.constant 0 : i32
    return %c0_i32, %c0_i32_0 : i32, i32
  }
  func.func @transform_3(%arg0: i32) -> (i32, i32) {
    %c0_i32 = arith.constant 0 : i32
    %c0_i32_0 = arith.constant 0 : i32
    return %arg0, %c0_i32 : i32, i32
  }
}

module attributes {stable_mosaic.version = 11 : i64} {
  func.func @_matmul_bias_kernel(%arg0: i32, %arg1: memref<112x256xbf16, #tpu.memory_space<vmem>>, %arg2: memref<256x128xbf16, #tpu.memory_space<vmem>>, %arg3: memref<1x128xf32, #tpu.memory_space<vmem>>, %arg4: memref<112x128xbf16, #tpu.memory_space<vmem>>) attributes {dimension_semantics = [#tpu.dimension_semantics<parallel>], iteration_bounds = array<i64: 2>, scalar_prefetch = 0 : i64, scratch_operands = 0 : i64, tpu.core_type = #tpu.core_type<tc>, window_params = [{transform_indices = @transform_0, window_bounds = array<i64: 112, 256>}, {pipeline_mode = #tpu.pipeline_mode<synchronous>, transform_indices = @transform_1, window_bounds = array<i64: 256, 128>}, {pipeline_mode = #tpu.pipeline_mode<synchronous>, transform_indices = @transform_2, window_bounds = array<i64: 1, 128>}, {transform_indices = @transform_3, window_bounds = array<i64: 112, 128>}]} {
    %c0 = arith.constant 0 : index
    %c0_0 = arith.constant 0 : index
    %0 = vector.load %arg1[%c0, %c0_0] : memref<112x256xbf16, #tpu.memory_space<vmem>>, vector<112x256xbf16>
    %c0_1 = arith.constant 0 : index
    %c0_2 = arith.constant 0 : index
    %1 = vector.load %arg2[%c0_1, %c0_2] : memref<256x128xbf16, #tpu.memory_space<vmem>>, vector<256x128xbf16>
    %cst = arith.constant dense<0.000000e+00> : vector<112x128xf32>
    %2 = tpu.matmul %0, %1, %cst {dimension_numbers = #tpu.dot_dimension_numbers<[1], [0], [0], [1], [0, 0, 1, 1], [], []>} : vector<112x256xbf16>, vector<256x128xbf16>, vector<112x128xf32> -> vector<112x128xf32>
    %c0_3 = arith.constant 0 : index
    %c0_4 = arith.constant 0 : index
    %3 = vector.load %arg3[%c0_3, %c0_4] : memref<1x128xf32, #tpu.memory_space<vmem>>, vector<1x128xf32>
    %4 = vector.broadcast %3 : vector<1x128xf32> to vector<112x128xf32>
    %5 = arith.addf %2, %4 : vector<112x128xf32>
    %cst_5 = arith.constant 0.000000e+00 : f32
    %6 = vector.broadcast %cst_5 : f32 to vector<112x128xf32>
    %7 = arith.maximumf %5, %6 : vector<112x128xf32>
    %8 = arith.truncf %7 : vector<112x128xf32> to vector<112x128xbf16>
    %c0_6 = arith.constant 0 : index
    %c0_7 = arith.constant 0 : index
    %9 = vector.load %arg4[%c0_6, %c0_7] : memref<112x128xbf16, #tpu.memory_space<vmem>>, vector<112x128xbf16>
    tpu.vector_store %arg4[%c0_6, %c0_7], %8 {strides = array<i32>} : memref<112x128xbf16, #tpu.memory_space<vmem>>, vector<112x128xbf16>,
    return
  }
  func.func @transform_0(%arg0: i32) -> (i32, i32) {
    %c0_i32 = arith.constant 0 : i32
    %c0_i32_0 = arith.constant 0 : i32
    return %arg0, %c0_i32 : i32, i32
  }
  func.func @transform_1(%arg0: i32) -> (i32, i32) {
    %c0_i32 = arith.constant 0 : i32
    %c0_i32_0 = arith.constant 0 : i32
    %c0_i32_1 = arith.constant 0 : i32
    return %c0_i32, %c0_i32_0 : i32, i32
  }
  func.func @transform_2(%arg0: i32) -> (i32, i32) {
    %c0_i32 = arith.constant 0 : i32
    %c0_i32_0 = arith.constant 0 : i32
    %c0_i32_1 = arith.constant 0 : i32
    return %c0_i32, %c0_i32_0 : i32, i32
  }
  func.func @transform_3(%arg0: i32) -> (i32, i32) {
    %c0_i32 = arith.constant 0 : i32
    %c0_i32_0 = arith.constant 0 : i32
    return %arg0, %c0_i32 : i32, i32
  }
}

module attributes {stable_mosaic.version = 11 : i64} {
  func.func @_fused_fc_kernel(%arg0: i32, %arg1: memref<16x3200xbf16, #tpu.memory_space<vmem>>, %arg2: memref<3200x256xbf16, #tpu.memory_space<vmem>>, %arg3: memref<1x256xf32, #tpu.memory_space<vmem>>, %arg4: memref<256x128xbf16, #tpu.memory_space<vmem>>, %arg5: memref<1x128xf32, #tpu.memory_space<vmem>>, %arg6: memref<16x128xf32, #tpu.memory_space<vmem>>) attributes {dimension_semantics = [#tpu.dimension_semantics<parallel>], iteration_bounds = array<i64: 1>, scalar_prefetch = 0 : i64, scratch_operands = 0 : i64, tpu.core_type = #tpu.core_type<tc>, window_params = [{transform_indices = @transform_0, window_bounds = array<i64: 16, 3200>}, {pipeline_mode = #tpu.pipeline_mode<synchronous>, transform_indices = @transform_1, window_bounds = array<i64: 3200, 256>}, {pipeline_mode = #tpu.pipeline_mode<synchronous>, transform_indices = @transform_2, window_bounds = array<i64: 1, 256>}, {pipeline_mode = #tpu.pipeline_mode<synchronous>, transform_indices = @transform_3, window_bounds = array<i64: 256, 128>}, {pipeline_mode = #tpu.pipeline_mode<synchronous>, transform_indices = @transform_4, window_bounds = array<i64: 1, 128>}, {transform_indices = @transform_5, window_bounds = array<i64: 16, 128>}]} {
    %c0 = arith.constant 0 : index
    %c0_0 = arith.constant 0 : index
    %0 = vector.load %arg1[%c0, %c0_0] : memref<16x3200xbf16, #tpu.memory_space<vmem>>, vector<16x3200xbf16>
    %c0_1 = arith.constant 0 : index
    %c0_2 = arith.constant 0 : index
    %1 = vector.load %arg2[%c0_1, %c0_2] : memref<3200x256xbf16, #tpu.memory_space<vmem>>, vector<3200x256xbf16>
    %cst = arith.constant dense<0.000000e+00> : vector<16x256xf32>
    %2 = tpu.matmul %0, %1, %cst {dimension_numbers = #tpu.dot_dimension_numbers<[1], [0], [0], [1], [0, 0, 1, 1], [], []>} : vector<16x3200xbf16>, vector<3200x256xbf16>, vector<16x256xf32> -> vector<16x256xf32>
    %c0_3 = arith.constant 0 : index
    %c0_4 = arith.constant 0 : index
    %3 = vector.load %arg3[%c0_3, %c0_4] : memref<1x256xf32, #tpu.memory_space<vmem>>, vector<1x256xf32>
    %4 = vector.broadcast %3 : vector<1x256xf32> to vector<16x256xf32>
    %5 = arith.addf %2, %4 : vector<16x256xf32>
    %cst_5 = arith.constant 0.000000e+00 : f32
    %6 = vector.broadcast %cst_5 : f32 to vector<16x256xf32>
    %7 = arith.maximumf %5, %6 : vector<16x256xf32>
    %8 = arith.truncf %7 : vector<16x256xf32> to vector<16x256xbf16>
    %c0_6 = arith.constant 0 : index
    %c0_7 = arith.constant 0 : index
    %9 = vector.load %arg4[%c0_6, %c0_7] : memref<256x128xbf16, #tpu.memory_space<vmem>>, vector<256x128xbf16>
    %cst_8 = arith.constant dense<0.000000e+00> : vector<16x128xf32>
    %10 = tpu.matmul %8, %9, %cst_8 {dimension_numbers = #tpu.dot_dimension_numbers<[1], [0], [0], [1], [0, 0, 1, 1], [], []>} : vector<16x256xbf16>, vector<256x128xbf16>, vector<16x128xf32> -> vector<16x128xf32>
    %c0_9 = arith.constant 0 : index
    %c0_10 = arith.constant 0 : index
    %11 = vector.load %arg5[%c0_9, %c0_10] : memref<1x128xf32, #tpu.memory_space<vmem>>, vector<1x128xf32>
    %12 = vector.broadcast %11 : vector<1x128xf32> to vector<16x128xf32>
    %13 = arith.addf %10, %12 : vector<16x128xf32>
    %c0_11 = arith.constant 0 : index
    %c0_12 = arith.constant 0 : index
    %14 = vector.load %arg6[%c0_11, %c0_12] : memref<16x128xf32, #tpu.memory_space<vmem>>, vector<16x128xf32>
    tpu.vector_store %arg6[%c0_11, %c0_12], %13 {strides = array<i32>} : memref<16x128xf32, #tpu.memory_space<vmem>>, vector<16x128xf32>,
    return
  }
  func.func @transform_0(%arg0: i32) -> (i32, i32) {
    %c0_i32 = arith.constant 0 : i32
    %c0_i32_0 = arith.constant 0 : i32
    return %arg0, %c0_i32 : i32, i32
  }
  func.func @transform_1(%arg0: i32) -> (i32, i32) {
    %c0_i32 = arith.constant 0 : i32
    %c0_i32_0 = arith.constant 0 : i32
    %c0_i32_1 = arith.constant 0 : i32
    return %c0_i32, %c0_i32_0 : i32, i32
  }
  func.func @transform_2(%arg0: i32) -> (i32, i32) {
    %c0_i32 = arith.constant 0 : i32
    %c0_i32_0 = arith.constant 0 : i32
    %c0_i32_1 = arith.constant 0 : i32
    return %c0_i32, %c0_i32_0 : i32, i32
  }
  func.func @transform_3(%arg0: i32) -> (i32, i32) {
    %c0_i32 = arith.constant 0 : i32
    %c0_i32_0 = arith.constant 0 : i32
    %c0_i32_1 = arith.constant 0 : i32
    return %c0_i32, %c0_i32_0 : i32, i32
  }
  func.func @transform_4(%arg0: i32) -> (i32, i32) {
    %c0_i32 = arith.constant 0 : i32
    %c0_i32_0 = arith.constant 0 : i32
    %c0_i32_1 = arith.constant 0 : i32
    return %c0_i32, %c0_i32_0 : i32, i32
  }
  func.func @transform_5(%arg0: i32) -> (i32, i32) {
    %c0_i32 = arith.constant 0 : i32
    %c0_i32_0 = arith.constant 0 : i32
    return %arg0, %c0_i32 : i32, i32
  }
}

</mosaic_0001>

<llo_original>
// kernel: qnetwork_forward.3
$region0: #{qnetwork_forward.3}
  #allocation0 [shape = 'u32[]', space=smem, size = 0x4, offset = 0x4, fixed_abs, tag = 'smem constant byte address 0x4 - core index']
  #allocation1 [shape = 'u32[144,128]{1,0:T(1,128)}', space=vmem, size = 0x12000, scoped, tag = 'internal scratch']
  %s0 = inlined_call_operand.vmem [shape: bf16[1088,64], index: 0, kind: input, shape index: {}]
  %s1 = inlined_call_operand.vmem [shape: bf16[64,128], index: 1, kind: input, shape index: {}]
  %s2 = inlined_call_operand.vmem [shape: f32[1,128], index: 2, kind: input, shape index: {}]
  %s3 = inlined_call_operand.vmem [shape: bf16[1088,128], index: 3, kind: output, shape index: {}]
  %s4 = sld [smem:[#allocation0]]
  $region45: #{qnetwork_forward.3} parent=0
    _
  %s6 = ssub.s32 1, %s4
  %s7 = scalar_select 0, %s6, %s4
  loop: start=0, step=1, limit=6
  $region2: #{qnetwork_forward.3} parent=0 // loop_pre_header
    _
  $region3: #{qnetwork_forward.3} parent=0 // loop_header
    %s9 = sphi 0, %s13
    %p10 = scmp.ge.s32.totalorder %s9, 6
    %s19 = sphi 0, %s21
    %s22 = sphi 0, %s19
    %s23 = sphi 0, %s22
    %s39 = sphi 0, %s23
    %s43 = sphi 0, %s43
    %s45 = sphi 0, %s43
    %s46 = sphi 0, %s45
    %s60 = sphi 0, %s46
    %s64 = sphi 0, %s64
    %s66 = sphi 0, %s64
    %s67 = sphi 0, %s66
    %s81 = sphi 0, %s67
    %s87 = sphi 0, %s89
    %s90 = sphi 0, %s87
    %s91 = sphi 0, %s90
    %s107 = sphi 0, %s91
  $region4: #{qnetwork_forward.3} parent=0 // loop_header_branch
    %12 = sbr.rel (%p10) target = $region8
  $region5: #{qnetwork_forward.3} parent=0 // loop_body
    %s14 = ssub.s32 %s9, 1
    %s15 = ssub.s32 %s9, 2
    %s16 = sadd.s32 %s9, 1
    %s17 = ssub.s32 %s9, %s16
    %p18 = scmp.eq.s32.totalorder %s17, 0
    %s20 = sadd.s32 %s19, 1
    %s21 = scalar_select %p18, %s19, %s20
    %p24 = pneg %p18
    %p25 = scmp.eq.s32.totalorder %s9, 3
    %p26 = por %p24, %p25
    %p27 = scmp.ne.s32.totalorder %s19, %s22
    %p28 = scmp.eq.s32.totalorder %s9, 0
    %p29 = por %p27, %p28
    %p30 = scmp.ne.s32.totalorder %s19, %s22
    %p31 = scmp.eq.s32.totalorder %s14, 3
    %p32 = por %p30, %p31
    %p33 = scmp.ne.s32.totalorder %s22, %s23
    %p34 = scmp.eq.s32.totalorder %s14, 0
    %p35 = por %p33, %p34
    %p36 = scmp.ne.s32.totalorder %s22, %s23
    %p37 = scmp.eq.s32.totalorder %s15, 3
    %p38 = por %p36, %p37
    %p40 = scmp.ne.s32.totalorder %s23, %s39
    %p41 = scmp.eq.s32.totalorder %s15, 0
    %p42 = por %p40, %p41
    %s44 = sadd.s32 %s43, 1
    %p47 = scmp.eq.s32.totalorder %s9, 3
    %p48 = scmp.ne.s32.totalorder %s43, %s45
    %p49 = scmp.eq.s32.totalorder %s9, 0
    %p50 = por %p48, %p49
    %p51 = scmp.ne.s32.totalorder %s43, %s45
    %p52 = scmp.eq.s32.totalorder %s14, 3
    %p53 = por %p51, %p52
    %p54 = scmp.ne.s32.totalorder %s45, %s46
    %p55 = scmp.eq.s32.totalorder %s14, 0
    %p56 = por %p54, %p55
    %p57 = scmp.ne.s32.totalorder %s45, %s46
    %p58 = scmp.eq.s32.totalorder %s15, 3
    %p59 = por %p57, %p58
    %p61 = scmp.ne.s32.totalorder %s46, %s60
    %p62 = scmp.eq.s32.totalorder %s15, 0
    %p63 = por %p61, %p62
    %s65 = sadd.s32 %s64, 1
    %p68 = scmp.eq.s32.totalorder %s9, 3
    %p69 = scmp.ne.s32.totalorder %s64, %s66
    %p70 = scmp.eq.s32.totalorder %s9, 0
    %p71 = por %p69, %p70
    %p72 = scmp.ne.s32.totalorder %s64, %s66
    %p73 = scmp.eq.s32.totalorder %s14, 3
    %p74 = por %p72, %p73
    %p75 = scmp.ne.s32.totalorder %s66, %s67
    %p76 = scmp.eq.s32.totalorder %s14, 0
    %p77 = por %p75, %p76
    %p78 = scmp.ne.s32.totalorder %s66, %s67
    %p79 = scmp.eq.s32.totalorder %s15, 3
    %p80 = por %p78, %p79
    %p82 = scmp.ne.s32.totalorder %s67, %s81
    %p83 = scmp.eq.s32.totalorder %s15, 0
    %p84 = por %p82, %p83
    %s85 = ssub.s32 %s9, %s16
    %p86 = scmp.eq.s32.totalorder %s85, 0
    %s88 = sadd.s32 %s87, 1
    %s89 = scalar_select %p86, %s87, %s88
    %p92 = pneg %p86
    %p93 = scmp.eq.s32.totalorder %s9, 3
    %p94 = por %p92, %p93
    %p95 = scmp.ne.s32.totalorder %s87, %s90
    %p96 = scmp.eq.s32.totalorder %s9, 0
    %p97 = por %p95, %p96
    %p98 = scmp.ne.s32.totalorder %s87, %s90
    %p99 = scmp.eq.s32.totalorder %s14, 3
    %p100 = por %p98, %p99
    %p101 = scmp.ne.s32.totalorder %s90, %s91
    %p102 = scmp.eq.s32.totalorder %s14, 0
    %p103 = por %p101, %p102
    %p104 = scmp.ne.s32.totalorder %s90, %s91
    %p105 = scmp.eq.s32.totalorder %s15, 3
    %p106 = por %p104, %p105
    %p108 = scmp.ne.s32.totalorder %s91, %s107
    %p109 = scmp.eq.s32.totalorder %s15, 0
    %p110 = por %p108, %p109
    %p111 = scmp.le.s32.totalorder 1, %s9
    %p112 = scmp.lt.s32.totalorder %s9, 5
    %p113 = pnand %p111, %p112
    %p114 = pneg %p113
    // Predicated region
    $region9: #{qnetwork_forward.3} parent=5 // pred_check
      _
    $region10: #{qnetwork_forward.3} parent=5 // pred_check_branch
      %116 = sbr.rel (%p113) target = $region12
    $region11: #{qnetwork_forward.3} parent=5 // pred_region
      %s117 = ssub.s32 %s9, 1
      // Predicated region
      $region13: #{qnetwork_forward.3} parent=11 // pred_check
        %p118 = pneg %p56
      $region14: #{qnetwork_forward.3} parent=11 // pred_check_branch
        %120 = sbr.rel (%p118) target = $region16
      $region15: #{qnetwork_forward.3} parent=11 // pred_region
        _
      $region16: #{qnetwork_forward.3} parent=11 // pred_fallthru
        _
      // Predicated region
      $region17: #{qnetwork_forward.3} parent=11 // pred_check
        %p121 = pneg %p77
      $region18: #{qnetwork_forward.3} parent=11 // pred_check_branch
        %123 = sbr.rel (%p121) target = $region20
      $region19: #{qnetwork_forward.3} parent=11 // pred_region
        _
      $region20: #{qnetwork_forward.3} parent=11 // pred_fallthru
        _
    $region12: #{qnetwork_forward.3} parent=5 // pred_fallthru
      _
    %p124 = scmp.lt.s32.totalorder %s9, 4
    // Predicated region
    $region21: #{qnetwork_forward.3} parent=5 // pred_check
      %p125 = pneg %p124
    $region22: #{qnetwork_forward.3} parent=5 // pred_check_branch
      %127 = sbr.rel (%p125) target = $region24
    $region23: #{qnetwork_forward.3} parent=5 // pred_region
      // Predicated region
      $region25: #{qnetwork_forward.3} parent=23 // pred_check
        %p128 = pneg %p29
      $region26: #{qnetwork_forward.3} parent=23 // pred_check_branch
        %130 = sbr.rel (%p128) target = $region28
      $region27: #{qnetwork_forward.3} parent=23 // pred_region
        %s131 = smul.u32 34, %s9
        %p132 = scmp.lt.s32.totalorder %s131, 135
        %s133 = scalar_select %p132, %s131, 135
        %s134 = smul.addr %s133, 4
        %s135 = scalar_lea.vmem %s0, %s134
        %s136 = smul.u32 34, %s9
      $region28: #{qnetwork_forward.3} parent=23 // pred_fallthru
        _
    $region24: #{qnetwork_forward.3} parent=5 // pred_fallthru
      _
    %p137 = scmp.le.s32.totalorder 1, %s9
    %p138 = scmp.lt.s32.totalorder %s9, 5
    %p139 = pnand %p137, %p138
    %p140 = pneg %p139
    // Predicated region
    $region29: #{qnetwork_forward.3} parent=5 // pred_check
      _
    $region30: #{qnetwork_forward.3} parent=5 // pred_check_branch
      %142 = sbr.rel (%p139) target = $region32
    $region31: #{qnetwork_forward.3} parent=5 // pred_region
      %s143 = ssub.s32 %s9, 1
      %s144 = smul.u32 34, %s14
      %p145 = scmp.lt.s32.totalorder %s144, 135
      %s146 = scalar_select %p145, %s144, 135
      %s147 = smul.addr %s146, 4
      %s148 = scalar_lea.vmem %s0, %s147
      %p149 = pneg %p35
      %p150 = pneg %p32
      %p151 = pneg %p56
      %p152 = pneg %p53
      %p153 = pneg %p77
      %p154 = pneg %p74
      %p155 = pneg %p103
      %p156 = pneg %p100
      %s157 = smul.u32 34, %s14
      %p158 = scmp.lt.s32.totalorder %s157, 135
      %s159 = scalar_select %p158, %s157, 135
      %s160 = smul.addr %s159, 4
      %s161 = scalar_lea.vmem %s3, %s160
      %s162 = smul.u32 34, %s14
      %p163 = scmp.lt.s32.totalorder %s162, 135
      %s164 = scalar_select %p163, %s162, 135
      %s165 = smul.addr %s164, 4
      %s166 = scalar_lea.vmem %s0, %s165
      %s167 = smul.u32 34, %s14
      %s168 = smul.u32 34, %s14
      %p169 = scmp.lt.s32.totalorder %s168, 135
      %s170 = scalar_select %p169, %s168, 135
      %s171 = smul.addr %s170, 4
      %s172 = scalar_lea.vmem %s3, %s171
      %s173 = smul.u32 34, %s14
      %v175 = vld [vmem:[%s166] sm:$0xf]
      %v176 = vld [vmem:[%s166 + $0x4] sm:$0xf]
      %v177 = vld [vmem:[%s166 + $0x8] sm:$0xf]
      %v178 = vld [vmem:[%s166 + $0xc] sm:$0xf]
      %v179 = vld [vmem:[%s166 + $0x10] sm:$0xf]
      %v180 = vld [vmem:[%s166 + $0x14] sm:$0xf]
      %v181 = vld [vmem:[%s166 + $0x18] sm:$0xf]
      %v182 = vld [vmem:[%s166 + $0x1c] sm:$0xf]
      %v183 = vld [vmem:[%s166 + $0x20] sm:$0xf]
      %v184 = vld [vmem:[%s166 + $0x24] sm:$0xf]
      %v185 = vld [vmem:[%s166 + $0x28] sm:$0xf]
      %v186 = vld [vmem:[%s166 + $0x2c] sm:$0xf]
      %v187 = vld [vmem:[%s166 + $0x30] sm:$0xf]
      %v188 = vld [vmem:[%s166 + $0x34] sm:$0xf]
      %v189 = vld [vmem:[%s166 + $0x38] sm:$0xf]
      %v190 = vld [vmem:[%s166 + $0x3c] sm:$0xf]
      %v191 = vld [vmem:[%s166 + $0x40] sm:$0xf]
      %v192 = vld [vmem:[%s166 + $0x44] sm:$0xf]
      %v193 = vld [vmem:[%s166 + $0x48] sm:$0xf]
      %v194 = vld [vmem:[%s166 + $0x4c] sm:$0xf]
      %v195 = vld [vmem:[%s166 + $0x50] sm:$0xf]
      %v196 = vld [vmem:[%s166 + $0x54] sm:$0xf]
      %v197 = vld [vmem:[%s166 + $0x58] sm:$0xf]
      %v198 = vld [vmem:[%s166 + $0x5c] sm:$0xf]
      %v199 = vld [vmem:[%s166 + $0x60] sm:$0xf]
      %v200 = vld [vmem:[%s166 + $0x64] sm:$0xf]
      %v201 = vld [vmem:[%s166 + $0x68] sm:$0xf]
      %v202 = vld [vmem:[%s166 + $0x6c] sm:$0xf]
      %v203 = vld [vmem:[%s166 + $0x70] sm:$0xf]
      %v204 = vld [vmem:[%s166 + $0x74] sm:$0xf]
      %v205 = vld [vmem:[%s166 + $0x78] sm:$0xf]
      %v206 = vld [vmem:[%s166 + $0x7c] sm:$0xf]
      %v207 = vld [vmem:[%s166 + $0x80] sm:$0xf]
      %v208 = vld [vmem:[%s166 + $0x84] sm:$0xf]
      %v209 = vld [vmem:[%s1] sm:$0xf]
      %v210 = vld [vmem:[%s1 + $0x4] sm:$0xf]
      %v211 = vld [vmem:[%s1 + $0x8] sm:$0xf]
      %v212 = vld [vmem:[%s1 + $0xc] sm:$0xf]
      %v213 = vld [vmem:[%s1 + $0x10] sm:$0xf]
      %v214 = vld [vmem:[%s1 + $0x14] sm:$0xf]
      %v215 = vld [vmem:[%s1 + $0x18] sm:$0xf]
      %v216 = vld [vmem:[%s1 + $0x1c] sm:$0xf]
      %v217 = vld [vmem:[%s2] sm:$0x1]
      %v219 = vlaneseq
      %v220 = vshrl.u32 %v219, 7
      %v221 = vsub.s32 0, %v220
      %v222 = vrot.slane %v217, %v221
      %v258 = vunpack.c.l.b16 %v175
      %v259 = vunpack.c.l.b16 %v176
      %v260 = vunpack.c.l.b16 %v177
      %v261 = vunpack.c.l.b16 %v178
      %v262 = vunpack.c.l.b16 %v179
      %v263 = vunpack.c.l.b16 %v180
      %v264 = vunpack.c.l.b16 %v181
      %v265 = vunpack.c.l.b16 %v182
      %v266 = vunpack.c.l.b16 %v183
      %v267 = vunpack.c.l.b16 %v184
      %v268 = vunpack.c.l.b16 %v185
      %v269 = vunpack.c.l.b16 %v186
      %v270 = vunpack.c.l.b16 %v187
      %v271 = vunpack.c.l.b16 %v188
      %v272 = vunpack.c.l.b16 %v189
      %v273 = vunpack.c.l.b16 %v190
      %v274 = vunpack.c.l.b16 %v191
      %v275 = vunpack.c.l.b16 %v192
      %v276 = vunpack.c.l.b16 %v193
      %v277 = vunpack.c.l.b16 %v194
      %v278 = vunpack.c.l.b16 %v195
      %v279 = vunpack.c.l.b16 %v196
      %v280 = vunpack.c.l.b16 %v197
      %v281 = vunpack.c.l.b16 %v198
      %v282 = vunpack.c.l.b16 %v199
      %v283 = vunpack.c.l.b16 %v200
      %v284 = vunpack.c.l.b16 %v201
      %v285 = vunpack.c.l.b16 %v202
      %v286 = vunpack.c.l.b16 %v203
      %v287 = vunpack.c.l.b16 %v204
      %v288 = vunpack.c.l.b16 %v205
      %v289 = vunpack.c.l.b16 %v206
      %v290 = vunpack.c.l.b16 %v207
      %v291 = vunpack.c.l.b16 %v208
      %v292 = vpack.c.b16 %v259, %v258
      %v293 = vpack.c.b16 %v261, %v260
      %v294 = vpack.c.b16 %v263, %v262
      %v295 = vpack.c.b16 %v265, %v264
      %v296 = vpack.c.b16 %v267, %v266
      %v297 = vpack.c.b16 %v269, %v268
      %v298 = vpack.c.b16 %v271, %v270
      %v299 = vpack.c.b16 %v273, %v272
      %v300 = vpack.c.b16 %v275, %v274
      %v301 = vpack.c.b16 %v277, %v276
      %v302 = vpack.c.b16 %v279, %v278
      %v303 = vpack.c.b16 %v281, %v280
      %v304 = vpack.c.b16 %v283, %v282
      %v305 = vpack.c.b16 %v285, %v284
      %v306 = vpack.c.b16 %v287, %v286
      %v307 = vpack.c.b16 %v289, %v288
      %v308 = vpack.c.b16 %v291, %v290
      %v317 = vunpack.c.l.b16 %v209
      %v318 = vunpack.c.l.b16 %v210
      %v319 = vunpack.c.l.b16 %v211
      %v320 = vunpack.c.l.b16 %v212
      %v321 = vunpack.c.l.b16 %v213
      %v322 = vunpack.c.l.b16 %v214
      %v323 = vunpack.c.l.b16 %v215
      %v324 = vunpack.c.l.b16 %v216
      %v325 = vpack.c.b16 %v318, %v317
      %v326 = vpack.c.b16 %v320, %v319
      %v327 = vpack.c.b16 %v322, %v321
      %v328 = vpack.c.b16 %v324, %v323
      %vm333 = vcmask 523264
      %v335 = vsel %vm333, %v292, 0
      %v338 = vsel %vm333, %v293, 0
      %v341 = vsel %vm333, %v294, 0
      %v344 = vsel %vm333, %v295, 0
      %v347 = vsel %vm333, %v296, 0
      %v350 = vsel %vm333, %v297, 0
      %v353 = vsel %vm333, %v298, 0
      %v356 = vsel %vm333, %v299, 0
      %v359 = vsel %vm333, %v300, 0
      %v362 = vsel %vm333, %v301, 0
      %v365 = vsel %vm333, %v302, 0
      %v368 = vsel %vm333, %v303, 0
      %v371 = vsel %vm333, %v304, 0
      %v374 = vsel %vm333, %v305, 0
      %v377 = vsel %vm333, %v306, 0
      %v380 = vsel %vm333, %v307, 0
      %v383 = vsel %vm333, %v308, 0
      %385 = vmatprep.subr.bf16.mxu0 0
      %386 = vmatpush1.bf16.msra.mxu0 %v325
      %387 = vmatprep.subr.bf16.mxu0 0
      %388 = vmatpush1.bf16.msra.mxu0 %v326
      %389 = vmatprep.subr.bf16.mxu0 0
      %390 = vmatpush1.bf16.msra.mxu0 %v327
      %391 = vmatprep.subr.bf16.mxu0 0
      %392 = vmatpush1.bf16.msra.mxu0 %v328
      %393 = vmatprep.subr.bf16.mxu0 0
      %394 = vmatpush1.bf16.msra.mxu0 0
      %395 = vmatprep.subr.bf16.mxu0 0
      %396 = vmatpush1.bf16.msra.mxu0 0
      %397 = vmatprep.subr.bf16.mxu0 0
      %398 = vmatpush1.bf16.msra.mxu0 0
      %399 = vmatprep.subr.bf16.mxu0 0
      %400 = vmatpush1.bf16.msra.mxu0 0
      %401 = vmatprep.subr.bf16.mxu0 0
      %402 = vmatpush1.bf16.msra.mxu0 0
      %403 = vmatprep.subr.bf16.mxu0 0
      %404 = vmatpush1.bf16.msra.mxu0 0
      %405 = vmatprep.subr.bf16.mxu0 0
      %406 = vmatpush1.bf16.msra.mxu0 0
      %407 = vmatprep.subr.bf16.mxu0 0
      %408 = vmatpush1.bf16.msra.mxu0 0
      %409 = vmatprep.subr.bf16.mxu0 0
      %410 = vmatpush1.bf16.msra.mxu0 0
      %411 = vmatprep.subr.bf16.mxu0 0
      %412 = vmatpush1.bf16.msra.mxu0 0
      %413 = vmatprep.subr.bf16.mxu0 0
      %414 = vmatpush1.bf16.msra.mxu0 0
      %415 = vmatprep.subr.bf16.mxu0 0
      %416 = vmatpush1.bf16.msra.mxu0 0
      %417 = vmatprep.mubr.bf16.mxu0 0
      %418 = vmatmul.mubr.bf16.gmra.mrb[0].mxu0 %v335
      %v419 = vpop.f32.mrb[0].mxu0
      %v420 = vadd.f32 %v222, %v419
      %v421 = vpop.f32.mrb[0].mxu0
      %v422 = vpop.f32.mrb[0].mxu0
      %v423 = vadd.f32 %v222, %v422
      %v424 = vpop.f32.mrb[0].mxu0
      %425 = vmatprep.mubr.bf16.mxu0 0
      %426 = vmatmul.mubr.bf16.gmra.mrb[0].mxu0 %v338
      %v427 = vpop.f32.mrb[0].mxu0
      %v428 = vadd.f32 %v222, %v427
      %v429 = vpop.f32.mrb[0].mxu0
      %v430 = vpop.f32.mrb[0].mxu0
      %v431 = vadd.f32 %v222, %v430
      %v432 = vpop.f32.mrb[0].mxu0
      %433 = vmatprep.mubr.bf16.mxu0 0
      %434 = vmatmul.mubr.bf16.gmra.mrb[0].mxu0 %v341
      %v435 = vpop.f32.mrb[0].mxu0
      %v436 = vadd.f32 %v222, %v435
      %v437 = vpop.f32.mrb[0].mxu0
      %v438 = vpop.f32.mrb[0].mxu0
      %v439 = vadd.f32 %v222, %v438
      %v440 = vpop.f32.mrb[0].mxu0
      %441 = vmatprep.mubr.bf16.mxu0 0
      %442 = vmatmul.mubr.bf16.gmra.mrb[0].mxu0 %v344
      %v443 = vpop.f32.mrb[0].mxu0
      %v444 = vadd.f32 %v222, %v443
      %v445 = vpop.f32.mrb[0].mxu0
      %v446 = vpop.f32.mrb[0].mxu0
      %v447 = vadd.f32 %v222, %v446
      %v448 = vpop.f32.mrb[0].mxu0
      %449 = vmatprep.mubr.bf16.mxu0 0
      %450 = vmatmul.mubr.bf16.gmra.mrb[0].mxu0 %v347
      %v451 = vpop.f32.mrb[0].mxu0
      %v452 = vadd.f32 %v222, %v451
      %v453 = vpop.f32.mrb[0].mxu0
      %v454 = vpop.f32.mrb[0].mxu0
      %v455 = vadd.f32 %v222, %v454
      %v456 = vpop.f32.mrb[0].mxu0
      %457 = vmatprep.mubr.bf16.mxu0 0
      %458 = vmatmul.mubr.bf16.gmra.mrb[0].mxu0 %v350
      %v459 = vpop.f32.mrb[0].mxu0
      %v460 = vadd.f32 %v222, %v459
      %v461 = vpop.f32.mrb[0].mxu0
      %v462 = vpop.f32.mrb[0].mxu0
      %v463 = vadd.f32 %v222, %v462
      %v464 = vpop.f32.mrb[0].mxu0
      %465 = vmatprep.mubr.bf16.mxu0 0
      %466 = vmatmul.mubr.bf16.gmra.mrb[0].mxu0 %v353
      %v467 = vpop.f32.mrb[0].mxu0
      %v468 = vadd.f32 %v222, %v467
      %v469 = vpop.f32.mrb[0].mxu0
      %v470 = vpop.f32.mrb[0].mxu0
      %v471 = vadd.f32 %v222, %v470
      %v472 = vpop.f32.mrb[0].mxu0
      %473 = vmatprep.mubr.bf16.mxu0 0
      %474 = vmatmul.mubr.bf16.gmra.mrb[0].mxu0 %v356
      %v475 = vpop.f32.mrb[0].mxu0
      %v476 = vadd.f32 %v222, %v475
      %v477 = vpop.f32.mrb[0].mxu0
      %v478 = vpop.f32.mrb[0].mxu0
      %v479 = vadd.f32 %v222, %v478
      %v480 = vpop.f32.mrb[0].mxu0
      %481 = vmatprep.mubr.bf16.mxu0 0
      %482 = vmatmul.mubr.bf16.gmra.mrb[0].mxu0 %v359
      %v483 = vpop.f32.mrb[0].mxu0
      %v484 = vadd.f32 %v222, %v483
      %v485 = vpop.f32.mrb[0].mxu0
      %v486 = vpop.f32.mrb[0].mxu0
      %v487 = vadd.f32 %v222, %v486
      %v488 = vpop.f32.mrb[0].mxu0
      %489 = vmatprep.mubr.bf16.mxu0 0
      %490 = vmatmul.mubr.bf16.gmra.mrb[0].mxu0 %v362
      %v491 = vpop.f32.mrb[0].mxu0
      %v492 = vadd.f32 %v222, %v491
      %v493 = vpop.f32.mrb[0].mxu0
      %v494 = vpop.f32.mrb[0].mxu0
      %v495 = vadd.f32 %v222, %v494
      %v496 = vpop.f32.mrb[0].mxu0
      %497 = vmatprep.mubr.bf16.mxu0 0
      %498 = vmatmul.mubr.bf16.gmra.mrb[0].mxu0 %v365
      %v499 = vpop.f32.mrb[0].mxu0
      %v500 = vadd.f32 %v222, %v499
      %v501 = vpop.f32.mrb[0].mxu0
      %v502 = vpop.f32.mrb[0].mxu0
      %v503 = vadd.f32 %v222, %v502
      %v504 = vpop.f32.mrb[0].mxu0
      %505 = vmatprep.mubr.bf16.mxu0 0
      %506 = vmatmul.mubr.bf16.gmra.mrb[0].mxu0 %v368
      %v507 = vpop.f32.mrb[0].mxu0
      %v508 = vadd.f32 %v222, %v507
      %v509 = vpop.f32.mrb[0].mxu0
      %v510 = vpop.f32.mrb[0].mxu0
      %v511 = vadd.f32 %v222, %v510
      %v512 = vpop.f32.mrb[0].mxu0
      %513 = vmatprep.mubr.bf16.mxu0 0
      %514 = vmatmul.mubr.bf16.gmra.mrb[0].mxu0 %v371
      %v515 = vpop.f32.mrb[0].mxu0
      %v516 = vadd.f32 %v222, %v515
      %v517 = vpop.f32.mrb[0].mxu0
      %v518 = vpop.f32.mrb[0].mxu0
      %v519 = vadd.f32 %v222, %v518
      %v520 = vpop.f32.mrb[0].mxu0
      %521 = vmatprep.mubr.bf16.mxu0 0
      %522 = vmatmul.mubr.bf16.gmra.mrb[0].mxu0 %v374
      %v523 = vpop.f32.mrb[0].mxu0
      %v524 = vadd.f32 %v222, %v523
      %v525 = vpop.f32.mrb[0].mxu0
      %v526 = vpop.f32.mrb[0].mxu0
      %v527 = vadd.f32 %v222, %v526
      %v528 = vpop.f32.mrb[0].mxu0
      %529 = vmatprep.mubr.bf16.mxu0 0
      %530 = vmatmul.mubr.bf16.gmra.mrb[0].mxu0 %v377
      %v531 = vpop.f32.mrb[0].mxu0
      %v532 = vadd.f32 %v222, %v531
      %v533 = vpop.f32.mrb[0].mxu0
      %v534 = vpop.f32.mrb[0].mxu0
      %v535 = vadd.f32 %v222, %v534
      %v536 = vpop.f32.mrb[0].mxu0
      %537 = vmatprep.mubr.bf16.mxu0 0
      %538 = vmatmul.mubr.bf16.gmra.mrb[0].mxu0 %v380
      %v539 = vpop.f32.mrb[0].mxu0
      %v540 = vadd.f32 %v222, %v539
      %v541 = vpop.f32.mrb[0].mxu0
      %v542 = vpop.f32.mrb[0].mxu0
      %v543 = vadd.f32 %v222, %v542
      %v544 = vpop.f32.mrb[0].mxu0
      %545 = vmatprep.mubr.bf16.mxu0 0
      %546 = vmatmul.mubr.bf16.gmra.mrb[0].mxu0 %v383
      %v547 = vpop.f32.mrb[0].mxu0
      %v548 = vadd.f32 %v222, %v547
      %v549 = vpop.f32.mrb[0].mxu0
      %v550 = vpop.f32.mrb[0].mxu0
      %v551 = vadd.f32 %v222, %v550
      %v552 = vpop.f32.mrb[0].mxu0
      %553 = vdwg.mxu0
      %v554 = vmax.f32 %v420, 0.0
      %v555 = vmax.f32 %v423, 0.0
      %v556 = vmax.f32 %v428, 0.0
      %v557 = vmax.f32 %v431, 0.0
      %v558 = vmax.f32 %v436, 0.0
      %v559 = vmax.f32 %v439, 0.0
      %v560 = vmax.f32 %v444, 0.0
      %v561 = vmax.f32 %v447, 0.0
      %v562 = vmax.f32 %v452, 0.0
      %v563 = vmax.f32 %v455, 0.0
      %v564 = vmax.f32 %v460, 0.0
      %v565 = vmax.f32 %v463, 0.0
      %v566 = vmax.f32 %v468, 0.0
      %v567 = vmax.f32 %v471, 0.0
      %v568 = vmax.f32 %v476, 0.0
      %v569 = vmax.f32 %v479, 0.0
      %v570 = vmax.f32 %v484, 0.0
      %v571 = vmax.f32 %v487, 0.0
      %v572 = vmax.f32 %v492, 0.0
      %v573 = vmax.f32 %v495, 0.0
      %v574 = vmax.f32 %v500, 0.0
      %v575 = vmax.f32 %v503, 0.0
      %v576 = vmax.f32 %v508, 0.0
      %v577 = vmax.f32 %v511, 0.0
      %v578 = vmax.f32 %v516, 0.0
      %v579 = vmax.f32 %v519, 0.0
      %v580 = vmax.f32 %v524, 0.0
      %v581 = vmax.f32 %v527, 0.0
      %v582 = vmax.f32 %v532, 0.0
      %v583 = vmax.f32 %v535, 0.0
      %v584 = vmax.f32 %v540, 0.0
      %v585 = vmax.f32 %v543, 0.0
      %v586 = vmax.f32 %v548, 0.0
      %v587 = vmax.f32 %v551, 0.0
      %v588 = vpack.c.bf16 %v555, %v554
      %v589 = vpack.c.bf16 %v557, %v556
      %v590 = vpack.c.bf16 %v559, %v558
      %v591 = vpack.c.bf16 %v561, %v560
      %v592 = vpack.c.bf16 %v563, %v562
      %v593 = vpack.c.bf16 %v565, %v564
      %v594 = vpack.c.bf16 %v567, %v566
      %v595 = vpack.c.bf16 %v569, %v568
      %v596 = vpack.c.bf16 %v571, %v570
      %v597 = vpack.c.bf16 %v573, %v572
      %v598 = vpack.c.bf16 %v575, %v574
      %v599 = vpack.c.bf16 %v577, %v576
      %v600 = vpack.c.bf16 %v579, %v578
      %v601 = vpack.c.bf16 %v581, %v580
      %v602 = vpack.c.bf16 %v583, %v582
      %v603 = vpack.c.bf16 %v585, %v584
      %v604 = vpack.c.bf16 %v587, %v586
      %v622 = vunpack.c.l.b16 %v588
      %v623 = vunpack.c.h.b16 %v588
      %v624 = vunpack.c.l.b16 %v589
      %v625 = vunpack.c.h.b16 %v589
      %v626 = vunpack.c.l.b16 %v590
      %v627 = vunpack.c.h.b16 %v590
      %v628 = vunpack.c.l.b16 %v591
      %v629 = vunpack.c.h.b16 %v591
      %v630 = vunpack.c.l.b16 %v592
      %v631 = vunpack.c.h.b16 %v592
      %v632 = vunpack.c.l.b16 %v593
      %v633 = vunpack.c.h.b16 %v593
      %v634 = vunpack.c.l.b16 %v594
      %v635 = vunpack.c.h.b16 %v594
      %v636 = vunpack.c.l.b16 %v595
      %v637 = vunpack.c.h.b16 %v595
      %v638 = vunpack.c.l.b16 %v596
      %v639 = vunpack.c.h.b16 %v596
      %v640 = vunpack.c.l.b16 %v597
      %v641 = vunpack.c.h.b16 %v597
      %v642 = vunpack.c.l.b16 %v598
      %v643 = vunpack.c.h.b16 %v598
      %v644 = vunpack.c.l.b16 %v599
      %v645 = vunpack.c.h.b16 %v599
      %v646 = vunpack.c.l.b16 %v600
      %v647 = vunpack.c.h.b16 %v600
      %v648 = vunpack.c.l.b16 %v601
      %v649 = vunpack.c.h.b16 %v601
      %v650 = vunpack.c.l.b16 %v602
      %v651 = vunpack.c.h.b16 %v602
      %v652 = vunpack.c.l.b16 %v603
      %v653 = vunpack.c.h.b16 %v603
      %v654 = vunpack.c.l.b16 %v604
      %v655 = vunpack.c.h.b16 %v604
      %v656 = vpack.c.b16 %v622, %v622
      %v657 = vpack.c.b16 %v623, %v623
      %v658 = vpack.c.b16 %v624, %v624
      %v659 = vpack.c.b16 %v625, %v625
      %v660 = vpack.c.b16 %v626, %v626
      %v661 = vpack.c.b16 %v627, %v627
      %v662 = vpack.c.b16 %v628, %v628
      %v663 = vpack.c.b16 %v629, %v629
      %v664 = vpack.c.b16 %v630, %v630
      %v665 = vpack.c.b16 %v631, %v631
      %v666 = vpack.c.b16 %v632, %v632
      %v667 = vpack.c.b16 %v633, %v633
      %v668 = vpack.c.b16 %v634, %v634
      %v669 = vpack.c.b16 %v635, %v635
      %v670 = vpack.c.b16 %v636, %v636
      %v671 = vpack.c.b16 %v637, %v637
      %v672 = vpack.c.b16 %v638, %v638
      %v673 = vpack.c.b16 %v639, %v639
      %v674 = vpack.c.b16 %v640, %v640
      %v675 = vpack.c.b16 %v641, %v641
      %v676 = vpack.c.b16 %v642, %v642
      %v677 = vpack.c.b16 %v643, %v643
      %v678 = vpack.c.b16 %v644, %v644
      %v679 = vpack.c.b16 %v645, %v645
      %v680 = vpack.c.b16 %v646, %v646
      %v681 = vpack.c.b16 %v647, %v647
      %v682 = vpack.c.b16 %v648, %v648
      %v683 = vpack.c.b16 %v649, %v649
      %v684 = vpack.c.b16 %v650, %v650
      %v685 = vpack.c.b16 %v651, %v651
      %v686 = vpack.c.b16 %v652, %v652
      %v687 = vpack.c.b16 %v653, %v653
      %v688 = vpack.c.b16 %v654, %v654
      %v689 = vpack.c.b16 %v655, %v655
      %724 = vst [vmem:[%s172] sm:$0xf] %v656
      %725 = vst [vmem:[%s172 + $0x4] sm:$0xf] %v657
      %726 = vst [vmem:[%s172 + $0x8] sm:$0xf] %v658
      %727 = vst [vmem:[%s172 + $0xc] sm:$0xf] %v659
      %728 = vst [vmem:[%s172 + $0x10] sm:$0xf] %v660
      %729 = vst [vmem:[%s172 + $0x14] sm:$0xf] %v661
      %730 = vst [vmem:[%s172 + $0x18] sm:$0xf] %v662
      %731 = vst [vmem:[%s172 + $0x1c] sm:$0xf] %v663
      %732 = vst [vmem:[%s172 + $0x20] sm:$0xf] %v664
      %733 = vst [vmem:[%s172 + $0x24] sm:$0xf] %v665
      %734 = vst [vmem:[%s172 + $0x28] sm:$0xf] %v666
      %735 = vst [vmem:[%s172 + $0x2c] sm:$0xf] %v667
      %736 = vst [vmem:[%s172 + $0x30] sm:$0xf] %v668
      %737 = vst [vmem:[%s172 + $0x34] sm:$0xf] %v669
      %738 = vst [vmem:[%s172 + $0x38] sm:$0xf] %v670
      %739 = vst [vmem:[%s172 + $0x3c] sm:$0xf] %v671
      %740 = vst [vmem:[%s172 + $0x40] sm:$0xf] %v672
      %741 = vst [vmem:[%s172 + $0x44] sm:$0xf] %v673
      %742 = vst [vmem:[%s172 + $0x48] sm:$0xf] %v674
      %743 = vst [vmem:[%s172 + $0x4c] sm:$0xf] %v675
      %744 = vst [vmem:[%s172 + $0x50] sm:$0xf] %v676
      %745 = vst [vmem:[%s172 + $0x54] sm:$0xf] %v677
      %746 = vst [vmem:[%s172 + $0x58] sm:$0xf] %v678
      %747 = vst [vmem:[%s172 + $0x5c] sm:$0xf] %v679
      %748 = vst [vmem:[%s172 + $0x60] sm:$0xf] %v680
      %749 = vst [vmem:[%s172 + $0x64] sm:$0xf] %v681
      %750 = vst [vmem:[%s172 + $0x68] sm:$0xf] %v682
      %751 = vst [vmem:[%s172 + $0x6c] sm:$0xf] %v683
      %752 = vst [vmem:[%s172 + $0x70] sm:$0xf] %v684
      %753 = vst [vmem:[%s172 + $0x74] sm:$0xf] %v685
      %754 = vst [vmem:[%s172 + $0x78] sm:$0xf] %v686
      %755 = vst [vmem:[%s172 + $0x7c] sm:$0xf] %v687
      %756 = vst [vmem:[%s172 + $0x80] sm:$0xf] %v688
      %757 = vst [vmem:[%s172 + $0x84] sm:$0xf] %v689
      %s758 = smul.u32 34, %s14
      %p759 = scmp.lt.s32.totalorder %s758, 135
      %s760 = scalar_select %p759, %s758, 135
      %s761 = smul.addr %s760, 4
      %s762 = scalar_lea.vmem %s3, %s761
      // Predicated region
      $region33: #{qnetwork_forward.3} parent=31 // pred_check
        %p763 = pneg %p100
      $region34: #{qnetwork_forward.3} parent=31 // pred_check_branch
        %765 = sbr.rel (%p763) target = $region36
      $region35: #{qnetwork_forward.3} parent=31 // pred_region
        %s766 = smul.u32 34, %s14
      $region36: #{qnetwork_forward.3} parent=31 // pred_fallthru
        _
    $region32: #{qnetwork_forward.3} parent=5 // pred_fallthru
      _
    %p767 = scmp.le.s32.totalorder 2, %s9
    // Predicated region
    $region37: #{qnetwork_forward.3} parent=5 // pred_check
      %p768 = pneg %p767
    $region38: #{qnetwork_forward.3} parent=5 // pred_check_branch
      %770 = sbr.rel (%p768) target = $region40
    $region39: #{qnetwork_forward.3} parent=5 // pred_region
      %s771 = ssub.s32 %s9, 2
      // Predicated region
      $region41: #{qnetwork_forward.3} parent=39 // pred_check
        %p772 = pneg %p106
      $region42: #{qnetwork_forward.3} parent=39 // pred_check_branch
        %774 = sbr.rel (%p772) target = $region44
      $region43: #{qnetwork_forward.3} parent=39 // pred_region
        %s775 = smul.u32 34, %s15
        %p776 = scmp.lt.s32.totalorder %s775, 135
        %s777 = scalar_select %p776, %s775, 135
        %s778 = smul.addr %s777, 4
        %s779 = scalar_lea.vmem %s3, %s778
      $region44: #{qnetwork_forward.3} parent=39 // pred_fallthru
        _
    $region40: #{qnetwork_forward.3} parent=5 // pred_fallthru
      _
  $region6: #{qnetwork_forward.3} parent=0 // loop_footer
    %s13 = sadd.s32 1, %s9
  $region7: #{qnetwork_forward.3} parent=0 // loop_footer_branch
    %8 = sbr.rel target = $region3
  $region8: #{qnetwork_forward.3} parent=0 // loop_exit
    _

// kernel: qnetwork_forward.4
$region0: #{qnetwork_forward.4}
  #allocation0 [shape = 'u32[]', space=smem, size = 0x4, offset = 0x4, fixed_abs, tag = 'smem constant byte address 0x4 - core index']
  #allocation1 [shape = 'u32[144,128]{1,0:T(1,128)}', space=vmem, size = 0x12000, scoped, tag = 'internal scratch']
  %s0 = inlined_call_operand.vmem [shape: bf16[224,256], index: 0, kind: input, shape index: {}]
  %s1 = inlined_call_operand.vmem [shape: bf16[256,128], index: 1, kind: input, shape index: {}]
  %s2 = inlined_call_operand.vmem [shape: f32[1,128], index: 2, kind: input, shape index: {}]
  %s3 = inlined_call_operand.vmem [shape: bf16[224,128], index: 3, kind: output, shape index: {}]
  %s4 = sld [smem:[#allocation0]]
  $region45: #{qnetwork_forward.4} parent=0
    _
  %s6 = ssub.s32 1, %s4
  %s7 = scalar_select 0, %s6, %s4
  loop: start=0, step=1, limit=4
  $region2: #{qnetwork_forward.4} parent=0 // loop_pre_header
    _
  $region3: #{qnetwork_forward.4} parent=0 // loop_header
    %s9 = sphi 0, %s13
    %p10 = scmp.ge.s32.totalorder %s9, 4
    %s19 = sphi 0, %s21
    %s22 = sphi 0, %s19
    %s23 = sphi 0, %s22
    %s39 = sphi 0, %s23
    %s43 = sphi 0, %s43
    %s45 = sphi 0, %s43
    %s46 = sphi 0, %s45
    %s60 = sphi 0, %s46
    %s64 = sphi 0, %s64
    %s66 = sphi 0, %s64
    %s67 = sphi 0, %s66
    %s81 = sphi 0, %s67
    %s87 = sphi 0, %s89
    %s90 = sphi 0, %s87
    %s91 = sphi 0, %s90
    %s107 = sphi 0, %s91
  $region4: #{qnetwork_forward.4} parent=0 // loop_header_branch
    %12 = sbr.rel (%p10) target = $region8
  $region5: #{qnetwork_forward.4} parent=0 // loop_body
    %s14 = ssub.s32 %s9, 1
    %s15 = ssub.s32 %s9, 2
    %s16 = sadd.s32 %s9, 1
    %s17 = ssub.s32 %s9, %s16
    %p18 = scmp.eq.s32.totalorder %s17, 0
    %s20 = sadd.s32 %s19, 1
    %s21 = scalar_select %p18, %s19, %s20
    %p24 = pneg %p18
    %p25 = scmp.eq.s32.totalorder %s9, 1
    %p26 = por %p24, %p25
    %p27 = scmp.ne.s32.totalorder %s19, %s22
    %p28 = scmp.eq.s32.totalorder %s9, 0
    %p29 = por %p27, %p28
    %p30 = scmp.ne.s32.totalorder %s19, %s22
    %p31 = scmp.eq.s32.totalorder %s14, 1
    %p32 = por %p30, %p31
    %p33 = scmp.ne.s32.totalorder %s22, %s23
    %p34 = scmp.eq.s32.totalorder %s14, 0
    %p35 = por %p33, %p34
    %p36 = scmp.ne.s32.totalorder %s22, %s23
    %p37 = scmp.eq.s32.totalorder %s15, 1
    %p38 = por %p36, %p37
    %p40 = scmp.ne.s32.totalorder %s23, %s39
    %p41 = scmp.eq.s32.totalorder %s15, 0
    %p42 = por %p40, %p41
    %s44 = sadd.s32 %s43, 1
    %p47 = scmp.eq.s32.totalorder %s9, 1
    %p48 = scmp.ne.s32.totalorder %s43, %s45
    %p49 = scmp.eq.s32.totalorder %s9, 0
    %p50 = por %p48, %p49
    %p51 = scmp.ne.s32.totalorder %s43, %s45
    %p52 = scmp.eq.s32.totalorder %s14, 1
    %p53 = por %p51, %p52
    %p54 = scmp.ne.s32.totalorder %s45, %s46
    %p55 = scmp.eq.s32.totalorder %s14, 0
    %p56 = por %p54, %p55
    %p57 = scmp.ne.s32.totalorder %s45, %s46
    %p58 = scmp.eq.s32.totalorder %s15, 1
    %p59 = por %p57, %p58
    %p61 = scmp.ne.s32.totalorder %s46, %s60
    %p62 = scmp.eq.s32.totalorder %s15, 0
    %p63 = por %p61, %p62
    %s65 = sadd.s32 %s64, 1
    %p68 = scmp.eq.s32.totalorder %s9, 1
    %p69 = scmp.ne.s32.totalorder %s64, %s66
    %p70 = scmp.eq.s32.totalorder %s9, 0
    %p71 = por %p69, %p70
    %p72 = scmp.ne.s32.totalorder %s64, %s66
    %p73 = scmp.eq.s32.totalorder %s14, 1
    %p74 = por %p72, %p73
    %p75 = scmp.ne.s32.totalorder %s66, %s67
    %p76 = scmp.eq.s32.totalorder %s14, 0
    %p77 = por %p75, %p76
    %p78 = scmp.ne.s32.totalorder %s66, %s67
    %p79 = scmp.eq.s32.totalorder %s15, 1
    %p80 = por %p78, %p79
    %p82 = scmp.ne.s32.totalorder %s67, %s81
    %p83 = scmp.eq.s32.totalorder %s15, 0
    %p84 = por %p82, %p83
    %s85 = ssub.s32 %s9, %s16
    %p86 = scmp.eq.s32.totalorder %s85, 0
    %s88 = sadd.s32 %s87, 1
    %s89 = scalar_select %p86, %s87, %s88
    %p92 = pneg %p86
    %p93 = scmp.eq.s32.totalorder %s9, 1
    %p94 = por %p92, %p93
    %p95 = scmp.ne.s32.totalorder %s87, %s90
    %p96 = scmp.eq.s32.totalorder %s9, 0
    %p97 = por %p95, %p96
    %p98 = scmp.ne.s32.totalorder %s87, %s90
    %p99 = scmp.eq.s32.totalorder %s14, 1
    %p100 = por %p98, %p99
    %p101 = scmp.ne.s32.totalorder %s90, %s91
    %p102 = scmp.eq.s32.totalorder %s14, 0
    %p103 = por %p101, %p102
    %p104 = scmp.ne.s32.totalorder %s90, %s91
    %p105 = scmp.eq.s32.totalorder %s15, 1
    %p106 = por %p104, %p105
    %p108 = scmp.ne.s32.totalorder %s91, %s107
    %p109 = scmp.eq.s32.totalorder %s15, 0
    %p110 = por %p108, %p109
    %p111 = scmp.le.s32.totalorder 1, %s9
    %p112 = scmp.lt.s32.totalorder %s9, 3
    %p113 = pnand %p111, %p112
    %p114 = pneg %p113
    // Predicated region
    $region9: #{qnetwork_forward.4} parent=5 // pred_check
      _
    $region10: #{qnetwork_forward.4} parent=5 // pred_check_branch
      %116 = sbr.rel (%p113) target = $region12
    $region11: #{qnetwork_forward.4} parent=5 // pred_region
      %s117 = ssub.s32 %s9, 1
      // Predicated region
      $region13: #{qnetwork_forward.4} parent=11 // pred_check
        %p118 = pneg %p56
      $region14: #{qnetwork_forward.4} parent=11 // pred_check_branch
        %120 = sbr.rel (%p118) target = $region16
      $region15: #{qnetwork_forward.4} parent=11 // pred_region
        _
      $region16: #{qnetwork_forward.4} parent=11 // pred_fallthru
        _
      // Predicated region
      $region17: #{qnetwork_forward.4} parent=11 // pred_check
        %p121 = pneg %p77
      $region18: #{qnetwork_forward.4} parent=11 // pred_check_branch
        %123 = sbr.rel (%p121) target = $region20
      $region19: #{qnetwork_forward.4} parent=11 // pred_region
        _
      $region20: #{qnetwork_forward.4} parent=11 // pred_fallthru
        _
    $region12: #{qnetwork_forward.4} parent=5 // pred_fallthru
      _
    %p124 = scmp.lt.s32.totalorder %s9, 2
    // Predicated region
    $region21: #{qnetwork_forward.4} parent=5 // pred_check
      %p125 = pneg %p124
    $region22: #{qnetwork_forward.4} parent=5 // pred_check_branch
      %127 = sbr.rel (%p125) target = $region24
    $region23: #{qnetwork_forward.4} parent=5 // pred_region
      // Predicated region
      $region25: #{qnetwork_forward.4} parent=23 // pred_check
        %p128 = pneg %p29
      $region26: #{qnetwork_forward.4} parent=23 // pred_check_branch
        %130 = sbr.rel (%p128) target = $region28
      $region27: #{qnetwork_forward.4} parent=23 // pred_region
        %s131 = smul.u32 14, %s9
        %p132 = scmp.lt.s32.totalorder %s131, 27
        %s133 = scalar_select %p132, %s131, 27
        %s134 = smul.addr %s133, 2
        %s135 = smul.addr %s134, 4
        %s136 = scalar_lea.vmem %s0, %s135
        %s137 = smul.u32 14, %s9
      $region28: #{qnetwork_forward.4} parent=23 // pred_fallthru
        _
    $region24: #{qnetwork_forward.4} parent=5 // pred_fallthru
      _
    %p138 = scmp.le.s32.totalorder 1, %s9
    %p139 = scmp.lt.s32.totalorder %s9, 3
    %p140 = pnand %p138, %p139
    %p141 = pneg %p140
    // Predicated region
    $region29: #{qnetwork_forward.4} parent=5 // pred_check
      _
    $region30: #{qnetwork_forward.4} parent=5 // pred_check_branch
      %143 = sbr.rel (%p140) target = $region32
    $region31: #{qnetwork_forward.4} parent=5 // pred_region
      %s144 = ssub.s32 %s9, 1
      %s145 = smul.u32 14, %s14
      %p146 = scmp.lt.s32.totalorder %s145, 27
      %s147 = scalar_select %p146, %s145, 27
      %s148 = smul.addr %s147, 2
      %s149 = smul.addr %s148, 4
      %s150 = scalar_lea.vmem %s0, %s149
      %p151 = pneg %p35
      %p152 = pneg %p32
      %p153 = pneg %p56
      %p154 = pneg %p53
      %p155 = pneg %p77
      %p156 = pneg %p74
      %p157 = pneg %p103
      %p158 = pneg %p100
      %s159 = smul.u32 14, %s14
      %p160 = scmp.lt.s32.totalorder %s159, 27
      %s161 = scalar_select %p160, %s159, 27
      %s162 = smul.addr %s161, 4
      %s163 = scalar_lea.vmem %s3, %s162
      %s164 = smul.u32 14, %s14
      %p165 = scmp.lt.s32.totalorder %s164, 27
      %s166 = scalar_select %p165, %s164, 27
      %s167 = smul.addr %s166, 2
      %s168 = smul.addr %s167, 4
      %s169 = scalar_lea.vmem %s0, %s168
      %s170 = smul.u32 14, %s14
      %s171 = smul.u32 14, %s14
      %p172 = scmp.lt.s32.totalorder %s171, 27
      %s173 = scalar_select %p172, %s171, 27
      %s174 = smul.addr %s173, 4
      %s175 = scalar_lea.vmem %s3, %s174
      %s176 = smul.u32 14, %s14
      %v178 = vld [vmem:[%s169] sm:$0xff]
      %v179 = vld [vmem:[%s169 + $0x8] sm:$0xff]
      %v180 = vld [vmem:[%s169 + $0x10] sm:$0xff]
      %v181 = vld [vmem:[%s169 + $0x18] sm:$0xff]
      %v182 = vld [vmem:[%s169 + $0x20] sm:$0xff]
      %v183 = vld [vmem:[%s169 + $0x28] sm:$0xff]
      %v184 = vld [vmem:[%s169 + $0x30] sm:$0xff]
      %v185 = vld [vmem:[%s169 + $0x38] sm:$0xff]
      %v186 = vld [vmem:[%s169 + $0x40] sm:$0xff]
      %v187 = vld [vmem:[%s169 + $0x48] sm:$0xff]
      %v188 = vld [vmem:[%s169 + $0x50] sm:$0xff]
      %v189 = vld [vmem:[%s169 + $0x58] sm:$0xff]
      %v190 = vld [vmem:[%s169 + $0x60] sm:$0xff]
      %v191 = vld [vmem:[%s169 + $0x68] sm:$0xff]
      %v192 = vld [vmem:[%s1] sm:$0xf]
      %v193 = vld [vmem:[%s1 + $0x4] sm:$0xf]
      %v194 = vld [vmem:[%s1 + $0x8] sm:$0xf]
      %v195 = vld [vmem:[%s1 + $0xc] sm:$0xf]
      %v196 = vld [vmem:[%s1 + $0x10] sm:$0xf]
      %v197 = vld [vmem:[%s1 + $0x14] sm:$0xf]
      %v198 = vld [vmem:[%s1 + $0x18] sm:$0xf]
      %v199 = vld [vmem:[%s1 + $0x1c] sm:$0xf]
      %v200 = vld [vmem:[%s1 + $0x20] sm:$0xf]
      %v201 = vld [vmem:[%s1 + $0x24] sm:$0xf]
      %v202 = vld [vmem:[%s1 + $0x28] sm:$0xf]
      %v203 = vld [vmem:[%s1 + $0x2c] sm:$0xf]
      %v204 = vld [vmem:[%s1 + $0x30] sm:$0xf]
      %v205 = vld [vmem:[%s1 + $0x34] sm:$0xf]
      %v206 = vld [vmem:[%s1 + $0x38] sm:$0xf]
      %v207 = vld [vmem:[%s1 + $0x3c] sm:$0xf]
      %v208 = vld [vmem:[%s1 + $0x40] sm:$0xf]
      %v209 = vld [vmem:[%s1 + $0x44] sm:$0xf]
      %v210 = vld [vmem:[%s1 + $0x48] sm:$0xf]
      %v211 = vld [vmem:[%s1 + $0x4c] sm:$0xf]
      %v212 = vld [vmem:[%s1 + $0x50] sm:$0xf]
      %v213 = vld [vmem:[%s1 + $0x54] sm:$0xf]
      %v214 = vld [vmem:[%s1 + $0x58] sm:$0xf]
      %v215 = vld [vmem:[%s1 + $0x5c] sm:$0xf]
      %v216 = vld [vmem:[%s1 + $0x60] sm:$0xf]
      %v217 = vld [vmem:[%s1 + $0x64] sm:$0xf]
      %v218 = vld [vmem:[%s1 + $0x68] sm:$0xf]
      %v219 = vld [vmem:[%s1 + $0x6c] sm:$0xf]
      %v220 = vld [vmem:[%s1 + $0x70] sm:$0xf]
      %v221 = vld [vmem:[%s1 + $0x74] sm:$0xf]
      %v222 = vld [vmem:[%s1 + $0x78] sm:$0xf]
      %v223 = vld [vmem:[%s1 + $0x7c] sm:$0xf]
      %v224 = vld [vmem:[%s2] sm:$0x1]
      %v226 = vlaneseq
      %v227 = vshrl.u32 %v226, 7
      %v228 = vsub.s32 0, %v227
      %v229 = vrot.slane %v224, %v228
      %v245 = vunpack.c.l.b16 %v178
      %v246 = vunpack.c.h.b16 %v178
      %v247 = vunpack.c.l.b16 %v179
      %v248 = vunpack.c.h.b16 %v179
      %v249 = vunpack.c.l.b16 %v180
      %v250 = vunpack.c.h.b16 %v180
      %v251 = vunpack.c.l.b16 %v181
      %v252 = vunpack.c.h.b16 %v181
      %v253 = vunpack.c.l.b16 %v182
      %v254 = vunpack.c.h.b16 %v182
      %v255 = vunpack.c.l.b16 %v183
      %v256 = vunpack.c.h.b16 %v183
      %v257 = vunpack.c.l.b16 %v184
      %v258 = vunpack.c.h.b16 %v184
      %v259 = vunpack.c.l.b16 %v185
      %v260 = vunpack.c.h.b16 %v185
      %v261 = vunpack.c.l.b16 %v186
      %v262 = vunpack.c.h.b16 %v186
      %v263 = vunpack.c.l.b16 %v187
      %v264 = vunpack.c.h.b16 %v187
      %v265 = vunpack.c.l.b16 %v188
      %v266 = vunpack.c.h.b16 %v188
      %v267 = vunpack.c.l.b16 %v189
      %v268 = vunpack.c.h.b16 %v189
      %v269 = vunpack.c.l.b16 %v190
      %v270 = vunpack.c.h.b16 %v190
      %v271 = vunpack.c.l.b16 %v191
      %v272 = vunpack.c.h.b16 %v191
      %v273 = vpack.c.b16 %v247, %v245
      %v274 = vpack.c.b16 %v248, %v246
      %v275 = vpack.c.b16 %v251, %v249
      %v276 = vpack.c.b16 %v252, %v250
      %v277 = vpack.c.b16 %v255, %v253
      %v278 = vpack.c.b16 %v256, %v254
      %v279 = vpack.c.b16 %v259, %v257
      %v280 = vpack.c.b16 %v260, %v258
      %v281 = vpack.c.b16 %v263, %v261
      %v282 = vpack.c.b16 %v264, %v262
      %v283 = vpack.c.b16 %v267, %v265
      %v284 = vpack.c.b16 %v268, %v266
      %v285 = vpack.c.b16 %v271, %v269
      %v286 = vpack.c.b16 %v272, %v270
      %v333 = vunpack.c.l.b16 %v192
      %v334 = vunpack.c.l.b16 %v193
      %v335 = vunpack.c.l.b16 %v194
      %v336 = vunpack.c.l.b16 %v195
      %v337 = vunpack.c.l.b16 %v196
      %v338 = vunpack.c.l.b16 %v197
      %v339 = vunpack.c.l.b16 %v198
      %v340 = vunpack.c.l.b16 %v199
      %v341 = vunpack.c.l.b16 %v200
      %v342 = vunpack.c.l.b16 %v201
      %v343 = vunpack.c.l.b16 %v202
      %v344 = vunpack.c.l.b16 %v203
      %v345 = vunpack.c.l.b16 %v204
      %v346 = vunpack.c.l.b16 %v205
      %v347 = vunpack.c.l.b16 %v206
      %v348 = vunpack.c.l.b16 %v207
      %v349 = vunpack.c.l.b16 %v208
      %v350 = vunpack.c.l.b16 %v209
      %v351 = vunpack.c.l.b16 %v210
      %v352 = vunpack.c.l.b16 %v211
      %v353 = vunpack.c.l.b16 %v212
      %v354 = vunpack.c.l.b16 %v213
      %v355 = vunpack.c.l.b16 %v214
      %v356 = vunpack.c.l.b16 %v215
      %v357 = vunpack.c.l.b16 %v216
      %v358 = vunpack.c.l.b16 %v217
      %v359 = vunpack.c.l.b16 %v218
      %v360 = vunpack.c.l.b16 %v219
      %v361 = vunpack.c.l.b16 %v220
      %v362 = vunpack.c.l.b16 %v221
      %v363 = vunpack.c.l.b16 %v222
      %v364 = vunpack.c.l.b16 %v223
      %v365 = vpack.c.b16 %v334, %v333
      %v366 = vpack.c.b16 %v336, %v335
      %v367 = vpack.c.b16 %v338, %v337
      %v368 = vpack.c.b16 %v340, %v339
      %v369 = vpack.c.b16 %v342, %v341
      %v370 = vpack.c.b16 %v344, %v343
      %v371 = vpack.c.b16 %v346, %v345
      %v372 = vpack.c.b16 %v348, %v347
      %v373 = vpack.c.b16 %v350, %v349
      %v374 = vpack.c.b16 %v352, %v351
      %v375 = vpack.c.b16 %v354, %v353
      %v376 = vpack.c.b16 %v356, %v355
      %v377 = vpack.c.b16 %v358, %v357
      %v378 = vpack.c.b16 %v360, %v359
      %v379 = vpack.c.b16 %v362, %v361
      %v380 = vpack.c.b16 %v364, %v363
      %397 = vmatprep.subr.bf16.mxu0 0
      %398 = vmatpush1.bf16.msra.mxu0 %v365
      %399 = vmatprep.subr.bf16.mxu0 0
      %400 = vmatpush1.bf16.msra.mxu0 %v366
      %401 = vmatprep.subr.bf16.mxu0 0
      %402 = vmatpush1.bf16.msra.mxu0 %v367
      %403 = vmatprep.subr.bf16.mxu0 0
      %404 = vmatpush1.bf16.msra.mxu0 %v368
      %405 = vmatprep.subr.bf16.mxu0 0
      %406 = vmatpush1.bf16.msra.mxu0 %v369
      %407 = vmatprep.subr.bf16.mxu0 0
      %408 = vmatpush1.bf16.msra.mxu0 %v370
      %409 = vmatprep.subr.bf16.mxu0 0
      %410 = vmatpush1.bf16.msra.mxu0 %v371
      %411 = vmatprep.subr.bf16.mxu0 0
      %412 = vmatpush1.bf16.msra.mxu0 %v372
      %413 = vmatprep.subr.bf16.mxu0 0
      %414 = vmatpush1.bf16.msra.mxu0 %v373
      %415 = vmatprep.subr.bf16.mxu0 0
      %416 = vmatpush1.bf16.msra.mxu0 %v374
      %417 = vmatprep.subr.bf16.mxu0 0
      %418 = vmatpush1.bf16.msra.mxu0 %v375
      %419 = vmatprep.subr.bf16.mxu0 0
      %420 = vmatpush1.bf16.msra.mxu0 %v376
      %421 = vmatprep.subr.bf16.mxu0 0
      %422 = vmatpush1.bf16.msra.mxu0 %v377
      %423 = vmatprep.subr.bf16.mxu0 0
      %424 = vmatpush1.bf16.msra.mxu0 %v378
      %425 = vmatprep.subr.bf16.mxu0 0
      %426 = vmatpush1.bf16.msra.mxu0 %v379
      %427 = vmatprep.subr.bf16.mxu0 0
      %428 = vmatpush1.bf16.msra.mxu0 %v380
      %429 = vmatprep.mubr.bf16.mxu0 %v274
      %430 = vmatmul.mubr.bf16.gmra.mrb[0].mxu0 %v273
      %v431 = vpop.f32.mrb[0].mxu0
      %v432 = vadd.f32 %v229, %v431
      %v433 = vpop.f32.mrb[0].mxu0
      %v434 = vpop.f32.mrb[0].mxu0
      %v435 = vadd.f32 %v229, %v434
      %v436 = vpop.f32.mrb[0].mxu0
      %437 = vmatprep.mubr.bf16.mxu0 %v276
      %438 = vmatmul.mubr.bf16.gmra.mrb[0].mxu0 %v275
      %v439 = vpop.f32.mrb[0].mxu0
      %v440 = vadd.f32 %v229, %v439
      %v441 = vpop.f32.mrb[0].mxu0
      %v442 = vpop.f32.mrb[0].mxu0
      %v443 = vadd.f32 %v229, %v442
      %v444 = vpop.f32.mrb[0].mxu0
      %445 = vmatprep.mubr.bf16.mxu0 %v278
      %446 = vmatmul.mubr.bf16.gmra.mrb[0].mxu0 %v277
      %v447 = vpop.f32.mrb[0].mxu0
      %v448 = vadd.f32 %v229, %v447
      %v449 = vpop.f32.mrb[0].mxu0
      %v450 = vpop.f32.mrb[0].mxu0
      %v451 = vadd.f32 %v229, %v450
      %v452 = vpop.f32.mrb[0].mxu0
      %453 = vmatprep.mubr.bf16.mxu0 %v280
      %454 = vmatmul.mubr.bf16.gmra.mrb[0].mxu0 %v279
      %v455 = vpop.f32.mrb[0].mxu0
      %v456 = vadd.f32 %v229, %v455
      %v457 = vpop.f32.mrb[0].mxu0
      %v458 = vpop.f32.mrb[0].mxu0
      %v459 = vadd.f32 %v229, %v458
      %v460 = vpop.f32.mrb[0].mxu0
      %461 = vmatprep.mubr.bf16.mxu0 %v282
      %462 = vmatmul.mubr.bf16.gmra.mrb[0].mxu0 %v281
      %v463 = vpop.f32.mrb[0].mxu0
      %v464 = vadd.f32 %v229, %v463
      %v465 = vpop.f32.mrb[0].mxu0
      %v466 = vpop.f32.mrb[0].mxu0
      %v467 = vadd.f32 %v229, %v466
      %v468 = vpop.f32.mrb[0].mxu0
      %469 = vmatprep.mubr.bf16.mxu0 %v284
      %470 = vmatmul.mubr.bf16.gmra.mrb[0].mxu0 %v283
      %v471 = vpop.f32.mrb[0].mxu0
      %v472 = vadd.f32 %v229, %v471
      %v473 = vpop.f32.mrb[0].mxu0
      %v474 = vpop.f32.mrb[0].mxu0
      %v475 = vadd.f32 %v229, %v474
      %v476 = vpop.f32.mrb[0].mxu0
      %477 = vmatprep.mubr.bf16.mxu0 %v286
      %478 = vmatmul.mubr.bf16.gmra.mrb[0].mxu0 %v285
      %v479 = vpop.f32.mrb[0].mxu0
      %v480 = vadd.f32 %v229, %v479
      %v481 = vpop.f32.mrb[0].mxu0
      %v482 = vpop.f32.mrb[0].mxu0
      %v483 = vadd.f32 %v229, %v482
      %v484 = vpop.f32.mrb[0].mxu0
      %485 = vdwg.mxu0
      %v486 = vmax.f32 %v432, 0.0
      %v487 = vmax.f32 %v435, 0.0
      %v488 = vmax.f32 %v440, 0.0
      %v489 = vmax.f32 %v443, 0.0
      %v490 = vmax.f32 %v448, 0.0
      %v491 = vmax.f32 %v451, 0.0
      %v492 = vmax.f32 %v456, 0.0
      %v493 = vmax.f32 %v459, 0.0
      %v494 = vmax.f32 %v464, 0.0
      %v495 = vmax.f32 %v467, 0.0
      %v496 = vmax.f32 %v472, 0.0
      %v497 = vmax.f32 %v475, 0.0
      %v498 = vmax.f32 %v480, 0.0
      %v499 = vmax.f32 %v483, 0.0
      %v500 = vpack.c.bf16 %v487, %v486
      %v501 = vpack.c.bf16 %v489, %v488
      %v502 = vpack.c.bf16 %v491, %v490
      %v503 = vpack.c.bf16 %v493, %v492
      %v504 = vpack.c.bf16 %v495, %v494
      %v505 = vpack.c.bf16 %v497, %v496
      %v506 = vpack.c.bf16 %v499, %v498
      %v514 = vunpack.c.l.b16 %v500
      %v515 = vunpack.c.h.b16 %v500
      %v516 = vunpack.c.l.b16 %v501
      %v517 = vunpack.c.h.b16 %v501
      %v518 = vunpack.c.l.b16 %v502
      %v519 = vunpack.c.h.b16 %v502
      %v520 = vunpack.c.l.b16 %v503
      %v521 = vunpack.c.h.b16 %v503
      %v522 = vunpack.c.l.b16 %v504
      %v523 = vunpack.c.h.b16 %v504
      %v524 = vunpack.c.l.b16 %v505
      %v525 = vunpack.c.h.b16 %v505
      %v526 = vunpack.c.l.b16 %v506
      %v527 = vunpack.c.h.b16 %v506
      %v528 = vpack.c.b16 %v514, %v514
      %v529 = vpack.c.b16 %v515, %v515
      %v530 = vpack.c.b16 %v516, %v516
      %v531 = vpack.c.b16 %v517, %v517
      %v532 = vpack.c.b16 %v518, %v518
      %v533 = vpack.c.b16 %v519, %v519
      %v534 = vpack.c.b16 %v520, %v520
      %v535 = vpack.c.b16 %v521, %v521
      %v536 = vpack.c.b16 %v522, %v522
      %v537 = vpack.c.b16 %v523, %v523
      %v538 = vpack.c.b16 %v524, %v524
      %v539 = vpack.c.b16 %v525, %v525
      %v540 = vpack.c.b16 %v526, %v526
      %v541 = vpack.c.b16 %v527, %v527
      %556 = vst [vmem:[%s175] sm:$0xf] %v528
      %557 = vst [vmem:[%s175 + $0x4] sm:$0xf] %v529
      %558 = vst [vmem:[%s175 + $0x8] sm:$0xf] %v530
      %559 = vst [vmem:[%s175 + $0xc] sm:$0xf] %v531
      %560 = vst [vmem:[%s175 + $0x10] sm:$0xf] %v532
      %561 = vst [vmem:[%s175 + $0x14] sm:$0xf] %v533
      %562 = vst [vmem:[%s175 + $0x18] sm:$0xf] %v534
      %563 = vst [vmem:[%s175 + $0x1c] sm:$0xf] %v535
      %564 = vst [vmem:[%s175 + $0x20] sm:$0xf] %v536
      %565 = vst [vmem:[%s175 + $0x24] sm:$0xf] %v537
      %566 = vst [vmem:[%s175 + $0x28] sm:$0xf] %v538
      %567 = vst [vmem:[%s175 + $0x2c] sm:$0xf] %v539
      %568 = vst [vmem:[%s175 + $0x30] sm:$0xf] %v540
      %569 = vst [vmem:[%s175 + $0x34] sm:$0xf] %v541
      %s570 = smul.u32 14, %s14
      %p571 = scmp.lt.s32.totalorder %s570, 27
      %s572 = scalar_select %p571, %s570, 27
      %s573 = smul.addr %s572, 4
      %s574 = scalar_lea.vmem %s3, %s573
      // Predicated region
      $region33: #{qnetwork_forward.4} parent=31 // pred_check
        %p575 = pneg %p100
      $region34: #{qnetwork_forward.4} parent=31 // pred_check_branch
        %577 = sbr.rel (%p575) target = $region36
      $region35: #{qnetwork_forward.4} parent=31 // pred_region
        %s578 = smul.u32 14, %s14
      $region36: #{qnetwork_forward.4} parent=31 // pred_fallthru
        _
    $region32: #{qnetwork_forward.4} parent=5 // pred_fallthru
      _
    %p579 = scmp.le.s32.totalorder 2, %s9
    // Predicated region
    $region37: #{qnetwork_forward.4} parent=5 // pred_check
      %p580 = pneg %p579
    $region38: #{qnetwork_forward.4} parent=5 // pred_check_branch
      %582 = sbr.rel (%p580) target = $region40
    $region39: #{qnetwork_forward.4} parent=5 // pred_region
      %s583 = ssub.s32 %s9, 2
      // Predicated region
      $region41: #{qnetwork_forward.4} parent=39 // pred_check
        %p584 = pneg %p106
      $region42: #{qnetwork_forward.4} parent=39 // pred_check_branch
        %586 = sbr.rel (%p584) target = $region44
      $region43: #{qnetwork_forward.4} parent=39 // pred_region
        %s587 = smul.u32 14, %s15
        %p588 = scmp.lt.s32.totalorder %s587, 27
        %s589 = scalar_select %p588, %s587, 27
        %s590 = smul.addr %s589, 4
        %s591 = scalar_lea.vmem %s3, %s590
      $region44: #{qnetwork_forward.4} parent=39 // pred_fallthru
        _
    $region40: #{qnetwork_forward.4} parent=5 // pred_fallthru
      _
  $region6: #{qnetwork_forward.4} parent=0 // loop_footer
    %s13 = sadd.s32 1, %s9
  $region7: #{qnetwork_forward.4} parent=0 // loop_footer_branch
    %8 = sbr.rel target = $region3
  $region8: #{qnetwork_forward.4} parent=0 // loop_exit
    _

// kernel: qnetwork_forward.5
$region0: #{qnetwork_forward.5}
  #allocation0 [shape = 'u32[]', space=smem, size = 0x4, offset = 0x4, fixed_abs, tag = 'smem constant byte address 0x4 - core index']
  #allocation1 [shape = 'u32[144,128]{1,0:T(1,128)}', space=vmem, size = 0x12000, scoped, tag = 'internal scratch']
  %s0 = inlined_call_operand.vmem [shape: bf16[16,3200], index: 0, kind: input, shape index: {}]
  %s1 = inlined_call_operand.vmem [shape: bf16[3200,256], index: 1, kind: input, shape index: {}]
  %s2 = inlined_call_operand.vmem [shape: f32[1,256], index: 2, kind: input, shape index: {}]
  %s3 = inlined_call_operand.vmem [shape: bf16[256,128], index: 3, kind: input, shape index: {}]
  %s4 = inlined_call_operand.vmem [shape: f32[1,128], index: 4, kind: input, shape index: {}]
  %s5 = inlined_call_operand.vmem [shape: f32[16,128], index: 5, kind: output, shape index: {}]
  %s6 = sld [smem:[#allocation0]]
  $region30: #{qnetwork_forward.5} parent=0
    _
  %s8 = ssub.s32 1, %s6
  %s9 = scalar_select 0, %s8, %s6
  // Predicated region
  $region2: #{qnetwork_forward.5} parent=0 // pred_check
    _
  $region3: #{qnetwork_forward.5} parent=0 // pred_check_branch
    %11 = sbr.rel (0) target = $region5
  $region4: #{qnetwork_forward.5} parent=0 // pred_region
    _
  $region5: #{qnetwork_forward.5} parent=0 // pred_fallthru
    _
  // Predicated region
  $region6: #{qnetwork_forward.5} parent=0 // pred_check
    _
  $region7: #{qnetwork_forward.5} parent=0 // pred_check_branch
    %13 = sbr.rel (0) target = $region9
  $region8: #{qnetwork_forward.5} parent=0 // pred_region
    _
  $region9: #{qnetwork_forward.5} parent=0 // pred_fallthru
    _
  // Predicated region
  $region10: #{qnetwork_forward.5} parent=0 // pred_check
    _
  $region11: #{qnetwork_forward.5} parent=0 // pred_check_branch
    %15 = sbr.rel (0) target = $region13
  $region12: #{qnetwork_forward.5} parent=0 // pred_region
    _
  $region13: #{qnetwork_forward.5} parent=0 // pred_fallthru
    _
  // Predicated region
  $region14: #{qnetwork_forward.5} parent=0 // pred_check
    _
  $region15: #{qnetwork_forward.5} parent=0 // pred_check_branch
    %17 = sbr.rel (0) target = $region17
  $region16: #{qnetwork_forward.5} parent=0 // pred_region
    _
  $region17: #{qnetwork_forward.5} parent=0 // pred_fallthru
    _
  // Predicated region
  $region18: #{qnetwork_forward.5} parent=0 // pred_check
    _
  $region19: #{qnetwork_forward.5} parent=0 // pred_check_branch
    %19 = sbr.rel (0) target = $region21
  $region20: #{qnetwork_forward.5} parent=0 // pred_region
    _
  $region21: #{qnetwork_forward.5} parent=0 // pred_fallthru
    _
  %v21 = vld [vmem:[%s0] sm:$0xff]
  %v22 = vld [vmem:[%s0 + $0x8] sm:$0xff]
  %v23 = vld [vmem:[%s0 + $0x10] sm:$0xff]
  %v24 = vld [vmem:[%s0 + $0x18] sm:$0xff]
  %v25 = vld [vmem:[%s0 + $0x20] sm:$0xff]
  %v26 = vld [vmem:[%s0 + $0x28] sm:$0xff]
  %v27 = vld [vmem:[%s0 + $0x30] sm:$0xff]
  %v28 = vld [vmem:[%s0 + $0x38] sm:$0xff]
  %v29 = vld [vmem:[%s0 + $0x40] sm:$0xff]
  %v30 = vld [vmem:[%s0 + $0x48] sm:$0xff]
  %v31 = vld [vmem:[%s0 + $0x50] sm:$0xff]
  %v32 = vld [vmem:[%s0 + $0x58] sm:$0xff]
  %v33 = vld [vmem:[%s0 + $0x60] sm:$0xf]
  %v34 = vld [vmem:[%s0 + $0x64] sm:$0xff]
  %v35 = vld [vmem:[%s0 + $0x6c] sm:$0xff]
  %v36 = vld [vmem:[%s0 + $0x74] sm:$0xff]
  %v37 = vld [vmem:[%s0 + $0x7c] sm:$0xff]
  %v38 = vld [vmem:[%s0 + $0x84] sm:$0xff]
  %v39 = vld [vmem:[%s0 + $0x8c] sm:$0xff]
  %v40 = vld [vmem:[%s0 + $0x94] sm:$0xff]
  %v41 = vld [vmem:[%s0 + $0x9c] sm:$0xff]
  %v42 = vld [vmem:[%s0 + $0xa4] sm:$0xff]
  %v43 = vld [vmem:[%s0 + $0xac] sm:$0xff]
  %v44 = vld [vmem:[%s0 + $0xb4] sm:$0xff]
  %v45 = vld [vmem:[%s0 + $0xbc] sm:$0xff]
  %v46 = vld [vmem:[%s0 + $0xc4] sm:$0xf]
  %v47 = vld [vmem:[%s1] sm:$0xff]
  %v48 = vld [vmem:[%s1 + $0x8] sm:$0xff]
  %v49 = vld [vmem:[%s1 + $0x10] sm:$0xff]
  %v50 = vld [vmem:[%s1 + $0x18] sm:$0xff]
  %v51 = vld [vmem:[%s1 + $0x20] sm:$0xff]
  %v52 = vld [vmem:[%s1 + $0x28] sm:$0xff]
  %v53 = vld [vmem:[%s1 + $0x30] sm:$0xff]
  %v54 = vld [vmem:[%s1 + $0x38] sm:$0xff]
  %v55 = vld [vmem:[%s1 + $0x40] sm:$0xff]
  %v56 = vld [vmem:[%s1 + $0x48] sm:$0xff]
  %v57 = vld [vmem:[%s1 + $0x50] sm:$0xff]
  %v58 = vld [vmem:[%s1 + $0x58] sm:$0xff]
  %v59 = vld [vmem:[%s1 + $0x60] sm:$0xff]
  %v60 = vld [vmem:[%s1 + $0x68] sm:$0xff]
  %v61 = vld [vmem:[%s1 + $0x70] sm:$0xff]
  %v62 = vld [vmem:[%s1 + $0x78] sm:$0xff]
  %v63 = vld [vmem:[%s1 + $0x80] sm:$0xff]
  %v64 = vld [vmem:[%s1 + $0x88] sm:$0xff]
  %v65 = vld [vmem:[%s1 + $0x90] sm:$0xff]
  %v66 = vld [vmem:[%s1 + $0x98] sm:$0xff]
  %v67 = vld [vmem:[%s1 + $0xa0] sm:$0xff]
  %v68 = vld [vmem:[%s1 + $0xa8] sm:$0xff]
  %v69 = vld [vmem:[%s1 + $0xb0] sm:$0xff]
  %v70 = vld [vmem:[%s1 + $0xb8] sm:$0xff]
  %v71 = vld [vmem:[%s1 + $0xc0] sm:$0xff]
  %v72 = vld [vmem:[%s1 + $0xc8] sm:$0xff]
  %v73 = vld [vmem:[%s1 + $0xd0] sm:$0xff]
  %v74 = vld [vmem:[%s1 + $0xd8] sm:$0xff]
  %v75 = vld [vmem:[%s1 + $0xe0] sm:$0xff]
  %v76 = vld [vmem:[%s1 + $0xe8] sm:$0xff]
  %v77 = vld [vmem:[%s1 + $0xf0] sm:$0xff]
  %v78 = vld [vmem:[%s1 + $0xf8] sm:$0xff]
  %v79 = vld [vmem:[%s1 + $0x100] sm:$0xff]
  %v80 = vld [vmem:[%s1 + $0x108] sm:$0xff]
  %v81 = vld [vmem:[%s1 + $0x110] sm:$0xff]
  %v82 = vld [vmem:[%s1 + $0x118] sm:$0xff]
  %v83 = vld [vmem:[%s1 + $0x120] sm:$0xff]
  %v84 = vld [vmem:[%s1 + $0x128] sm:$0xff]
  %v85 = vld [vmem:[%s1 + $0x130] sm:$0xff]
  %v86 = vld [vmem:[%s1 + $0x138] sm:$0xff]
  %v87 = vld [vmem:[%s1 + $0x140] sm:$0xff]
  %v88 = vld [vmem:[%s1 + $0x148] sm:$0xff]
  %v89 = vld [vmem:[%s1 + $0x150] sm:$0xff]
  %v90 = vld [vmem:[%s1 + $0x158] sm:$0xff]
  %v91 = vld [vmem:[%s1 + $0x160] sm:$0xff]
  %v92 = vld [vmem:[%s1 + $0x168] sm:$0xff]
  %v93 = vld [vmem:[%s1 + $0x170] sm:$0xff]
  %v94 = vld [vmem:[%s1 + $0x178] sm:$0xff]
  %v95 = vld [vmem:[%s1 + $0x180] sm:$0xff]
  %v96 = vld [vmem:[%s1 + $0x188] sm:$0xff]
  %v97 = vld [vmem:[%s1 + $0x190] sm:$0xff]
  %v98 = vld [vmem:[%s1 + $0x198] sm:$0xff]
  %v99 = vld [vmem:[%s1 + $0x1a0] sm:$0xff]
  %v100 = vld [vmem:[%s1 + $0x1a8] sm:$0xff]
  %v101 = vld [vmem:[%s1 + $0x1b0] sm:$0xff]
  %v102 = vld [vmem:[%s1 + $0x1b8] sm:$0xff]
  %v103 = vld [vmem:[%s1 + $0x1c0] sm:$0xff]
  %v104 = vld [vmem:[%s1 + $0x1c8] sm:$0xff]
  %v105 = vld [vmem:[%s1 + $0x1d0] sm:$0xff]
  %v106 = vld [vmem:[%s1 + $0x1d8] sm:$0xff]
  %v107 = vld [vmem:[%s1 + $0x1e0] sm:$0xff]
  %v108 = vld [vmem:[%s1 + $0x1e8] sm:$0xff]
  %v109 = vld [vmem:[%s1 + $0x1f0] sm:$0xff]
  %v110 = vld [vmem:[%s1 + $0x1f8] sm:$0xff]
  %v111 = vld [vmem:[%s1 + $0x200] sm:$0xff]
  %v112 = vld [vmem:[%s1 + $0x208] sm:$0xff]
  %v113 = vld [vmem:[%s1 + $0x210] sm:$0xff]
  %v114 = vld [vmem:[%s1 + $0x218] sm:$0xff]
  %v115 = vld [vmem:[%s1 + $0x220] sm:$0xff]
  %v116 = vld [vmem:[%s1 + $0x228] sm:$0xff]
  %v117 = vld [vmem:[%s1 + $0x230] sm:$0xff]
  %v118 = vld [vmem:[%s1 + $0x238] sm:$0xff]
  %v119 = vld [vmem:[%s1 + $0x240] sm:$0xff]
  %v120 = vld [vmem:[%s1 + $0x248] sm:$0xff]
  %v121 = vld [vmem:[%s1 + $0x250] sm:$0xff]
  %v122 = vld [vmem:[%s1 + $0x258] sm:$0xff]
  %v123 = vld [vmem:[%s1 + $0x260] sm:$0xff]
  %v124 = vld [vmem:[%s1 + $0x268] sm:$0xff]
  %v125 = vld [vmem:[%s1 + $0x270] sm:$0xff]
  %v126 = vld [vmem:[%s1 + $0x278] sm:$0xff]
  %v127 = vld [vmem:[%s1 + $0x280] sm:$0xff]
  %v128 = vld [vmem:[%s1 + $0x288] sm:$0xff]
  %v129 = vld [vmem:[%s1 + $0x290] sm:$0xff]
  %v130 = vld [vmem:[%s1 + $0x298] sm:$0xff]
  %v131 = vld [vmem:[%s1 + $0x2a0] sm:$0xff]
  %v132 = vld [vmem:[%s1 + $0x2a8] sm:$0xff]
  %v133 = vld [vmem:[%s1 + $0x2b0] sm:$0xff]
  %v134 = vld [vmem:[%s1 + $0x2b8] sm:$0xff]
  %v135 = vld [vmem:[%s1 + $0x2c0] sm:$0xff]
  %v136 = vld [vmem:[%s1 + $0x2c8] sm:$0xff]
  %v137 = vld [vmem:[%s1 + $0x2d0] sm:$0xff]
  %v138 = vld [vmem:[%s1 + $0x2d8] sm:$0xff]
  %v139 = vld [vmem:[%s1 + $0x2e0] sm:$0xff]
  %v140 = vld [vmem:[%s1 + $0x2e8] sm:$0xff]
  %v141 = vld [vmem:[%s1 + $0x2f0] sm:$0xff]
  %v142 = vld [vmem:[%s1 + $0x2f8] sm:$0xff]
  %v143 = vld [vmem:[%s1 + $0x300] sm:$0xff]
  %v144 = vld [vmem:[%s1 + $0x308] sm:$0xff]
  %v145 = vld [vmem:[%s1 + $0x310] sm:$0xff]
  %v146 = vld [vmem:[%s1 + $0x318] sm:$0xff]
  %v147 = vld [vmem:[%s1 + $0x320] sm:$0xff]
  %v148 = vld [vmem:[%s1 + $0x328] sm:$0xff]
  %v149 = vld [vmem:[%s1 + $0x330] sm:$0xff]
  %v150 = vld [vmem:[%s1 + $0x338] sm:$0xff]
  %v151 = vld [vmem:[%s1 + $0x340] sm:$0xff]
  %v152 = vld [vmem:[%s1 + $0x348] sm:$0xff]
  %v153 = vld [vmem:[%s1 + $0x350] sm:$0xff]
  %v154 = vld [vmem:[%s1 + $0x358] sm:$0xff]
  %v155 = vld [vmem:[%s1 + $0x360] sm:$0xff]
  %v156 = vld [vmem:[%s1 + $0x368] sm:$0xff]
  %v157 = vld [vmem:[%s1 + $0x370] sm:$0xff]
  %v158 = vld [vmem:[%s1 + $0x378] sm:$0xff]
  %v159 = vld [vmem:[%s1 + $0x380] sm:$0xff]
  %v160 = vld [vmem:[%s1 + $0x388] sm:$0xff]
  %v161 = vld [vmem:[%s1 + $0x390] sm:$0xff]
  %v162 = vld [vmem:[%s1 + $0x398] sm:$0xff]
  %v163 = vld [vmem:[%s1 + $0x3a0] sm:$0xff]
  %v164 = vld [vmem:[%s1 + $0x3a8] sm:$0xff]
  %v165 = vld [vmem:[%s1 + $0x3b0] sm:$0xff]
  %v166 = vld [vmem:[%s1 + $0x3b8] sm:$0xff]
  %v167 = vld [vmem:[%s1 + $0x3c0] sm:$0xff]
  %v168 = vld [vmem:[%s1 + $0x3c8] sm:$0xff]
  %v169 = vld [vmem:[%s1 + $0x3d0] sm:$0xff]
  %v170 = vld [vmem:[%s1 + $0x3d8] sm:$0xff]
  %v171 = vld [vmem:[%s1 + $0x3e0] sm:$0xff]
  %v172 = vld [vmem:[%s1 + $0x3e8] sm:$0xff]
  %v173 = vld [vmem:[%s1 + $0x3f0] sm:$0xff]
  %v174 = vld [vmem:[%s1 + $0x3f8] sm:$0xff]
  %v175 = vld [vmem:[%s1 + $0x400] sm:$0xff]
  %v176 = vld [vmem:[%s1 + $0x408] sm:$0xff]
  %v177 = vld [vmem:[%s1 + $0x410] sm:$0xff]
  %v178 = vld [vmem:[%s1 + $0x418] sm:$0xff]
  %v179 = vld [vmem:[%s1 + $0x420] sm:$0xff]
  %v180 = vld [vmem:[%s1 + $0x428] sm:$0xff]
  %v181 = vld [vmem:[%s1 + $0x430] sm:$0xff]
  %v182 = vld [vmem:[%s1 + $0x438] sm:$0xff]
  %v183 = vld [vmem:[%s1 + $0x440] sm:$0xff]
  %v184 = vld [vmem:[%s1 + $0x448] sm:$0xff]
  %v185 = vld [vmem:[%s1 + $0x450] sm:$0xff]
  %v186 = vld [vmem:[%s1 + $0x458] sm:$0xff]
  %v187 = vld [vmem:[%s1 + $0x460] sm:$0xff]
  %v188 = vld [vmem:[%s1 + $0x468] sm:$0xff]
  %v189 = vld [vmem:[%s1 + $0x470] sm:$0xff]
  %v190 = vld [vmem:[%s1 + $0x478] sm:$0xff]
  %v191 = vld [vmem:[%s1 + $0x480] sm:$0xff]
  %v192 = vld [vmem:[%s1 + $0x488] sm:$0xff]
  %v193 = vld [vmem:[%s1 + $0x490] sm:$0xff]
  %v194 = vld [vmem:[%s1 + $0x498] sm:$0xff]
  %v195 = vld [vmem:[%s1 + $0x4a0] sm:$0xff]
  %v196 = vld [vmem:[%s1 + $0x4a8] sm:$0xff]
  %v197 = vld [vmem:[%s1 + $0x4b0] sm:$0xff]
  %v198 = vld [vmem:[%s1 + $0x4b8] sm:$0xff]
  %v199 = vld [vmem:[%s1 + $0x4c0] sm:$0xff]
  %v200 = vld [vmem:[%s1 + $0x4c8] sm:$0xff]
  %v201 = vld [vmem:[%s1 + $0x4d0] sm:$0xff]
  %v202 = vld [vmem:[%s1 + $0x4d8] sm:$0xff]
  %v203 = vld [vmem:[%s1 + $0x4e0] sm:$0xff]
  %v204 = vld [vmem:[%s1 + $0x4e8] sm:$0xff]
  %v205 = vld [vmem:[%s1 + $0x4f0] sm:$0xff]
  %v206 = vld [vmem:[%s1 + $0x4f8] sm:$0xff]
  %v207 = vld [vmem:[%s1 + $0x500] sm:$0xff]
  %v208 = vld [vmem:[%s1 + $0x508] sm:$0xff]
  %v209 = vld [vmem:[%s1 + $0x510] sm:$0xff]
  %v210 = vld [vmem:[%s1 + $0x518] sm:$0xff]
  %v211 = vld [vmem:[%s1 + $0x520] sm:$0xff]
  %v212 = vld [vmem:[%s1 + $0x528] sm:$0xff]
  %v213 = vld [vmem:[%s1 + $0x530] sm:$0xff]
  %v214 = vld [vmem:[%s1 + $0x538] sm:$0xff]
  %v215 = vld [vmem:[%s1 + $0x540] sm:$0xff]
  %v216 = vld [vmem:[%s1 + $0x548] sm:$0xff]
  %v217 = vld [vmem:[%s1 + $0x550] sm:$0xff]
  %v218 = vld [vmem:[%s1 + $0x558] sm:$0xff]
  %v219 = vld [vmem:[%s1 + $0x560] sm:$0xff]
  %v220 = vld [vmem:[%s1 + $0x568] sm:$0xff]
  %v221 = vld [vmem:[%s1 + $0x570] sm:$0xff]
  %v222 = vld [vmem:[%s1 + $0x578] sm:$0xff]
  %v223 = vld [vmem:[%s1 + $0x580] sm:$0xff]
  %v224 = vld [vmem:[%s1 + $0x588] sm:$0xff]
  %v225 = vld [vmem:[%s1 + $0x590] sm:$0xff]
  %v226 = vld [vmem:[%s1 + $0x598] sm:$0xff]
  %v227 = vld [vmem:[%s1 + $0x5a0] sm:$0xff]
  %v228 = vld [vmem:[%s1 + $0x5a8] sm:$0xff]
  %v229 = vld [vmem:[%s1 + $0x5b0] sm:$0xff]
  %v230 = vld [vmem:[%s1 + $0x5b8] sm:$0xff]
  %v231 = vld [vmem:[%s1 + $0x5c0] sm:$0xff]
  %v232 = vld [vmem:[%s1 + $0x5c8] sm:$0xff]
  %v233 = vld [vmem:[%s1 + $0x5d0] sm:$0xff]
  %v234 = vld [vmem:[%s1 + $0x5d8] sm:$0xff]
  %v235 = vld [vmem:[%s1 + $0x5e0] sm:$0xff]
  %v236 = vld [vmem:[%s1 + $0x5e8] sm:$0xff]
  %v237 = vld [vmem:[%s1 + $0x5f0] sm:$0xff]
  %v238 = vld [vmem:[%s1 + $0x5f8] sm:$0xff]
  %v239 = vld [vmem:[%s1 + $0x600] sm:$0xff]
  %v240 = vld [vmem:[%s1 + $0x608] sm:$0xff]
  %v241 = vld [vmem:[%s1 + $0x610] sm:$0xff]
  %v242 = vld [vmem:[%s1 + $0x618] sm:$0xff]
  %v243 = vld [vmem:[%s1 + $0x620] sm:$0xff]
  %v244 = vld [vmem:[%s1 + $0x628] sm:$0xff]
  %v245 = vld [vmem:[%s1 + $0x630] sm:$0xff]
  %v246 = vld [vmem:[%s1 + $0x638] sm:$0xff]
  %v247 = vld [vmem:[%s1 + $0x640] sm:$0xff]
  %v248 = vld [vmem:[%s1 + $0x648] sm:$0xff]
  %v249 = vld [vmem:[%s1 + $0x650] sm:$0xff]
  %v250 = vld [vmem:[%s1 + $0x658] sm:$0xff]
  %v251 = vld [vmem:[%s1 + $0x660] sm:$0xff]
  %v252 = vld [vmem:[%s1 + $0x668] sm:$0xff]
  %v253 = vld [vmem:[%s1 + $0x670] sm:$0xff]
  %v254 = vld [vmem:[%s1 + $0x678] sm:$0xff]
  %v255 = vld [vmem:[%s1 + $0x680] sm:$0xff]
  %v256 = vld [vmem:[%s1 + $0x688] sm:$0xff]
  %v257 = vld [vmem:[%s1 + $0x690] sm:$0xff]
  %v258 = vld [vmem:[%s1 + $0x698] sm:$0xff]
  %v259 = vld [vmem:[%s1 + $0x6a0] sm:$0xff]
  %v260 = vld [vmem:[%s1 + $0x6a8] sm:$0xff]
  %v261 = vld [vmem:[%s1 + $0x6b0] sm:$0xff]
  %v262 = vld [vmem:[%s1 + $0x6b8] sm:$0xff]
  %v263 = vld [vmem:[%s1 + $0x6c0] sm:$0xff]
  %v264 = vld [vmem:[%s1 + $0x6c8] sm:$0xff]
  %v265 = vld [vmem:[%s1 + $0x6d0] sm:$0xff]
  %v266 = vld [vmem:[%s1 + $0x6d8] sm:$0xff]
  %v267 = vld [vmem:[%s1 + $0x6e0] sm:$0xff]
  %v268 = vld [vmem:[%s1 + $0x6e8] sm:$0xff]
  %v269 = vld [vmem:[%s1 + $0x6f0] sm:$0xff]
  %v270 = vld [vmem:[%s1 + $0x6f8] sm:$0xff]
  %v271 = vld [vmem:[%s1 + $0x700] sm:$0xff]
  %v272 = vld [vmem:[%s1 + $0x708] sm:$0xff]
  %v273 = vld [vmem:[%s1 + $0x710] sm:$0xff]
  %v274 = vld [vmem:[%s1 + $0x718] sm:$0xff]
  %v275 = vld [vmem:[%s1 + $0x720] sm:$0xff]
  %v276 = vld [vmem:[%s1 + $0x728] sm:$0xff]
  %v277 = vld [vmem:[%s1 + $0x730] sm:$0xff]
  %v278 = vld [vmem:[%s1 + $0x738] sm:$0xff]
  %v279 = vld [vmem:[%s1 + $0x740] sm:$0xff]
  %v280 = vld [vmem:[%s1 + $0x748] sm:$0xff]
  %v281 = vld [vmem:[%s1 + $0x750] sm:$0xff]
  %v282 = vld [vmem:[%s1 + $0x758] sm:$0xff]
  %v283 = vld [vmem:[%s1 + $0x760] sm:$0xff]
  %v284 = vld [vmem:[%s1 + $0x768] sm:$0xff]
  %v285 = vld [vmem:[%s1 + $0x770] sm:$0xff]
  %v286 = vld [vmem:[%s1 + $0x778] sm:$0xff]
  %v287 = vld [vmem:[%s1 + $0x780] sm:$0xff]
  %v288 = vld [vmem:[%s1 + $0x788] sm:$0xff]
  %v289 = vld [vmem:[%s1 + $0x790] sm:$0xff]
  %v290 = vld [vmem:[%s1 + $0x798] sm:$0xff]
  %v291 = vld [vmem:[%s1 + $0x7a0] sm:$0xff]
  %v292 = vld [vmem:[%s1 + $0x7a8] sm:$0xff]
  %v293 = vld [vmem:[%s1 + $0x7b0] sm:$0xff]
  %v294 = vld [vmem:[%s1 + $0x7b8] sm:$0xff]
  %v295 = vld [vmem:[%s1 + $0x7c0] sm:$0xff]
  %v296 = vld [vmem:[%s1 + $0x7c8] sm:$0xff]
  %v297 = vld [vmem:[%s1 + $0x7d0] sm:$0xff]
  %v298 = vld [vmem:[%s1 + $0x7d8] sm:$0xff]
  %v299 = vld [vmem:[%s1 + $0x7e0] sm:$0xff]
  %v300 = vld [vmem:[%s1 + $0x7e8] sm:$0xff]
  %v301 = vld [vmem:[%s1 + $0x7f0] sm:$0xff]
  %v302 = vld [vmem:[%s1 + $0x7f8] sm:$0xff]
  %v303 = vld [vmem:[%s1 + $0x800] sm:$0xff]
  %v304 = vld [vmem:[%s1 + $0x808] sm:$0xff]
  %v305 = vld [vmem:[%s1 + $0x810] sm:$0xff]
  %v306 = vld [vmem:[%s1 + $0x818] sm:$0xff]
  %v307 = vld [vmem:[%s1 + $0x820] sm:$0xff]
  %v308 = vld [vmem:[%s1 + $0x828] sm:$0xff]
  %v309 = vld [vmem:[%s1 + $0x830] sm:$0xff]
  %v310 = vld [vmem:[%s1 + $0x838] sm:$0xff]
  %v311 = vld [vmem:[%s1 + $0x840] sm:$0xff]
  %v312 = vld [vmem:[%s1 + $0x848] sm:$0xff]
  %v313 = vld [vmem:[%s1 + $0x850] sm:$0xff]
  %v314 = vld [vmem:[%s1 + $0x858] sm:$0xff]
  %v315 = vld [vmem:[%s1 + $0x860] sm:$0xff]
  %v316 = vld [vmem:[%s1 + $0x868] sm:$0xff]
  %v317 = vld [vmem:[%s1 + $0x870] sm:$0xff]
  %v318 = vld [vmem:[%s1 + $0x878] sm:$0xff]
  %v319 = vld [vmem:[%s1 + $0x880] sm:$0xff]
  %v320 = vld [vmem:[%s1 + $0x888] sm:$0xff]
  %v321 = vld [vmem:[%s1 + $0x890] sm:$0xff]
  %v322 = vld [vmem:[%s1 + $0x898] sm:$0xff]
  %v323 = vld [vmem:[%s1 + $0x8a0] sm:$0xff]
  %v324 = vld [vmem:[%s1 + $0x8a8] sm:$0xff]
  %v325 = vld [vmem:[%s1 + $0x8b0] sm:$0xff]
  %v326 = vld [vmem:[%s1 + $0x8b8] sm:$0xff]
  %v327 = vld [vmem:[%s1 + $0x8c0] sm:$0xff]
  %v328 = vld [vmem:[%s1 + $0x8c8] sm:$0xff]
  %v329 = vld [vmem:[%s1 + $0x8d0] sm:$0xff]
  %v330 = vld [vmem:[%s1 + $0x8d8] sm:$0xff]
  %v331 = vld [vmem:[%s1 + $0x8e0] sm:$0xff]
  %v332 = vld [vmem:[%s1 + $0x8e8] sm:$0xff]
  %v333 = vld [vmem:[%s1 + $0x8f0] sm:$0xff]
  %v334 = vld [vmem:[%s1 + $0x8f8] sm:$0xff]
  %v335 = vld [vmem:[%s1 + $0x900] sm:$0xff]
  %v336 = vld [vmem:[%s1 + $0x908] sm:$0xff]
  %v337 = vld [vmem:[%s1 + $0x910] sm:$0xff]
  %v338 = vld [vmem:[%s1 + $0x918] sm:$0xff]
  %v339 = vld [vmem:[%s1 + $0x920] sm:$0xff]
  %v340 = vld [vmem:[%s1 + $0x928] sm:$0xff]
  %v341 = vld [vmem:[%s1 + $0x930] sm:$0xff]
  %v342 = vld [vmem:[%s1 + $0x938] sm:$0xff]
  %v343 = vld [vmem:[%s1 + $0x940] sm:$0xff]
  %v344 = vld [vmem:[%s1 + $0x948] sm:$0xff]
  %v345 = vld [vmem:[%s1 + $0x950] sm:$0xff]
  %v346 = vld [vmem:[%s1 + $0x958] sm:$0xff]
  %v347 = vld [vmem:[%s1 + $0x960] sm:$0xff]
  %v348 = vld [vmem:[%s1 + $0x968] sm:$0xff]
  %v349 = vld [vmem:[%s1 + $0x970] sm:$0xff]
  %v350 = vld [vmem:[%s1 + $0x978] sm:$0xff]
  %v351 = vld [vmem:[%s1 + $0x980] sm:$0xff]
  %v352 = vld [vmem:[%s1 + $0x988] sm:$0xff]
  %v353 = vld [vmem:[%s1 + $0x990] sm:$0xff]
  %v354 = vld [vmem:[%s1 + $0x998] sm:$0xff]
  %v355 = vld [vmem:[%s1 + $0x9a0] sm:$0xff]
  %v356 = vld [vmem:[%s1 + $0x9a8] sm:$0xff]
  %v357 = vld [vmem:[%s1 + $0x9b0] sm:$0xff]
  %v358 = vld [vmem:[%s1 + $0x9b8] sm:$0xff]
  %v359 = vld [vmem:[%s1 + $0x9c0] sm:$0xff]
  %v360 = vld [vmem:[%s1 + $0x9c8] sm:$0xff]
  %v361 = vld [vmem:[%s1 + $0x9d0] sm:$0xff]
  %v362 = vld [vmem:[%s1 + $0x9d8] sm:$0xff]
  %v363 = vld [vmem:[%s1 + $0x9e0] sm:$0xff]
  %v364 = vld [vmem:[%s1 + $0x9e8] sm:$0xff]
  %v365 = vld [vmem:[%s1 + $0x9f0] sm:$0xff]
  %v366 = vld [vmem:[%s1 + $0x9f8] sm:$0xff]
  %v367 = vld [vmem:[%s1 + $0xa00] sm:$0xff]
  %v368 = vld [vmem:[%s1 + $0xa08] sm:$0xff]
  %v369 = vld [vmem:[%s1 + $0xa10] sm:$0xff]
  %v370 = vld [vmem:[%s1 + $0xa18] sm:$0xff]
  %v371 = vld [vmem:[%s1 + $0xa20] sm:$0xff]
  %v372 = vld [vmem:[%s1 + $0xa28] sm:$0xff]
  %v373 = vld [vmem:[%s1 + $0xa30] sm:$0xff]
  %v374 = vld [vmem:[%s1 + $0xa38] sm:$0xff]
  %v375 = vld [vmem:[%s1 + $0xa40] sm:$0xff]
  %v376 = vld [vmem:[%s1 + $0xa48] sm:$0xff]
  %v377 = vld [vmem:[%s1 + $0xa50] sm:$0xff]
  %v378 = vld [vmem:[%s1 + $0xa58] sm:$0xff]
  %v379 = vld [vmem:[%s1 + $0xa60] sm:$0xff]
  %v380 = vld [vmem:[%s1 + $0xa68] sm:$0xff]
  %v381 = vld [vmem:[%s1 + $0xa70] sm:$0xff]
  %v382 = vld [vmem:[%s1 + $0xa78] sm:$0xff]
  %v383 = vld [vmem:[%s1 + $0xa80] sm:$0xff]
  %v384 = vld [vmem:[%s1 + $0xa88] sm:$0xff]
  %v385 = vld [vmem:[%s1 + $0xa90] sm:$0xff]
  %v386 = vld [vmem:[%s1 + $0xa98] sm:$0xff]
  %v387 = vld [vmem:[%s1 + $0xaa0] sm:$0xff]
  %v388 = vld [vmem:[%s1 + $0xaa8] sm:$0xff]
  %v389 = vld [vmem:[%s1 + $0xab0] sm:$0xff]
  %v390 = vld [vmem:[%s1 + $0xab8] sm:$0xff]
  %v391 = vld [vmem:[%s1 + $0xac0] sm:$0xff]
  %v392 = vld [vmem:[%s1 + $0xac8] sm:$0xff]
  %v393 = vld [vmem:[%s1 + $0xad0] sm:$0xff]
  %v394 = vld [vmem:[%s1 + $0xad8] sm:$0xff]
  %v395 = vld [vmem:[%s1 + $0xae0] sm:$0xff]
  %v396 = vld [vmem:[%s1 + $0xae8] sm:$0xff]
  %v397 = vld [vmem:[%s1 + $0xaf0] sm:$0xff]
  %v398 = vld [vmem:[%s1 + $0xaf8] sm:$0xff]
  %v399 = vld [vmem:[%s1 + $0xb00] sm:$0xff]
  %v400 = vld [vmem:[%s1 + $0xb08] sm:$0xff]
  %v401 = vld [vmem:[%s1 + $0xb10] sm:$0xff]
  %v402 = vld [vmem:[%s1 + $0xb18] sm:$0xff]
  %v403 = vld [vmem:[%s1 + $0xb20] sm:$0xff]
  %v404 = vld [vmem:[%s1 + $0xb28] sm:$0xff]
  %v405 = vld [vmem:[%s1 + $0xb30] sm:$0xff]
  %v406 = vld [vmem:[%s1 + $0xb38] sm:$0xff]
  %v407 = vld [vmem:[%s1 + $0xb40] sm:$0xff]
  %v408 = vld [vmem:[%s1 + $0xb48] sm:$0xff]
  %v409 = vld [vmem:[%s1 + $0xb50] sm:$0xff]
  %v410 = vld [vmem:[%s1 + $0xb58] sm:$0xff]
  %v411 = vld [vmem:[%s1 + $0xb60] sm:$0xff]
  %v412 = vld [vmem:[%s1 + $0xb68] sm:$0xff]
  %v413 = vld [vmem:[%s1 + $0xb70] sm:$0xff]
  %v414 = vld [vmem:[%s1 + $0xb78] sm:$0xff]
  %v415 = vld [vmem:[%s1 + $0xb80] sm:$0xff]
  %v416 = vld [vmem:[%s1 + $0xb88] sm:$0xff]
  %v417 = vld [vmem:[%s1 + $0xb90] sm:$0xff]
  %v418 = vld [vmem:[%s1 + $0xb98] sm:$0xff]
  %v419 = vld [vmem:[%s1 + $0xba0] sm:$0xff]
  %v420 = vld [vmem:[%s1 + $0xba8] sm:$0xff]
  %v421 = vld [vmem:[%s1 + $0xbb0] sm:$0xff]
  %v422 = vld [vmem:[%s1 + $0xbb8] sm:$0xff]
  %v423 = vld [vmem:[%s1 + $0xbc0] sm:$0xff]
  %v424 = vld [vmem:[%s1 + $0xbc8] sm:$0xff]
  %v425 = vld [vmem:[%s1 + $0xbd0] sm:$0xff]
  %v426 = vld [vmem:[%s1 + $0xbd8] sm:$0xff]
  %v427 = vld [vmem:[%s1 + $0xbe0] sm:$0xff]
  %v428 = vld [vmem:[%s1 + $0xbe8] sm:$0xff]
  %v429 = vld [vmem:[%s1 + $0xbf0] sm:$0xff]
  %v430 = vld [vmem:[%s1 + $0xbf8] sm:$0xff]
  %v431 = vld [vmem:[%s1 + $0xc00] sm:$0xff]
  %v432 = vld [vmem:[%s1 + $0xc08] sm:$0xff]
  %v433 = vld [vmem:[%s1 + $0xc10] sm:$0xff]
  %v434 = vld [vmem:[%s1 + $0xc18] sm:$0xff]
  %v435 = vld [vmem:[%s1 + $0xc20] sm:$0xff]
  %v436 = vld [vmem:[%s1 + $0xc28] sm:$0xff]
  %v437 = vld [vmem:[%s1 + $0xc30] sm:$0xff]
  %v438 = vld [vmem:[%s1 + $0xc38] sm:$0xff]
  %v439 = vld [vmem:[%s1 + $0xc40] sm:$0xff]
  %v440 = vld [vmem:[%s1 + $0xc48] sm:$0xff]
  %v441 = vld [vmem:[%s1 + $0xc50] sm:$0xff]
  %v442 = vld [vmem:[%s1 + $0xc58] sm:$0xff]
  %v443 = vld [vmem:[%s1 + $0xc60] sm:$0xff]
  %v444 = vld [vmem:[%s1 + $0xc68] sm:$0xff]
  %v445 = vld [vmem:[%s1 + $0xc70] sm:$0xff]
  %v446 = vld [vmem:[%s1 + $0xc78] sm:$0xff]
  %v447 = vld [vmem:[%s2] sm:$0x3]
  %v449 = vlaneseq
  %v450 = vshrl.u32 %v449, 7
  %v451 = vsub.s32 0, %v450
  %v452 = vrot.slane %v447, %v451
  %v453 = vlaneseq
  %v454 = vshrl.u32 %v453, 7
  %v455 = vsub.s32 1, %v454
  %v456 = vrot.slane %v447, %v455
  %v485 = vunpack.c.l.b16 %v21
  %v486 = vunpack.c.h.b16 %v21
  %v487 = vunpack.c.l.b16 %v22
  %v488 = vunpack.c.h.b16 %v22
  %v489 = vunpack.c.l.b16 %v23
  %v490 = vunpack.c.h.b16 %v23
  %v491 = vunpack.c.l.b16 %v24
  %v492 = vunpack.c.h.b16 %v24
  %v493 = vunpack.c.l.b16 %v25
  %v494 = vunpack.c.h.b16 %v25
  %v495 = vunpack.c.l.b16 %v26
  %v496 = vunpack.c.h.b16 %v26
  %v497 = vunpack.c.l.b16 %v27
  %v498 = vunpack.c.h.b16 %v27
  %v499 = vunpack.c.l.b16 %v28
  %v500 = vunpack.c.h.b16 %v28
  %v501 = vunpack.c.l.b16 %v29
  %v502 = vunpack.c.h.b16 %v29
  %v503 = vunpack.c.l.b16 %v30
  %v504 = vunpack.c.h.b16 %v30
  %v505 = vunpack.c.l.b16 %v31
  %v506 = vunpack.c.h.b16 %v31
  %v507 = vunpack.c.l.b16 %v32
  %v508 = vunpack.c.h.b16 %v32
  %v509 = vunpack.c.l.b16 %v33
  %v510 = vunpack.c.l.b16 %v34
  %v511 = vunpack.c.h.b16 %v34
  %v512 = vunpack.c.l.b16 %v35
  %v513 = vunpack.c.h.b16 %v35
  %v514 = vunpack.c.l.b16 %v36
  %v515 = vunpack.c.h.b16 %v36
  %v516 = vunpack.c.l.b16 %v37
  %v517 = vunpack.c.h.b16 %v37
  %v518 = vunpack.c.l.b16 %v38
  %v519 = vunpack.c.h.b16 %v38
  %v520 = vunpack.c.l.b16 %v39
  %v521 = vunpack.c.h.b16 %v39
  %v522 = vunpack.c.l.b16 %v40
  %v523 = vunpack.c.h.b16 %v40
  %v524 = vunpack.c.l.b16 %v41
  %v525 = vunpack.c.h.b16 %v41
  %v526 = vunpack.c.l.b16 %v42
  %v527 = vunpack.c.h.b16 %v42
  %v528 = vunpack.c.l.b16 %v43
  %v529 = vunpack.c.h.b16 %v43
  %v530 = vunpack.c.l.b16 %v44
  %v531 = vunpack.c.h.b16 %v44
  %v532 = vunpack.c.l.b16 %v45
  %v533 = vunpack.c.h.b16 %v45
  %v534 = vunpack.c.l.b16 %v46
  %v535 = vpack.c.b16 %v510, %v485
  %v536 = vpack.c.b16 %v511, %v486
  %v537 = vpack.c.b16 %v512, %v487
  %v538 = vpack.c.b16 %v513, %v488
  %v539 = vpack.c.b16 %v514, %v489
  %v540 = vpack.c.b16 %v515, %v490
  %v541 = vpack.c.b16 %v516, %v491
  %v542 = vpack.c.b16 %v517, %v492
  %v543 = vpack.c.b16 %v518, %v493
  %v544 = vpack.c.b16 %v519, %v494
  %v545 = vpack.c.b16 %v520, %v495
  %v546 = vpack.c.b16 %v521, %v496
  %v547 = vpack.c.b16 %v522, %v497
  %v548 = vpack.c.b16 %v523, %v498
  %v549 = vpack.c.b16 %v524, %v499
  %v550 = vpack.c.b16 %v525, %v500
  %v551 = vpack.c.b16 %v526, %v501
  %v552 = vpack.c.b16 %v527, %v502
  %v553 = vpack.c.b16 %v528, %v503
  %v554 = vpack.c.b16 %v529, %v504
  %v555 = vpack.c.b16 %v530, %v505
  %v556 = vpack.c.b16 %v531, %v506
  %v557 = vpack.c.b16 %v532, %v507
  %v558 = vpack.c.b16 %v533, %v508
  %v559 = vpack.c.b16 %v534, %v509
  %v985 = vunpack.c.l.b16 %v47
  %v986 = vunpack.c.h.b16 %v47
  %v987 = vunpack.c.l.b16 %v48
  %v988 = vunpack.c.h.b16 %v48
  %v989 = vunpack.c.l.b16 %v49
  %v990 = vunpack.c.h.b16 %v49
  %v991 = vunpack.c.l.b16 %v50
  %v992 = vunpack.c.h.b16 %v50
  %v993 = vunpack.c.l.b16 %v51
  %v994 = vunpack.c.h.b16 %v51
  %v995 = vunpack.c.l.b16 %v52
  %v996 = vunpack.c.h.b16 %v52
  %v997 = vunpack.c.l.b16 %v53
  %v998 = vunpack.c.h.b16 %v53
  %v999 = vunpack.c.l.b16 %v54
  %v1000 = vunpack.c.h.b16 %v54
  %v1001 = vunpack.c.l.b16 %v55
  %v1002 = vunpack.c.h.b16 %v55
  %v1003 = vunpack.c.l.b16 %v56
  %v1004 = vunpack.c.h.b16 %v56
  %v1005 = vunpack.c.l.b16 %v57
  %v1006 = vunpack.c.h.b16 %v57
  %v1007 = vunpack.c.l.b16 %v58
  %v1008 = vunpack.c.h.b16 %v58
  %v1009 = vunpack.c.l.b16 %v59
  %v1010 = vunpack.c.h.b16 %v59
  %v1011 = vunpack.c.l.b16 %v60
  %v1012 = vunpack.c.h.b16 %v60
  %v1013 = vunpack.c.l.b16 %v61
  %v1014 = vunpack.c.h.b16 %v61
  %v1015 = vunpack.c.l.b16 %v62
  %v1016 = vunpack.c.h.b16 %v62
  %v1017 = vunpack.c.l.b16 %v63
  %v1018 = vunpack.c.h.b16 %v63
  %v1019 = vunpack.c.l.b16 %v64
  %v1020 = vunpack.c.h.b16 %v64
  %v1021 = vunpack.c.l.b16 %v65
  %v1022 = vunpack.c.h.b16 %v65
  %v1023 = vunpack.c.l.b16 %v66
  %v1024 = vunpack.c.h.b16 %v66
  %v1025 = vunpack.c.l.b16 %v67
  %v1026 = vunpack.c.h.b16 %v67
  %v1027 = vunpack.c.l.b16 %v68
  %v1028 = vunpack.c.h.b16 %v68
  %v1029 = vunpack.c.l.b16 %v69
  %v1030 = vunpack.c.h.b16 %v69
  %v1031 = vunpack.c.l.b16 %v70
  %v1032 = vunpack.c.h.b16 %v70
  %v1033 = vunpack.c.l.b16 %v71
  %v1034 = vunpack.c.h.b16 %v71
  %v1035 = vunpack.c.l.b16 %v72
  %v1036 = vunpack.c.h.b16 %v72
  %v1037 = vunpack.c.l.b16 %v73
  %v1038 = vunpack.c.h.b16 %v73
  %v1039 = vunpack.c.l.b16 %v74
  %v1040 = vunpack.c.h.b16 %v74
  %v1041 = vunpack.c.l.b16 %v75
  %v1042 = vunpack.c.h.b16 %v75
  %v1043 = vunpack.c.l.b16 %v76
  %v1044 = vunpack.c.h.b16 %v76
  %v1045 = vunpack.c.l.b16 %v77
  %v1046 = vunpack.c.h.b16 %v77
  %v1047 = vunpack.c.l.b16 %v78
  %v1048 = vunpack.c.h.b16 %v78
  %v1049 = vunpack.c.l.b16 %v79
  %v1050 = vunpack.c.h.b16 %v79
  %v1051 = vunpack.c.l.b16 %v80
  %v1052 = vunpack.c.h.b16 %v80
  %v1053 = vunpack.c.l.b16 %v81
  %v1054 = vunpack.c.h.b16 %v81
  %v1055 = vunpack.c.l.b16 %v82
  %v1056 = vunpack.c.h.b16 %v82
  %v1057 = vunpack.c.l.b16 %v83
  %v1058 = vunpack.c.h.b16 %v83
  %v1059 = vunpack.c.l.b16 %v84
  %v1060 = vunpack.c.h.b16 %v84
  %v1061 = vunpack.c.l.b16 %v85
  %v1062 = vunpack.c.h.b16 %v85
  %v1063 = vunpack.c.l.b16 %v86
  %v1064 = vunpack.c.h.b16 %v86
  %v1065 = vunpack.c.l.b16 %v87
  %v1066 = vunpack.c.h.b16 %v87
  %v1067 = vunpack.c.l.b16 %v88
  %v1068 = vunpack.c.h.b16 %v88
  %v1069 = vunpack.c.l.b16 %v89
  %v1070 = vunpack.c.h.b16 %v89
  %v1071 = vunpack.c.l.b16 %v90
  %v1072 = vunpack.c.h.b16 %v90
  %v1073 = vunpack.c.l.b16 %v91
  %v1074 = vunpack.c.h.b16 %v91
  %v1075 = vunpack.c.l.b16 %v92
  %v1076 = vunpack.c.h.b16 %v92
  %v1077 = vunpack.c.l.b16 %v93
  %v1078 = vunpack.c.h.b16 %v93
  %v1079 = vunpack.c.l.b16 %v94
  %v1080 = vunpack.c.h.b16 %v94
  %v1081 = vunpack.c.l.b16 %v95
  %v1082 = vunpack.c.h.b16 %v95
  %v1083 = vunpack.c.l.b16 %v96
  %v1084 = vunpack.c.h.b16 %v96
  %v1085 = vunpack.c.l.b16 %v97
  %v1086 = vunpack.c.h.b16 %v97
  %v1087 = vunpack.c.l.b16 %v98
  %v1088 = vunpack.c.h.b16 %v98
  %v1089 = vunpack.c.l.b16 %v99
  %v1090 = vunpack.c.h.b16 %v99
  %v1091 = vunpack.c.l.b16 %v100
  %v1092 = vunpack.c.h.b16 %v100
  %v1093 = vunpack.c.l.b16 %v101
  %v1094 = vunpack.c.h.b16 %v101
  %v1095 = vunpack.c.l.b16 %v102
  %v1096 = vunpack.c.h.b16 %v102
  %v1097 = vunpack.c.l.b16 %v103
  %v1098 = vunpack.c.h.b16 %v103
  %v1099 = vunpack.c.l.b16 %v104
  %v1100 = vunpack.c.h.b16 %v104
  %v1101 = vunpack.c.l.b16 %v105
  %v1102 = vunpack.c.h.b16 %v105
  %v1103 = vunpack.c.l.b16 %v106
  %v1104 = vunpack.c.h.b16 %v106
  %v1105 = vunpack.c.l.b16 %v107
  %v1106 = vunpack.c.h.b16 %v107
  %v1107 = vunpack.c.l.b16 %v108
  %v1108 = vunpack.c.h.b16 %v108
  %v1109 = vunpack.c.l.b16 %v109
  %v1110 = vunpack.c.h.b16 %v109
  %v1111 = vunpack.c.l.b16 %v110
  %v1112 = vunpack.c.h.b16 %v110
  %v1113 = vunpack.c.l.b16 %v111
  %v1114 = vunpack.c.h.b16 %v111
  %v1115 = vunpack.c.l.b16 %v112
  %v1116 = vunpack.c.h.b16 %v112
  %v1117 = vunpack.c.l.b16 %v113
  %v1118 = vunpack.c.h.b16 %v113
  %v1119 = vunpack.c.l.b16 %v114
  %v1120 = vunpack.c.h.b16 %v114
  %v1121 = vunpack.c.l.b16 %v115
  %v1122 = vunpack.c.h.b16 %v115
  %v1123 = vunpack.c.l.b16 %v116
  %v1124 = vunpack.c.h.b16 %v116
  %v1125 = vunpack.c.l.b16 %v117
  %v1126 = vunpack.c.h.b16 %v117
  %v1127 = vunpack.c.l.b16 %v118
  %v1128 = vunpack.c.h.b16 %v118
  %v1129 = vunpack.c.l.b16 %v119
  %v1130 = vunpack.c.h.b16 %v119
  %v1131 = vunpack.c.l.b16 %v120
  %v1132 = vunpack.c.h.b16 %v120
  %v1133 = vunpack.c.l.b16 %v121
  %v1134 = vunpack.c.h.b16 %v121
  %v1135 = vunpack.c.l.b16 %v122
  %v1136 = vunpack.c.h.b16 %v122
  %v1137 = vunpack.c.l.b16 %v123
  %v1138 = vunpack.c.h.b16 %v123
  %v1139 = vunpack.c.l.b16 %v124
  %v1140 = vunpack.c.h.b16 %v124
  %v1141 = vunpack.c.l.b16 %v125
  %v1142 = vunpack.c.h.b16 %v125
  %v1143 = vunpack.c.l.b16 %v126
  %v1144 = vunpack.c.h.b16 %v126
  %v1145 = vunpack.c.l.b16 %v127
  %v1146 = vunpack.c.h.b16 %v127
  %v1147 = vunpack.c.l.b16 %v128
  %v1148 = vunpack.c.h.b16 %v128
  %v1149 = vunpack.c.l.b16 %v129
  %v1150 = vunpack.c.h.b16 %v129
  %v1151 = vunpack.c.l.b16 %v130
  %v1152 = vunpack.c.h.b16 %v130
  %v1153 = vunpack.c.l.b16 %v131
  %v1154 = vunpack.c.h.b16 %v131
  %v1155 = vunpack.c.l.b16 %v132
  %v1156 = vunpack.c.h.b16 %v132
  %v1157 = vunpack.c.l.b16 %v133
  %v1158 = vunpack.c.h.b16 %v133
  %v1159 = vunpack.c.l.b16 %v134
  %v1160 = vunpack.c.h.b16 %v134
  %v1161 = vunpack.c.l.b16 %v135
  %v1162 = vunpack.c.h.b16 %v135
  %v1163 = vunpack.c.l.b16 %v136
  %v1164 = vunpack.c.h.b16 %v136
  %v1165 = vunpack.c.l.b16 %v137
  %v1166 = vunpack.c.h.b16 %v137
  %v1167 = vunpack.c.l.b16 %v138
  %v1168 = vunpack.c.h.b16 %v138
  %v1169 = vunpack.c.l.b16 %v139
  %v1170 = vunpack.c.h.b16 %v139
  %v1171 = vunpack.c.l.b16 %v140
  %v1172 = vunpack.c.h.b16 %v140
  %v1173 = vunpack.c.l.b16 %v141
  %v1174 = vunpack.c.h.b16 %v141
  %v1175 = vunpack.c.l.b16 %v142
  %v1176 = vunpack.c.h.b16 %v142
  %v1177 = vunpack.c.l.b16 %v143
  %v1178 = vunpack.c.h.b16 %v143
  %v1179 = vunpack.c.l.b16 %v144
  %v1180 = vunpack.c.h.b16 %v144
  %v1181 = vunpack.c.l.b16 %v145
  %v1182 = vunpack.c.h.b16 %v145
  %v1183 = vunpack.c.l.b16 %v146
  %v1184 = vunpack.c.h.b16 %v146
  %v1185 = vunpack.c.l.b16 %v147
  %v1186 = vunpack.c.h.b16 %v147
  %v1187 = vunpack.c.l.b16 %v148
  %v1188 = vunpack.c.h.b16 %v148
  %v1189 = vunpack.c.l.b16 %v149
  %v1190 = vunpack.c.h.b16 %v149
  %v1191 = vunpack.c.l.b16 %v150
  %v1192 = vunpack.c.h.b16 %v150
  %v1193 = vunpack.c.l.b16 %v151
  %v1194 = vunpack.c.h.b16 %v151
  %v1195 = vunpack.c.l.b16 %v152
  %v1196 = vunpack.c.h.b16 %v152
  %v1197 = vunpack.c.l.b16 %v153
  %v1198 = vunpack.c.h.b16 %v153
  %v1199 = vunpack.c.l.b16 %v154
  %v1200 = vunpack.c.h.b16 %v154
  %v1201 = vunpack.c.l.b16 %v155
  %v1202 = vunpack.c.h.b16 %v155
  %v1203 = vunpack.c.l.b16 %v156
  %v1204 = vunpack.c.h.b16 %v156
  %v1205 = vunpack.c.l.b16 %v157
  %v1206 = vunpack.c.h.b16 %v157
  %v1207 = vunpack.c.l.b16 %v158
  %v1208 = vunpack.c.h.b16 %v158
  %v1209 = vunpack.c.l.b16 %v159
  %v1210 = vunpack.c.h.b16 %v159
  %v1211 = vunpack.c.l.b16 %v160
  %v1212 = vunpack.c.h.b16 %v160
  %v1213 = vunpack.c.l.b16 %v161
  %v1214 = vunpack.c.h.b16 %v161
  %v1215 = vunpack.c.l.b16 %v162
  %v1216 = vunpack.c.h.b16 %v162
  %v1217 = vunpack.c.l.b16 %v163
  %v1218 = vunpack.c.h.b16 %v163
  %v1219 = vunpack.c.l.b16 %v164
  %v1220 = vunpack.c.h.b16 %v164
  %v1221 = vunpack.c.l.b16 %v165
  %v1222 = vunpack.c.h.b16 %v165
  %v1223 = vunpack.c.l.b16 %v166
  %v1224 = vunpack.c.h.b16 %v166
  %v1225 = vunpack.c.l.b16 %v167
  %v1226 = vunpack.c.h.b16 %v167
  %v1227 = vunpack.c.l.b16 %v168
  %v1228 = vunpack.c.h.b16 %v168
  %v1229 = vunpack.c.l.b16 %v169
  %v1230 = vunpack.c.h.b16 %v169
  %v1231 = vunpack.c.l.b16 %v170
  %v1232 = vunpack.c.h.b16 %v170
  %v1233 = vunpack.c.l.b16 %v171
  %v1234 = vunpack.c.h.b16 %v171
  %v1235 = vunpack.c.l.b16 %v172
  %v1236 = vunpack.c.h.b16 %v172
  %v1237 = vunpack.c.l.b16 %v173
  %v1238 = vunpack.c.h.b16 %v173
  %v1239 = vunpack.c.l.b16 %v174
  %v1240 = vunpack.c.h.b16 %v174
  %v1241 = vunpack.c.l.b16 %v175
  %v1242 = vunpack.c.h.b16 %v175
  %v1243 = vunpack.c.l.b16 %v176
  %v1244 = vunpack.c.h.b16 %v176
  %v1245 = vunpack.c.l.b16 %v177
  %v1246 = vunpack.c.h.b16 %v177
  %v1247 = vunpack.c.l.b16 %v178
  %v1248 = vunpack.c.h.b16 %v178
  %v1249 = vunpack.c.l.b16 %v179
  %v1250 = vunpack.c.h.b16 %v179
  %v1251 = vunpack.c.l.b16 %v180
  %v1252 = vunpack.c.h.b16 %v180
  %v1253 = vunpack.c.l.b16 %v181
  %v1254 = vunpack.c.h.b16 %v181
  %v1255 = vunpack.c.l.b16 %v182
  %v1256 = vunpack.c.h.b16 %v182
  %v1257 = vunpack.c.l.b16 %v183
  %v1258 = vunpack.c.h.b16 %v183
  %v1259 = vunpack.c.l.b16 %v184
  %v1260 = vunpack.c.h.b16 %v184
  %v1261 = vunpack.c.l.b16 %v185
  %v1262 = vunpack.c.h.b16 %v185
  %v1263 = vunpack.c.l.b16 %v186
  %v1264 = vunpack.c.h.b16 %v186
  %v1265 = vunpack.c.l.b16 %v187
  %v1266 = vunpack.c.h.b16 %v187
  %v1267 = vunpack.c.l.b16 %v188
  %v1268 = vunpack.c.h.b16 %v188
  %v1269 = vunpack.c.l.b16 %v189
  %v1270 = vunpack.c.h.b16 %v189
  %v1271 = vunpack.c.l.b16 %v190
  %v1272 = vunpack.c.h.b16 %v190
  %v1273 = vunpack.c.l.b16 %v191
  %v1274 = vunpack.c.h.b16 %v191
  %v1275 = vunpack.c.l.b16 %v192
  %v1276 = vunpack.c.h.b16 %v192
  %v1277 = vunpack.c.l.b16 %v193
  %v1278 = vunpack.c.h.b16 %v193
  %v1279 = vunpack.c.l.b16 %v194
  %v1280 = vunpack.c.h.b16 %v194
  %v1281 = vunpack.c.l.b16 %v195
  %v1282 = vunpack.c.h.b16 %v195
  %v1283 = vunpack.c.l.b16 %v196
  %v1284 = vunpack.c.h.b16 %v196
  %v1285 = vunpack.c.l.b16 %v197
  %v1286 = vunpack.c.h.b16 %v197
  %v1287 = vunpack.c.l.b16 %v198
  %v1288 = vunpack.c.h.b16 %v198
  %v1289 = vunpack.c.l.b16 %v199
  %v1290 = vunpack.c.h.b16 %v199
  %v1291 = vunpack.c.l.b16 %v200
  %v1292 = vunpack.c.h.b16 %v200
  %v1293 = vunpack.c.l.b16 %v201
  %v1294 = vunpack.c.h.b16 %v201
  %v1295 = vunpack.c.l.b16 %v202
  %v1296 = vunpack.c.h.b16 %v202
  %v1297 = vunpack.c.l.b16 %v203
  %v1298 = vunpack.c.h.b16 %v203
  %v1299 = vunpack.c.l.b16 %v204
  %v1300 = vunpack.c.h.b16 %v204
  %v1301 = vunpack.c.l.b16 %v205
  %v1302 = vunpack.c.h.b16 %v205
  %v1303 = vunpack.c.l.b16 %v206
  %v1304 = vunpack.c.h.b16 %v206
  %v1305 = vunpack.c.l.b16 %v207
  %v1306 = vunpack.c.h.b16 %v207
  %v1307 = vunpack.c.l.b16 %v208
  %v1308 = vunpack.c.h.b16 %v208
  %v1309 = vunpack.c.l.b16 %v209
  %v1310 = vunpack.c.h.b16 %v209
  %v1311 = vunpack.c.l.b16 %v210
  %v1312 = vunpack.c.h.b16 %v210
  %v1313 = vunpack.c.l.b16 %v211
  %v1314 = vunpack.c.h.b16 %v211
  %v1315 = vunpack.c.l.b16 %v212
  %v1316 = vunpack.c.h.b16 %v212
  %v1317 = vunpack.c.l.b16 %v213
  %v1318 = vunpack.c.h.b16 %v213
  %v1319 = vunpack.c.l.b16 %v214
  %v1320 = vunpack.c.h.b16 %v214
  %v1321 = vunpack.c.l.b16 %v215
  %v1322 = vunpack.c.h.b16 %v215
  %v1323 = vunpack.c.l.b16 %v216
  %v1324 = vunpack.c.h.b16 %v216
  %v1325 = vunpack.c.l.b16 %v217
  %v1326 = vunpack.c.h.b16 %v217
  %v1327 = vunpack.c.l.b16 %v218
  %v1328 = vunpack.c.h.b16 %v218
  %v1329 = vunpack.c.l.b16 %v219
  %v1330 = vunpack.c.h.b16 %v219
  %v1331 = vunpack.c.l.b16 %v220
  %v1332 = vunpack.c.h.b16 %v220
  %v1333 = vunpack.c.l.b16 %v221
  %v1334 = vunpack.c.h.b16 %v221
  %v1335 = vunpack.c.l.b16 %v222
  %v1336 = vunpack.c.h.b16 %v222
  %v1337 = vunpack.c.l.b16 %v223
  %v1338 = vunpack.c.h.b16 %v223
  %v1339 = vunpack.c.l.b16 %v224
  %v1340 = vunpack.c.h.b16 %v224
  %v1341 = vunpack.c.l.b16 %v225
  %v1342 = vunpack.c.h.b16 %v225
  %v1343 = vunpack.c.l.b16 %v226
  %v1344 = vunpack.c.h.b16 %v226
  %v1345 = vunpack.c.l.b16 %v227
  %v1346 = vunpack.c.h.b16 %v227
  %v1347 = vunpack.c.l.b16 %v228
  %v1348 = vunpack.c.h.b16 %v228
  %v1349 = vunpack.c.l.b16 %v229
  %v1350 = vunpack.c.h.b16 %v229
  %v1351 = vunpack.c.l.b16 %v230
  %v1352 = vunpack.c.h.b16 %v230
  %v1353 = vunpack.c.l.b16 %v231
  %v1354 = vunpack.c.h.b16 %v231
  %v1355 = vunpack.c.l.b16 %v232
  %v1356 = vunpack.c.h.b16 %v232
  %v1357 = vunpack.c.l.b16 %v233
  %v1358 = vunpack.c.h.b16 %v233
  %v1359 = vunpack.c.l.b16 %v234
  %v1360 = vunpack.c.h.b16 %v234
  %v1361 = vunpack.c.l.b16 %v235
  %v1362 = vunpack.c.h.b16 %v235
  %v1363 = vunpack.c.l.b16 %v236
  %v1364 = vunpack.c.h.b16 %v236
  %v1365 = vunpack.c.l.b16 %v237
  %v1366 = vunpack.c.h.b16 %v237
  %v1367 = vunpack.c.l.b16 %v238
  %v1368 = vunpack.c.h.b16 %v238
  %v1369 = vunpack.c.l.b16 %v239
  %v1370 = vunpack.c.h.b16 %v239
  %v1371 = vunpack.c.l.b16 %v240
  %v1372 = vunpack.c.h.b16 %v240
  %v1373 = vunpack.c.l.b16 %v241
  %v1374 = vunpack.c.h.b16 %v241
  %v1375 = vunpack.c.l.b16 %v242
  %v1376 = vunpack.c.h.b16 %v242
  %v1377 = vunpack.c.l.b16 %v243
  %v1378 = vunpack.c.h.b16 %v243
  %v1379 = vunpack.c.l.b16 %v244
  %v1380 = vunpack.c.h.b16 %v244
  %v1381 = vunpack.c.l.b16 %v245
  %v1382 = vunpack.c.h.b16 %v245
  %v1383 = vunpack.c.l.b16 %v246
  %v1384 = vunpack.c.h.b16 %v246
  %v1385 = vunpack.c.l.b16 %v247
  %v1386 = vunpack.c.h.b16 %v247
  %v1387 = vunpack.c.l.b16 %v248
  %v1388 = vunpack.c.h.b16 %v248
  %v1389 = vunpack.c.l.b16 %v249
  %v1390 = vunpack.c.h.b16 %v249
  %v1391 = vunpack.c.l.b16 %v250
  %v1392 = vunpack.c.h.b16 %v250
  %v1393 = vunpack.c.l.b16 %v251
  %v1394 = vunpack.c.h.b16 %v251
  %v1395 = vunpack.c.l.b16 %v252
  %v1396 = vunpack.c.h.b16 %v252
  %v1397 = vunpack.c.l.b16 %v253
  %v1398 = vunpack.c.h.b16 %v253
  %v1399 = vunpack.c.l.b16 %v254
  %v1400 = vunpack.c.h.b16 %v254
  %v1401 = vunpack.c.l.b16 %v255
  %v1402 = vunpack.c.h.b16 %v255
  %v1403 = vunpack.c.l.b16 %v256
  %v1404 = vunpack.c.h.b16 %v256
  %v1405 = vunpack.c.l.b16 %v257
  %v1406 = vunpack.c.h.b16 %v257
  %v1407 = vunpack.c.l.b16 %v258
  %v1408 = vunpack.c.h.b16 %v258
  %v1409 = vunpack.c.l.b16 %v259
  %v1410 = vunpack.c.h.b16 %v259
  %v1411 = vunpack.c.l.b16 %v260
  %v1412 = vunpack.c.h.b16 %v260
  %v1413 = vunpack.c.l.b16 %v261
  %v1414 = vunpack.c.h.b16 %v261
  %v1415 = vunpack.c.l.b16 %v262
  %v1416 = vunpack.c.h.b16 %v262
  %v1417 = vunpack.c.l.b16 %v263
  %v1418 = vunpack.c.h.b16 %v263
  %v1419 = vunpack.c.l.b16 %v264
  %v1420 = vunpack.c.h.b16 %v264
  %v1421 = vunpack.c.l.b16 %v265
  %v1422 = vunpack.c.h.b16 %v265
  %v1423 = vunpack.c.l.b16 %v266
  %v1424 = vunpack.c.h.b16 %v266
  %v1425 = vunpack.c.l.b16 %v267
  %v1426 = vunpack.c.h.b16 %v267
  %v1427 = vunpack.c.l.b16 %v268
  %v1428 = vunpack.c.h.b16 %v268
  %v1429 = vunpack.c.l.b16 %v269
  %v1430 = vunpack.c.h.b16 %v269
  %v1431 = vunpack.c.l.b16 %v270
  %v1432 = vunpack.c.h.b16 %v270
  %v1433 = vunpack.c.l.b16 %v271
  %v1434 = vunpack.c.h.b16 %v271
  %v1435 = vunpack.c.l.b16 %v272
  %v1436 = vunpack.c.h.b16 %v272
  %v1437 = vunpack.c.l.b16 %v273
  %v1438 = vunpack.c.h.b16 %v273
  %v1439 = vunpack.c.l.b16 %v274
  %v1440 = vunpack.c.h.b16 %v274
  %v1441 = vunpack.c.l.b16 %v275
  %v1442 = vunpack.c.h.b16 %v275
  %v1443 = vunpack.c.l.b16 %v276
  %v1444 = vunpack.c.h.b16 %v276
  %v1445 = vunpack.c.l.b16 %v277
  %v1446 = vunpack.c.h.b16 %v277
  %v1447 = vunpack.c.l.b16 %v278
  %v1448 = vunpack.c.h.b16 %v278
  %v1449 = vunpack.c.l.b16 %v279
  %v1450 = vunpack.c.h.b16 %v279
  %v1451 = vunpack.c.l.b16 %v280
  %v1452 = vunpack.c.h.b16 %v280
  %v1453 = vunpack.c.l.b16 %v281
  %v1454 = vunpack.c.h.b16 %v281
  %v1455 = vunpack.c.l.b16 %v282
  %v1456 = vunpack.c.h.b16 %v282
  %v1457 = vunpack.c.l.b16 %v283
  %v1458 = vunpack.c.h.b16 %v283
  %v1459 = vunpack.c.l.b16 %v284
  %v1460 = vunpack.c.h.b16 %v284
  %v1461 = vunpack.c.l.b16 %v285
  %v1462 = vunpack.c.h.b16 %v285
  %v1463 = vunpack.c.l.b16 %v286
  %v1464 = vunpack.c.h.b16 %v286
  %v1465 = vunpack.c.l.b16 %v287
  %v1466 = vunpack.c.h.b16 %v287
  %v1467 = vunpack.c.l.b16 %v288
  %v1468 = vunpack.c.h.b16 %v288
  %v1469 = vunpack.c.l.b16 %v289
  %v1470 = vunpack.c.h.b16 %v289
  %v1471 = vunpack.c.l.b16 %v290
  %v1472 = vunpack.c.h.b16 %v290
  %v1473 = vunpack.c.l.b16 %v291
  %v1474 = vunpack.c.h.b16 %v291
  %v1475 = vunpack.c.l.b16 %v292
  %v1476 = vunpack.c.h.b16 %v292
  %v1477 = vunpack.c.l.b16 %v293
  %v1478 = vunpack.c.h.b16 %v293
  %v1479 = vunpack.c.l.b16 %v294
  %v1480 = vunpack.c.h.b16 %v294
  %v1481 = vunpack.c.l.b16 %v295
  %v1482 = vunpack.c.h.b16 %v295
  %v1483 = vunpack.c.l.b16 %v296
  %v1484 = vunpack.c.h.b16 %v296
  %v1485 = vunpack.c.l.b16 %v297
  %v1486 = vunpack.c.h.b16 %v297
  %v1487 = vunpack.c.l.b16 %v298
  %v1488 = vunpack.c.h.b16 %v298
  %v1489 = vunpack.c.l.b16 %v299
  %v1490 = vunpack.c.h.b16 %v299
  %v1491 = vunpack.c.l.b16 %v300
  %v1492 = vunpack.c.h.b16 %v300
  %v1493 = vunpack.c.l.b16 %v301
  %v1494 = vunpack.c.h.b16 %v301
  %v1495 = vunpack.c.l.b16 %v302
  %v1496 = vunpack.c.h.b16 %v302
  %v1497 = vunpack.c.l.b16 %v303
  %v1498 = vunpack.c.h.b16 %v303
  %v1499 = vunpack.c.l.b16 %v304
  %v1500 = vunpack.c.h.b16 %v304
  %v1501 = vunpack.c.l.b16 %v305
  %v1502 = vunpack.c.h.b16 %v305
  %v1503 = vunpack.c.l.b16 %v306
  %v1504 = vunpack.c.h.b16 %v306
  %v1505 = vunpack.c.l.b16 %v307
  %v1506 = vunpack.c.h.b16 %v307
  %v1507 = vunpack.c.l.b16 %v308
  %v1508 = vunpack.c.h.b16 %v308
  %v1509 = vunpack.c.l.b16 %v309
  %v1510 = vunpack.c.h.b16 %v309
  %v1511 = vunpack.c.l.b16 %v310
  %v1512 = vunpack.c.h.b16 %v310
  %v1513 = vunpack.c.l.b16 %v311
  %v1514 = vunpack.c.h.b16 %v311
  %v1515 = vunpack.c.l.b16 %v312
  %v1516 = vunpack.c.h.b16 %v312
  %v1517 = vunpack.c.l.b16 %v313
  %v1518 = vunpack.c.h.b16 %v313
  %v1519 = vunpack.c.l.b16 %v314
  %v1520 = vunpack.c.h.b16 %v314
  %v1521 = vunpack.c.l.b16 %v315
  %v1522 = vunpack.c.h.b16 %v315
  %v1523 = vunpack.c.l.b16 %v316
  %v1524 = vunpack.c.h.b16 %v316
  %v1525 = vunpack.c.l.b16 %v317
  %v1526 = vunpack.c.h.b16 %v317
  %v1527 = vunpack.c.l.b16 %v318
  %v1528 = vunpack.c.h.b16 %v318
  %v1529 = vunpack.c.l.b16 %v319
  %v1530 = vunpack.c.h.b16 %v319
  %v1531 = vunpack.c.l.b16 %v320
  %v1532 = vunpack.c.h.b16 %v320
  %v1533 = vunpack.c.l.b16 %v321
  %v1534 = vunpack.c.h.b16 %v321
  %v1535 = vunpack.c.l.b16 %v322
  %v1536 = vunpack.c.h.b16 %v322
  %v1537 = vunpack.c.l.b16 %v323
  %v1538 = vunpack.c.h.b16 %v323
  %v1539 = vunpack.c.l.b16 %v324
  %v1540 = vunpack.c.h.b16 %v324
  %v1541 = vunpack.c.l.b16 %v325
  %v1542 = vunpack.c.h.b16 %v325
  %v1543 = vunpack.c.l.b16 %v326
  %v1544 = vunpack.c.h.b16 %v326
  %v1545 = vunpack.c.l.b16 %v327
  %v1546 = vunpack.c.h.b16 %v327
  %v1547 = vunpack.c.l.b16 %v328
  %v1548 = vunpack.c.h.b16 %v328
  %v1549 = vunpack.c.l.b16 %v329
  %v1550 = vunpack.c.h.b16 %v329
  %v1551 = vunpack.c.l.b16 %v330
  %v1552 = vunpack.c.h.b16 %v330
  %v1553 = vunpack.c.l.b16 %v331
  %v1554 = vunpack.c.h.b16 %v331
  %v1555 = vunpack.c.l.b16 %v332
  %v1556 = vunpack.c.h.b16 %v332
  %v1557 = vunpack.c.l.b16 %v333
  %v1558 = vunpack.c.h.b16 %v333
  %v1559 = vunpack.c.l.b16 %v334
  %v1560 = vunpack.c.h.b16 %v334
  %v1561 = vunpack.c.l.b16 %v335
  %v1562 = vunpack.c.h.b16 %v335
  %v1563 = vunpack.c.l.b16 %v336
  %v1564 = vunpack.c.h.b16 %v336
  %v1565 = vunpack.c.l.b16 %v337
  %v1566 = vunpack.c.h.b16 %v337
  %v1567 = vunpack.c.l.b16 %v338
  %v1568 = vunpack.c.h.b16 %v338
  %v1569 = vunpack.c.l.b16 %v339
  %v1570 = vunpack.c.h.b16 %v339
  %v1571 = vunpack.c.l.b16 %v340
  %v1572 = vunpack.c.h.b16 %v340
  %v1573 = vunpack.c.l.b16 %v341
  %v1574 = vunpack.c.h.b16 %v341
  %v1575 = vunpack.c.l.b16 %v342
  %v1576 = vunpack.c.h.b16 %v342
  %v1577 = vunpack.c.l.b16 %v343
  %v1578 = vunpack.c.h.b16 %v343
  %v1579 = vunpack.c.l.b16 %v344
  %v1580 = vunpack.c.h.b16 %v344
  %v1581 = vunpack.c.l.b16 %v345
  %v1582 = vunpack.c.h.b16 %v345
  %v1583 = vunpack.c.l.b16 %v346
  %v1584 = vunpack.c.h.b16 %v346
  %v1585 = vunpack.c.l.b16 %v347
  %v1586 = vunpack.c.h.b16 %v347
  %v1587 = vunpack.c.l.b16 %v348
  %v1588 = vunpack.c.h.b16 %v348
  %v1589 = vunpack.c.l.b16 %v349
  %v1590 = vunpack.c.h.b16 %v349
  %v1591 = vunpack.c.l.b16 %v350
  %v1592 = vunpack.c.h.b16 %v350
  %v1593 = vunpack.c.l.b16 %v351
  %v1594 = vunpack.c.h.b16 %v351
  %v1595 = vunpack.c.l.b16 %v352
  %v1596 = vunpack.c.h.b16 %v352
  %v1597 = vunpack.c.l.b16 %v353
  %v1598 = vunpack.c.h.b16 %v353
  %v1599 = vunpack.c.l.b16 %v354
  %v1600 = vunpack.c.h.b16 %v354
  %v1601 = vunpack.c.l.b16 %v355
  %v1602 = vunpack.c.h.b16 %v355
  %v1603 = vunpack.c.l.b16 %v356
  %v1604 = vunpack.c.h.b16 %v356
  %v1605 = vunpack.c.l.b16 %v357
  %v1606 = vunpack.c.h.b16 %v357
  %v1607 = vunpack.c.l.b16 %v358
  %v1608 = vunpack.c.h.b16 %v358
  %v1609 = vunpack.c.l.b16 %v359
  %v1610 = vunpack.c.h.b16 %v359
  %v1611 = vunpack.c.l.b16 %v360
  %v1612 = vunpack.c.h.b16 %v360
  %v1613 = vunpack.c.l.b16 %v361
  %v1614 = vunpack.c.h.b16 %v361
  %v1615 = vunpack.c.l.b16 %v362
  %v1616 = vunpack.c.h.b16 %v362
  %v1617 = vunpack.c.l.b16 %v363
  %v1618 = vunpack.c.h.b16 %v363
  %v1619 = vunpack.c.l.b16 %v364
  %v1620 = vunpack.c.h.b16 %v364
  %v1621 = vunpack.c.l.b16 %v365
  %v1622 = vunpack.c.h.b16 %v365
  %v1623 = vunpack.c.l.b16 %v366
  %v1624 = vunpack.c.h.b16 %v366
  %v1625 = vunpack.c.l.b16 %v367
  %v1626 = vunpack.c.h.b16 %v367
  %v1627 = vunpack.c.l.b16 %v368
  %v1628 = vunpack.c.h.b16 %v368
  %v1629 = vunpack.c.l.b16 %v369
  %v1630 = vunpack.c.h.b16 %v369
  %v1631 = vunpack.c.l.b16 %v370
  %v1632 = vunpack.c.h.b16 %v370
  %v1633 = vunpack.c.l.b16 %v371
  %v1634 = vunpack.c.h.b16 %v371
  %v1635 = vunpack.c.l.b16 %v372
  %v1636 = vunpack.c.h.b16 %v372
  %v1637 = vunpack.c.l.b16 %v373
  %v1638 = vunpack.c.h.b16 %v373
  %v1639 = vunpack.c.l.b16 %v374
  %v1640 = vunpack.c.h.b16 %v374
  %v1641 = vunpack.c.l.b16 %v375
  %v1642 = vunpack.c.h.b16 %v375
  %v1643 = vunpack.c.l.b16 %v376
  %v1644 = vunpack.c.h.b16 %v376
  %v1645 = vunpack.c.l.b16 %v377
  %v1646 = vunpack.c.h.b16 %v377
  %v1647 = vunpack.c.l.b16 %v378
  %v1648 = vunpack.c.h.b16 %v378
  %v1649 = vunpack.c.l.b16 %v379
  %v1650 = vunpack.c.h.b16 %v379
  %v1651 = vunpack.c.l.b16 %v380
  %v1652 = vunpack.c.h.b16 %v380
  %v1653 = vunpack.c.l.b16 %v381
  %v1654 = vunpack.c.h.b16 %v381
  %v1655 = vunpack.c.l.b16 %v382
  %v1656 = vunpack.c.h.b16 %v382
  %v1657 = vunpack.c.l.b16 %v383
  %v1658 = vunpack.c.h.b16 %v383
  %v1659 = vunpack.c.l.b16 %v384
  %v1660 = vunpack.c.h.b16 %v384
  %v1661 = vunpack.c.l.b16 %v385
  %v1662 = vunpack.c.h.b16 %v385
  %v1663 = vunpack.c.l.b16 %v386
  %v1664 = vunpack.c.h.b16 %v386
  %v1665 = vunpack.c.l.b16 %v387
  %v1666 = vunpack.c.h.b16 %v387
  %v1667 = vunpack.c.l.b16 %v388
  %v1668 = vunpack.c.h.b16 %v388
  %v1669 = vunpack.c.l.b16 %v389
  %v1670 = vunpack.c.h.b16 %v389
  %v1671 = vunpack.c.l.b16 %v390
  %v1672 = vunpack.c.h.b16 %v390
  %v1673 = vunpack.c.l.b16 %v391
  %v1674 = vunpack.c.h.b16 %v391
  %v1675 = vunpack.c.l.b16 %v392
  %v1676 = vunpack.c.h.b16 %v392
  %v1677 = vunpack.c.l.b16 %v393
  %v1678 = vunpack.c.h.b16 %v393
  %v1679 = vunpack.c.l.b16 %v394
  %v1680 = vunpack.c.h.b16 %v394
  %v1681 = vunpack.c.l.b16 %v395
  %v1682 = vunpack.c.h.b16 %v395
  %v1683 = vunpack.c.l.b16 %v396
  %v1684 = vunpack.c.h.b16 %v396
  %v1685 = vunpack.c.l.b16 %v397
  %v1686 = vunpack.c.h.b16 %v397
  %v1687 = vunpack.c.l.b16 %v398
  %v1688 = vunpack.c.h.b16 %v398
  %v1689 = vunpack.c.l.b16 %v399
  %v1690 = vunpack.c.h.b16 %v399
  %v1691 = vunpack.c.l.b16 %v400
  %v1692 = vunpack.c.h.b16 %v400
  %v1693 = vunpack.c.l.b16 %v401
  %v1694 = vunpack.c.h.b16 %v401
  %v1695 = vunpack.c.l.b16 %v402
  %v1696 = vunpack.c.h.b16 %v402
  %v1697 = vunpack.c.l.b16 %v403
  %v1698 = vunpack.c.h.b16 %v403
  %v1699 = vunpack.c.l.b16 %v404
  %v1700 = vunpack.c.h.b16 %v404
  %v1701 = vunpack.c.l.b16 %v405
  %v1702 = vunpack.c.h.b16 %v405
  %v1703 = vunpack.c.l.b16 %v406
  %v1704 = vunpack.c.h.b16 %v406
  %v1705 = vunpack.c.l.b16 %v407
  %v1706 = vunpack.c.h.b16 %v407
  %v1707 = vunpack.c.l.b16 %v408
  %v1708 = vunpack.c.h.b16 %v408
  %v1709 = vunpack.c.l.b16 %v409
  %v1710 = vunpack.c.h.b16 %v409
  %v1711 = vunpack.c.l.b16 %v410
  %v1712 = vunpack.c.h.b16 %v410
  %v1713 = vunpack.c.l.b16 %v411
  %v1714 = vunpack.c.h.b16 %v411
  %v1715 = vunpack.c.l.b16 %v412
  %v1716 = vunpack.c.h.b16 %v412
  %v1717 = vunpack.c.l.b16 %v413
  %v1718 = vunpack.c.h.b16 %v413
  %v1719 = vunpack.c.l.b16 %v414
  %v1720 = vunpack.c.h.b16 %v414
  %v1721 = vunpack.c.l.b16 %v415
  %v1722 = vunpack.c.h.b16 %v415
  %v1723 = vunpack.c.l.b16 %v416
  %v1724 = vunpack.c.h.b16 %v416
  %v1725 = vunpack.c.l.b16 %v417
  %v1726 = vunpack.c.h.b16 %v417
  %v1727 = vunpack.c.l.b16 %v418
  %v1728 = vunpack.c.h.b16 %v418
  %v1729 = vunpack.c.l.b16 %v419
  %v1730 = vunpack.c.h.b16 %v419
  %v1731 = vunpack.c.l.b16 %v420
  %v1732 = vunpack.c.h.b16 %v420
  %v1733 = vunpack.c.l.b16 %v421
  %v1734 = vunpack.c.h.b16 %v421
  %v1735 = vunpack.c.l.b16 %v422
  %v1736 = vunpack.c.h.b16 %v422
  %v1737 = vunpack.c.l.b16 %v423
  %v1738 = vunpack.c.h.b16 %v423
  %v1739 = vunpack.c.l.b16 %v424
  %v1740 = vunpack.c.h.b16 %v424
  %v1741 = vunpack.c.l.b16 %v425
  %v1742 = vunpack.c.h.b16 %v425
  %v1743 = vunpack.c.l.b16 %v426
  %v1744 = vunpack.c.h.b16 %v426
  %v1745 = vunpack.c.l.b16 %v427
  %v1746 = vunpack.c.h.b16 %v427
  %v1747 = vunpack.c.l.b16 %v428
  %v1748 = vunpack.c.h.b16 %v428
  %v1749 = vunpack.c.l.b16 %v429
  %v1750 = vunpack.c.h.b16 %v429
  %v1751 = vunpack.c.l.b16 %v430
  %v1752 = vunpack.c.h.b16 %v430
  %v1753 = vunpack.c.l.b16 %v431
  %v1754 = vunpack.c.h.b16 %v431
  %v1755 = vunpack.c.l.b16 %v432
  %v1756 = vunpack.c.h.b16 %v432
  %v1757 = vunpack.c.l.b16 %v433
  %v1758 = vunpack.c.h.b16 %v433
  %v1759 = vunpack.c.l.b16 %v434
  %v1760 = vunpack.c.h.b16 %v434
  %v1761 = vunpack.c.l.b16 %v435
  %v1762 = vunpack.c.h.b16 %v435
  %v1763 = vunpack.c.l.b16 %v436
  %v1764 = vunpack.c.h.b16 %v436
  %v1765 = vunpack.c.l.b16 %v437
  %v1766 = vunpack.c.h.b16 %v437
  %v1767 = vunpack.c.l.b16 %v438
  %v1768 = vunpack.c.h.b16 %v438
  %v1769 = vunpack.c.l.b16 %v439
  %v1770 = vunpack.c.h.b16 %v439
  %v1771 = vunpack.c.l.b16 %v440
  %v1772 = vunpack.c.h.b16 %v440
  %v1773 = vunpack.c.l.b16 %v441
  %v1774 = vunpack.c.h.b16 %v441
  %v1775 = vunpack.c.l.b16 %v442
  %v1776 = vunpack.c.h.b16 %v442
  %v1777 = vunpack.c.l.b16 %v443
  %v1778 = vunpack.c.h.b16 %v443
  %v1779 = vunpack.c.l.b16 %v444
  %v1780 = vunpack.c.h.b16 %v444
  %v1781 = vunpack.c.l.b16 %v445
  %v1782 = vunpack.c.h.b16 %v445
  %v1783 = vunpack.c.l.b16 %v446
  %v1784 = vunpack.c.h.b16 %v446
  %v1785 = vpack.c.b16 %v987, %v985
  %v1786 = vpack.c.b16 %v988, %v986
  %v1787 = vpack.c.b16 %v991, %v989
  %v1788 = vpack.c.b16 %v992, %v990
  %v1789 = vpack.c.b16 %v995, %v993
  %v1790 = vpack.c.b16 %v996, %v994
  %v1791 = vpack.c.b16 %v999, %v997
  %v1792 = vpack.c.b16 %v1000, %v998
  %v1793 = vpack.c.b16 %v1003, %v1001
  %v1794 = vpack.c.b16 %v1004, %v1002
  %v1795 = vpack.c.b16 %v1007, %v1005
  %v1796 = vpack.c.b16 %v1008, %v1006
  %v1797 = vpack.c.b16 %v1011, %v1009
  %v1798 = vpack.c.b16 %v1012, %v1010
  %v1799 = vpack.c.b16 %v1015, %v1013
  %v1800 = vpack.c.b16 %v1016, %v1014
  %v1801 = vpack.c.b16 %v1019, %v1017
  %v1802 = vpack.c.b16 %v1020, %v1018
  %v1803 = vpack.c.b16 %v1023, %v1021
  %v1804 = vpack.c.b16 %v1024, %v1022
  %v1805 = vpack.c.b16 %v1027, %v1025
  %v1806 = vpack.c.b16 %v1028, %v1026
  %v1807 = vpack.c.b16 %v1031, %v1029
  %v1808 = vpack.c.b16 %v1032, %v1030
  %v1809 = vpack.c.b16 %v1035, %v1033
  %v1810 = vpack.c.b16 %v1036, %v1034
  %v1811 = vpack.c.b16 %v1039, %v1037
  %v1812 = vpack.c.b16 %v1040, %v1038
  %v1813 = vpack.c.b16 %v1043, %v1041
  %v1814 = vpack.c.b16 %v1044, %v1042
  %v1815 = vpack.c.b16 %v1047, %v1045
  %v1816 = vpack.c.b16 %v1048, %v1046
  %v1817 = vpack.c.b16 %v1051, %v1049
  %v1818 = vpack.c.b16 %v1052, %v1050
  %v1819 = vpack.c.b16 %v1055, %v1053
  %v1820 = vpack.c.b16 %v1056, %v1054
  %v1821 = vpack.c.b16 %v1059, %v1057
  %v1822 = vpack.c.b16 %v1060, %v1058
  %v1823 = vpack.c.b16 %v1063, %v1061
  %v1824 = vpack.c.b16 %v1064, %v1062
  %v1825 = vpack.c.b16 %v1067, %v1065
  %v1826 = vpack.c.b16 %v1068, %v1066
  %v1827 = vpack.c.b16 %v1071, %v1069
  %v1828 = vpack.c.b16 %v1072, %v1070
  %v1829 = vpack.c.b16 %v1075, %v1073
  %v1830 = vpack.c.b16 %v1076, %v1074
  %v1831 = vpack.c.b16 %v1079, %v1077
  %v1832 = vpack.c.b16 %v1080, %v1078
  %v1833 = vpack.c.b16 %v1083, %v1081
  %v1834 = vpack.c.b16 %v1084, %v1082
  %v1835 = vpack.c.b16 %v1087, %v1085
  %v1836 = vpack.c.b16 %v1088, %v1086
  %v1837 = vpack.c.b16 %v1091, %v1089
  %v1838 = vpack.c.b16 %v1092, %v1090
  %v1839 = vpack.c.b16 %v1095, %v1093
  %v1840 = vpack.c.b16 %v1096, %v1094
  %v1841 = vpack.c.b16 %v1099, %v1097
  %v1842 = vpack.c.b16 %v1100, %v1098
  %v1843 = vpack.c.b16 %v1103, %v1101
  %v1844 = vpack.c.b16 %v1104, %v1102
  %v1845 = vpack.c.b16 %v1107, %v1105
  %v1846 = vpack.c.b16 %v1108, %v1106
  %v1847 = vpack.c.b16 %v1111, %v1109
  %v1848 = vpack.c.b16 %v1112, %v1110
  %v1849 = vpack.c.b16 %v1115, %v1113
  %v1850 = vpack.c.b16 %v1116, %v1114
  %v1851 = vpack.c.b16 %v1119, %v1117
  %v1852 = vpack.c.b16 %v1120, %v1118
  %v1853 = vpack.c.b16 %v1123, %v1121
  %v1854 = vpack.c.b16 %v1124, %v1122
  %v1855 = vpack.c.b16 %v1127, %v1125
  %v1856 = vpack.c.b16 %v1128, %v1126
  %v1857 = vpack.c.b16 %v1131, %v1129
  %v1858 = vpack.c.b16 %v1132, %v1130
  %v1859 = vpack.c.b16 %v1135, %v1133
  %v1860 = vpack.c.b16 %v1136, %v1134
  %v1861 = vpack.c.b16 %v1139, %v1137
  %v1862 = vpack.c.b16 %v1140, %v1138
  %v1863 = vpack.c.b16 %v1143, %v1141
  %v1864 = vpack.c.b16 %v1144, %v1142
  %v1865 = vpack.c.b16 %v1147, %v1145
  %v1866 = vpack.c.b16 %v1148, %v1146
  %v1867 = vpack.c.b16 %v1151, %v1149
  %v1868 = vpack.c.b16 %v1152, %v1150
  %v1869 = vpack.c.b16 %v1155, %v1153
  %v1870 = vpack.c.b16 %v1156, %v1154
  %v1871 = vpack.c.b16 %v1159, %v1157
  %v1872 = vpack.c.b16 %v1160, %v1158
  %v1873 = vpack.c.b16 %v1163, %v1161
  %v1874 = vpack.c.b16 %v1164, %v1162
  %v1875 = vpack.c.b16 %v1167, %v1165
  %v1876 = vpack.c.b16 %v1168, %v1166
  %v1877 = vpack.c.b16 %v1171, %v1169
  %v1878 = vpack.c.b16 %v1172, %v1170
  %v1879 = vpack.c.b16 %v1175, %v1173
  %v1880 = vpack.c.b16 %v1176, %v1174
  %v1881 = vpack.c.b16 %v1179, %v1177
  %v1882 = vpack.c.b16 %v1180, %v1178
  %v1883 = vpack.c.b16 %v1183, %v1181
  %v1884 = vpack.c.b16 %v1184, %v1182
  %v1885 = vpack.c.b16 %v1187, %v1185
  %v1886 = vpack.c.b16 %v1188, %v1186
  %v1887 = vpack.c.b16 %v1191, %v1189
  %v1888 = vpack.c.b16 %v1192, %v1190
  %v1889 = vpack.c.b16 %v1195, %v1193
  %v1890 = vpack.c.b16 %v1196, %v1194
  %v1891 = vpack.c.b16 %v1199, %v1197
  %v1892 = vpack.c.b16 %v1200, %v1198
  %v1893 = vpack.c.b16 %v1203, %v1201
  %v1894 = vpack.c.b16 %v1204, %v1202
  %v1895 = vpack.c.b16 %v1207, %v1205
  %v1896 = vpack.c.b16 %v1208, %v1206
  %v1897 = vpack.c.b16 %v1211, %v1209
  %v1898 = vpack.c.b16 %v1212, %v1210
  %v1899 = vpack.c.b16 %v1215, %v1213
  %v1900 = vpack.c.b16 %v1216, %v1214
  %v1901 = vpack.c.b16 %v1219, %v1217
  %v1902 = vpack.c.b16 %v1220, %v1218
  %v1903 = vpack.c.b16 %v1223, %v1221
  %v1904 = vpack.c.b16 %v1224, %v1222
  %v1905 = vpack.c.b16 %v1227, %v1225
  %v1906 = vpack.c.b16 %v1228, %v1226
  %v1907 = vpack.c.b16 %v1231, %v1229
  %v1908 = vpack.c.b16 %v1232, %v1230
  %v1909 = vpack.c.b16 %v1235, %v1233
  %v1910 = vpack.c.b16 %v1236, %v1234
  %v1911 = vpack.c.b16 %v1239, %v1237
  %v1912 = vpack.c.b16 %v1240, %v1238
  %v1913 = vpack.c.b16 %v1243, %v1241
  %v1914 = vpack.c.b16 %v1244, %v1242
  %v1915 = vpack.c.b16 %v1247, %v1245
  %v1916 = vpack.c.b16 %v1248, %v1246
  %v1917 = vpack.c.b16 %v1251, %v1249
  %v1918 = vpack.c.b16 %v1252, %v1250
  %v1919 = vpack.c.b16 %v1255, %v1253
  %v1920 = vpack.c.b16 %v1256, %v1254
  %v1921 = vpack.c.b16 %v1259, %v1257
  %v1922 = vpack.c.b16 %v1260, %v1258
  %v1923 = vpack.c.b16 %v1263, %v1261
  %v1924 = vpack.c.b16 %v1264, %v1262
  %v1925 = vpack.c.b16 %v1267, %v1265
  %v1926 = vpack.c.b16 %v1268, %v1266
  %v1927 = vpack.c.b16 %v1271, %v1269
  %v1928 = vpack.c.b16 %v1272, %v1270
  %v1929 = vpack.c.b16 %v1275, %v1273
  %v1930 = vpack.c.b16 %v1276, %v1274
  %v1931 = vpack.c.b16 %v1279, %v1277
  %v1932 = vpack.c.b16 %v1280, %v1278
  %v1933 = vpack.c.b16 %v1283, %v1281
  %v1934 = vpack.c.b16 %v1284, %v1282
  %v1935 = vpack.c.b16 %v1287, %v1285
  %v1936 = vpack.c.b16 %v1288, %v1286
  %v1937 = vpack.c.b16 %v1291, %v1289
  %v1938 = vpack.c.b16 %v1292, %v1290
  %v1939 = vpack.c.b16 %v1295, %v1293
  %v1940 = vpack.c.b16 %v1296, %v1294
  %v1941 = vpack.c.b16 %v1299, %v1297
  %v1942 = vpack.c.b16 %v1300, %v1298
  %v1943 = vpack.c.b16 %v1303, %v1301
  %v1944 = vpack.c.b16 %v1304, %v1302
  %v1945 = vpack.c.b16 %v1307, %v1305
  %v1946 = vpack.c.b16 %v1308, %v1306
  %v1947 = vpack.c.b16 %v1311, %v1309
  %v1948 = vpack.c.b16 %v1312, %v1310
  %v1949 = vpack.c.b16 %v1315, %v1313
  %v1950 = vpack.c.b16 %v1316, %v1314
  %v1951 = vpack.c.b16 %v1319, %v1317
  %v1952 = vpack.c.b16 %v1320, %v1318
  %v1953 = vpack.c.b16 %v1323, %v1321
  %v1954 = vpack.c.b16 %v1324, %v1322
  %v1955 = vpack.c.b16 %v1327, %v1325
  %v1956 = vpack.c.b16 %v1328, %v1326
  %v1957 = vpack.c.b16 %v1331, %v1329
  %v1958 = vpack.c.b16 %v1332, %v1330
  %v1959 = vpack.c.b16 %v1335, %v1333
  %v1960 = vpack.c.b16 %v1336, %v1334
  %v1961 = vpack.c.b16 %v1339, %v1337
  %v1962 = vpack.c.b16 %v1340, %v1338
  %v1963 = vpack.c.b16 %v1343, %v1341
  %v1964 = vpack.c.b16 %v1344, %v1342
  %v1965 = vpack.c.b16 %v1347, %v1345
  %v1966 = vpack.c.b16 %v1348, %v1346
  %v1967 = vpack.c.b16 %v1351, %v1349
  %v1968 = vpack.c.b16 %v1352, %v1350
  %v1969 = vpack.c.b16 %v1355, %v1353
  %v1970 = vpack.c.b16 %v1356, %v1354
  %v1971 = vpack.c.b16 %v1359, %v1357
  %v1972 = vpack.c.b16 %v1360, %v1358
  %v1973 = vpack.c.b16 %v1363, %v1361
  %v1974 = vpack.c.b16 %v1364, %v1362
  %v1975 = vpack.c.b16 %v1367, %v1365
  %v1976 = vpack.c.b16 %v1368, %v1366
  %v1977 = vpack.c.b16 %v1371, %v1369
  %v1978 = vpack.c.b16 %v1372, %v1370
  %v1979 = vpack.c.b16 %v1375, %v1373
  %v1980 = vpack.c.b16 %v1376, %v1374
  %v1981 = vpack.c.b16 %v1379, %v1377
  %v1982 = vpack.c.b16 %v1380, %v1378
  %v1983 = vpack.c.b16 %v1383, %v1381
  %v1984 = vpack.c.b16 %v1384, %v1382
  %v1985 = vpack.c.b16 %v1387, %v1385
  %v1986 = vpack.c.b16 %v1388, %v1386
  %v1987 = vpack.c.b16 %v1391, %v1389
  %v1988 = vpack.c.b16 %v1392, %v1390
  %v1989 = vpack.c.b16 %v1395, %v1393
  %v1990 = vpack.c.b16 %v1396, %v1394
  %v1991 = vpack.c.b16 %v1399, %v1397
  %v1992 = vpack.c.b16 %v1400, %v1398
  %v1993 = vpack.c.b16 %v1403, %v1401
  %v1994 = vpack.c.b16 %v1404, %v1402
  %v1995 = vpack.c.b16 %v1407, %v1405
  %v1996 = vpack.c.b16 %v1408, %v1406
  %v1997 = vpack.c.b16 %v1411, %v1409
  %v1998 = vpack.c.b16 %v1412, %v1410
  %v1999 = vpack.c.b16 %v1415, %v1413
  %v2000 = vpack.c.b16 %v1416, %v1414
  %v2001 = vpack.c.b16 %v1419, %v1417
  %v2002 = vpack.c.b16 %v1420, %v1418
  %v2003 = vpack.c.b16 %v1423, %v1421
  %v2004 = vpack.c.b16 %v1424, %v1422
  %v2005 = vpack.c.b16 %v1427, %v1425
  %v2006 = vpack.c.b16 %v1428, %v1426
  %v2007 = vpack.c.b16 %v1431, %v1429
  %v2008 = vpack.c.b16 %v1432, %v1430
  %v2009 = vpack.c.b16 %v1435, %v1433
  %v2010 = vpack.c.b16 %v1436, %v1434
  %v2011 = vpack.c.b16 %v1439, %v1437
  %v2012 = vpack.c.b16 %v1440, %v1438
  %v2013 = vpack.c.b16 %v1443, %v1441
  %v2014 = vpack.c.b16 %v1444, %v1442
  %v2015 = vpack.c.b16 %v1447, %v1445
  %v2016 = vpack.c.b16 %v1448, %v1446
  %v2017 = vpack.c.b16 %v1451, %v1449
  %v2018 = vpack.c.b16 %v1452, %v1450
  %v2019 = vpack.c.b16 %v1455, %v1453
  %v2020 = vpack.c.b16 %v1456, %v1454
  %v2021 = vpack.c.b16 %v1459, %v1457
  %v2022 = vpack.c.b16 %v1460, %v1458
  %v2023 = vpack.c.b16 %v1463, %v1461
  %v2024 = vpack.c.b16 %v1464, %v1462
  %v2025 = vpack.c.b16 %v1467, %v1465
  %v2026 = vpack.c.b16 %v1468, %v1466
  %v2027 = vpack.c.b16 %v1471, %v1469
  %v2028 = vpack.c.b16 %v1472, %v1470
  %v2029 = vpack.c.b16 %v1475, %v1473
  %v2030 = vpack.c.b16 %v1476, %v1474
  %v2031 = vpack.c.b16 %v1479, %v1477
  %v2032 = vpack.c.b16 %v1480, %v1478
  %v2033 = vpack.c.b16 %v1483, %v1481
  %v2034 = vpack.c.b16 %v1484, %v1482
  %v2035 = vpack.c.b16 %v1487, %v1485
  %v2036 = vpack.c.b16 %v1488, %v1486
  %v2037 = vpack.c.b16 %v1491, %v1489
  %v2038 = vpack.c.b16 %v1492, %v1490
  %v2039 = vpack.c.b16 %v1495, %v1493
  %v2040 = vpack.c.b16 %v1496, %v1494
  %v2041 = vpack.c.b16 %v1499, %v1497
  %v2042 = vpack.c.b16 %v1500, %v1498
  %v2043 = vpack.c.b16 %v1503, %v1501
  %v2044 = vpack.c.b16 %v1504, %v1502
  %v2045 = vpack.c.b16 %v1507, %v1505
  %v2046 = vpack.c.b16 %v1508, %v1506
  %v2047 = vpack.c.b16 %v1511, %v1509
  %v2048 = vpack.c.b16 %v1512, %v1510
  %v2049 = vpack.c.b16 %v1515, %v1513
  %v2050 = vpack.c.b16 %v1516, %v1514
  %v2051 = vpack.c.b16 %v1519, %v1517
  %v2052 = vpack.c.b16 %v1520, %v1518
  %v2053 = vpack.c.b16 %v1523, %v1521
  %v2054 = vpack.c.b16 %v1524, %v1522
  %v2055 = vpack.c.b16 %v1527, %v1525
  %v2056 = vpack.c.b16 %v1528, %v1526
  %v2057 = vpack.c.b16 %v1531, %v1529
  %v2058 = vpack.c.b16 %v1532, %v1530
  %v2059 = vpack.c.b16 %v1535, %v1533
  %v2060 = vpack.c.b16 %v1536, %v1534
  %v2061 = vpack.c.b16 %v1539, %v1537
  %v2062 = vpack.c.b16 %v1540, %v1538
  %v2063 = vpack.c.b16 %v1543, %v1541
  %v2064 = vpack.c.b16 %v1544, %v1542
  %v2065 = vpack.c.b16 %v1547, %v1545
  %v2066 = vpack.c.b16 %v1548, %v1546
  %v2067 = vpack.c.b16 %v1551, %v1549
  %v2068 = vpack.c.b16 %v1552, %v1550
  %v2069 = vpack.c.b16 %v1555, %v1553
  %v2070 = vpack.c.b16 %v1556, %v1554
  %v2071 = vpack.c.b16 %v1559, %v1557
  %v2072 = vpack.c.b16 %v1560, %v1558
  %v2073 = vpack.c.b16 %v1563, %v1561
  %v2074 = vpack.c.b16 %v1564, %v1562
  %v2075 = vpack.c.b16 %v1567, %v1565
  %v2076 = vpack.c.b16 %v1568, %v1566
  %v2077 = vpack.c.b16 %v1571, %v1569
  %v2078 = vpack.c.b16 %v1572, %v1570
  %v2079 = vpack.c.b16 %v1575, %v1573
  %v2080 = vpack.c.b16 %v1576, %v1574
  %v2081 = vpack.c.b16 %v1579, %v1577
  %v2082 = vpack.c.b16 %v1580, %v1578
  %v2083 = vpack.c.b16 %v1583, %v1581
  %v2084 = vpack.c.b16 %v1584, %v1582
  %v2085 = vpack.c.b16 %v1587, %v1585
  %v2086 = vpack.c.b16 %v1588, %v1586
  %v2087 = vpack.c.b16 %v1591, %v1589
  %v2088 = vpack.c.b16 %v1592, %v1590
  %v2089 = vpack.c.b16 %v1595, %v1593
  %v2090 = vpack.c.b16 %v1596, %v1594
  %v2091 = vpack.c.b16 %v1599, %v1597
  %v2092 = vpack.c.b16 %v1600, %v1598
  %v2093 = vpack.c.b16 %v1603, %v1601
  %v2094 = vpack.c.b16 %v1604, %v1602
  %v2095 = vpack.c.b16 %v1607, %v1605
  %v2096 = vpack.c.b16 %v1608, %v1606
  %v2097 = vpack.c.b16 %v1611, %v1609
  %v2098 = vpack.c.b16 %v1612, %v1610
  %v2099 = vpack.c.b16 %v1615, %v1613
  %v2100 = vpack.c.b16 %v1616, %v1614
  %v2101 = vpack.c.b16 %v1619, %v1617
  %v2102 = vpack.c.b16 %v1620, %v1618
  %v2103 = vpack.c.b16 %v1623, %v1621
  %v2104 = vpack.c.b16 %v1624, %v1622
  %v2105 = vpack.c.b16 %v1627, %v1625
  %v2106 = vpack.c.b16 %v1628, %v1626
  %v2107 = vpack.c.b16 %v1631, %v1629
  %v2108 = vpack.c.b16 %v1632, %v1630
  %v2109 = vpack.c.b16 %v1635, %v1633
  %v2110 = vpack.c.b16 %v1636, %v1634
  %v2111 = vpack.c.b16 %v1639, %v1637
  %v2112 = vpack.c.b16 %v1640, %v1638
  %v2113 = vpack.c.b16 %v1643, %v1641
  %v2114 = vpack.c.b16 %v1644, %v1642
  %v2115 = vpack.c.b16 %v1647, %v1645
  %v2116 = vpack.c.b16 %v1648, %v1646
  %v2117 = vpack.c.b16 %v1651, %v1649
  %v2118 = vpack.c.b16 %v1652, %v1650
  %v2119 = vpack.c.b16 %v1655, %v1653
  %v2120 = vpack.c.b16 %v1656, %v1654
  %v2121 = vpack.c.b16 %v1659, %v1657
  %v2122 = vpack.c.b16 %v1660, %v1658
  %v2123 = vpack.c.b16 %v1663, %v1661
  %v2124 = vpack.c.b16 %v1664, %v1662
  %v2125 = vpack.c.b16 %v1667, %v1665
  %v2126 = vpack.c.b16 %v1668, %v1666
  %v2127 = vpack.c.b16 %v1671, %v1669
  %v2128 = vpack.c.b16 %v1672, %v1670
  %v2129 = vpack.c.b16 %v1675, %v1673
  %v2130 = vpack.c.b16 %v1676, %v1674
  %v2131 = vpack.c.b16 %v1679, %v1677
  %v2132 = vpack.c.b16 %v1680, %v1678
  %v2133 = vpack.c.b16 %v1683, %v1681
  %v2134 = vpack.c.b16 %v1684, %v1682
  %v2135 = vpack.c.b16 %v1687, %v1685
  %v2136 = vpack.c.b16 %v1688, %v1686
  %v2137 = vpack.c.b16 %v1691, %v1689
  %v2138 = vpack.c.b16 %v1692, %v1690
  %v2139 = vpack.c.b16 %v1695, %v1693
  %v2140 = vpack.c.b16 %v1696, %v1694
  %v2141 = vpack.c.b16 %v1699, %v1697
  %v2142 = vpack.c.b16 %v1700, %v1698
  %v2143 = vpack.c.b16 %v1703, %v1701
  %v2144 = vpack.c.b16 %v1704, %v1702
  %v2145 = vpack.c.b16 %v1707, %v1705
  %v2146 = vpack.c.b16 %v1708, %v1706
  %v2147 = vpack.c.b16 %v1711, %v1709
  %v2148 = vpack.c.b16 %v1712, %v1710
  %v2149 = vpack.c.b16 %v1715, %v1713
  %v2150 = vpack.c.b16 %v1716, %v1714
  %v2151 = vpack.c.b16 %v1719, %v1717
  %v2152 = vpack.c.b16 %v1720, %v1718
  %v2153 = vpack.c.b16 %v1723, %v1721
  %v2154 = vpack.c.b16 %v1724, %v1722
  %v2155 = vpack.c.b16 %v1727, %v1725
  %v2156 = vpack.c.b16 %v1728, %v1726
  %v2157 = vpack.c.b16 %v1731, %v1729
  %v2158 = vpack.c.b16 %v1732, %v1730
  %v2159 = vpack.c.b16 %v1735, %v1733
  %v2160 = vpack.c.b16 %v1736, %v1734
  %v2161 = vpack.c.b16 %v1739, %v1737
  %v2162 = vpack.c.b16 %v1740, %v1738
  %v2163 = vpack.c.b16 %v1743, %v1741
  %v2164 = vpack.c.b16 %v1744, %v1742
  %v2165 = vpack.c.b16 %v1747, %v1745
  %v2166 = vpack.c.b16 %v1748, %v1746
  %v2167 = vpack.c.b16 %v1751, %v1749
  %v2168 = vpack.c.b16 %v1752, %v1750
  %v2169 = vpack.c.b16 %v1755, %v1753
  %v2170 = vpack.c.b16 %v1756, %v1754
  %v2171 = vpack.c.b16 %v1759, %v1757
  %v2172 = vpack.c.b16 %v1760, %v1758
  %v2173 = vpack.c.b16 %v1763, %v1761
  %v2174 = vpack.c.b16 %v1764, %v1762
  %v2175 = vpack.c.b16 %v1767, %v1765
  %v2176 = vpack.c.b16 %v1768, %v1766
  %v2177 = vpack.c.b16 %v1771, %v1769
  %v2178 = vpack.c.b16 %v1772, %v1770
  %v2179 = vpack.c.b16 %v1775, %v1773
  %v2180 = vpack.c.b16 %v1776, %v1774
  %v2181 = vpack.c.b16 %v1779, %v1777
  %v2182 = vpack.c.b16 %v1780, %v1778
  %v2183 = vpack.c.b16 %v1783, %v1781
  %v2184 = vpack.c.b16 %v1784, %v1782
  %2585 = vmatprep.subr.bf16.mxu0 %v1786
  %2586 = vmatpush1.bf16.msra.mxu0 %v1785
  %2587 = vmatprep.subr.bf16.mxu0 %v1788
  %2588 = vmatpush1.bf16.msra.mxu0 %v1787
  %2589 = vmatprep.subr.bf16.mxu0 %v1790
  %2590 = vmatpush1.bf16.msra.mxu0 %v1789
  %2591 = vmatprep.subr.bf16.mxu0 %v1792
  %2592 = vmatpush1.bf16.msra.mxu0 %v1791
  %2593 = vmatprep.subr.bf16.mxu0 %v1794
  %2594 = vmatpush1.bf16.msra.mxu0 %v1793
  %2595 = vmatprep.subr.bf16.mxu0 %v1796
  %2596 = vmatpush1.bf16.msra.mxu0 %v1795
  %2597 = vmatprep.subr.bf16.mxu0 %v1798
  %2598 = vmatpush1.bf16.msra.mxu0 %v1797
  %2599 = vmatprep.subr.bf16.mxu0 %v1800
  %2600 = vmatpush1.bf16.msra.mxu0 %v1799
  %2601 = vmatprep.subr.bf16.mxu0 %v1802
  %2602 = vmatpush1.bf16.msra.mxu0 %v1801
  %2603 = vmatprep.subr.bf16.mxu0 %v1804
  %2604 = vmatpush1.bf16.msra.mxu0 %v1803
  %2605 = vmatprep.subr.bf16.mxu0 %v1806
  %2606 = vmatpush1.bf16.msra.mxu0 %v1805
  %2607 = vmatprep.subr.bf16.mxu0 %v1808
  %2608 = vmatpush1.bf16.msra.mxu0 %v1807
  %2609 = vmatprep.subr.bf16.mxu0 %v1810
  %2610 = vmatpush1.bf16.msra.mxu0 %v1809
  %2611 = vmatprep.subr.bf16.mxu0 %v1812
  %2612 = vmatpush1.bf16.msra.mxu0 %v1811
  %2613 = vmatprep.subr.bf16.mxu0 %v1814
  %2614 = vmatpush1.bf16.msra.mxu0 %v1813
  %2615 = vmatprep.subr.bf16.mxu0 %v1816
  %2616 = vmatpush1.bf16.msra.mxu0 %v1815
  %2617 = vmatprep.mubr.bf16.mxu0 %v536
  %2618 = vmatmul.mubr.bf16.gmra.mrb[0].mxu0 %v535
  %v2619 = vpop.f32.mrb[0].mxu0
  %v2620 = vadd.f32 %v452, %v2619
  %v2621 = vpop.f32.mrb[0].mxu0
  %v2622 = vadd.f32 %v456, %v2621
  %v2623 = vpop.f32.mrb[0].mxu0
  %v2624 = vadd.f32 %v452, %v2623
  %v2625 = vpop.f32.mrb[0].mxu0
  %v2626 = vadd.f32 %v456, %v2625
  %2627 = vdwg.mxu0
  %2628 = vmatprep.subr.bf16.mxu0 %v1818
  %2629 = vmatpush1.bf16.msra.mxu0 %v1817
  %2630 = vmatprep.subr.bf16.mxu0 %v1820
  %2631 = vmatpush1.bf16.msra.mxu0 %v1819
  %2632 = vmatprep.subr.bf16.mxu0 %v1822
  %2633 = vmatpush1.bf16.msra.mxu0 %v1821
  %2634 = vmatprep.subr.bf16.mxu0 %v1824
  %2635 = vmatpush1.bf16.msra.mxu0 %v1823
  %2636 = vmatprep.subr.bf16.mxu0 %v1826
  %2637 = vmatpush1.bf16.msra.mxu0 %v1825
  %2638 = vmatprep.subr.bf16.mxu0 %v1828
  %2639 = vmatpush1.bf16.msra.mxu0 %v1827
  %2640 = vmatprep.subr.bf16.mxu0 %v1830
  %2641 = vmatpush1.bf16.msra.mxu0 %v1829
  %2642 = vmatprep.subr.bf16.mxu0 %v1832
  %2643 = vmatpush1.bf16.msra.mxu0 %v1831
  %2644 = vmatprep.subr.bf16.mxu0 %v1834
  %2645 = vmatpush1.bf16.msra.mxu0 %v1833
  %2646 = vmatprep.subr.bf16.mxu0 %v1836
  %2647 = vmatpush1.bf16.msra.mxu0 %v1835
  %2648 = vmatprep.subr.bf16.mxu0 %v1838
  %2649 = vmatpush1.bf16.msra.mxu0 %v1837
  %2650 = vmatprep.subr.bf16.mxu0 %v1840
  %2651 = vmatpush1.bf16.msra.mxu0 %v1839
  %2652 = vmatprep.subr.bf16.mxu0 %v1842
  %2653 = vmatpush1.bf16.msra.mxu0 %v1841
  %2654 = vmatprep.subr.bf16.mxu0 %v1844
  %2655 = vmatpush1.bf16.msra.mxu0 %v1843
  %2656 = vmatprep.subr.bf16.mxu0 %v1846
  %2657 = vmatpush1.bf16.msra.mxu0 %v1845
  %2658 = vmatprep.subr.bf16.mxu0 %v1848
  %2659 = vmatpush1.bf16.msra.mxu0 %v1847
  %2660 = vmatprep.mubr.bf16.mxu0 %v538
  %2661 = vmatmul.mubr.bf16.gmra.mrb[0].mxu0 %v537
  %v2662 = vpop.f32.mrb[0].mxu0
  %v2663 = vadd.f32 %v2620, %v2662
  %v2664 = vpop.f32.mrb[0].mxu0
  %v2665 = vadd.f32 %v2622, %v2664
  %v2666 = vpop.f32.mrb[0].mxu0
  %v2667 = vadd.f32 %v2624, %v2666
  %v2668 = vpop.f32.mrb[0].mxu0
  %v2669 = vadd.f32 %v2626, %v2668
  %2670 = vdwg.mxu0
  %2671 = vmatprep.subr.bf16.mxu0 %v1850
  %2672 = vmatpush1.bf16.msra.mxu0 %v1849
  %2673 = vmatprep.subr.bf16.mxu0 %v1852
  %2674 = vmatpush1.bf16.msra.mxu0 %v1851
  %2675 = vmatprep.subr.bf16.mxu0 %v1854
  %2676 = vmatpush1.bf16.msra.mxu0 %v1853
  %2677 = vmatprep.subr.bf16.mxu0 %v1856
  %2678 = vmatpush1.bf16.msra.mxu0 %v1855
  %2679 = vmatprep.subr.bf16.mxu0 %v1858
  %2680 = vmatpush1.bf16.msra.mxu0 %v1857
  %2681 = vmatprep.subr.bf16.mxu0 %v1860
  %2682 = vmatpush1.bf16.msra.mxu0 %v1859
  %2683 = vmatprep.subr.bf16.mxu0 %v1862
  %2684 = vmatpush1.bf16.msra.mxu0 %v1861
  %2685 = vmatprep.subr.bf16.mxu0 %v1864
  %2686 = vmatpush1.bf16.msra.mxu0 %v1863
  %2687 = vmatprep.subr.bf16.mxu0 %v1866
  %2688 = vmatpush1.bf16.msra.mxu0 %v1865
  %2689 = vmatprep.subr.bf16.mxu0 %v1868
  %2690 = vmatpush1.bf16.msra.mxu0 %v1867
  %2691 = vmatprep.subr.bf16.mxu0 %v1870
  %2692 = vmatpush1.bf16.msra.mxu0 %v1869
  %2693 = vmatprep.subr.bf16.mxu0 %v1872
  %2694 = vmatpush1.bf16.msra.mxu0 %v1871
  %2695 = vmatprep.subr.bf16.mxu0 %v1874
  %2696 = vmatpush1.bf16.msra.mxu0 %v1873
  %2697 = vmatprep.subr.bf16.mxu0 %v1876
  %2698 = vmatpush1.bf16.msra.mxu0 %v1875
  %2699 = vmatprep.subr.bf16.mxu0 %v1878
  %2700 = vmatpush1.bf16.msra.mxu0 %v1877
  %2701 = vmatprep.subr.bf16.mxu0 %v1880
  %2702 = vmatpush1.bf16.msra.mxu0 %v1879
  %2703 = vmatprep.mubr.bf16.mxu0 %v540
  %2704 = vmatmul.mubr.bf16.gmra.mrb[0].mxu0 %v539
  %v2705 = vpop.f32.mrb[0].mxu0
  %v2706 = vadd.f32 %v2663, %v2705
  %v2707 = vpop.f32.mrb[0].mxu0
  %v2708 = vadd.f32 %v2665, %v2707
  %v2709 = vpop.f32.mrb[0].mxu0
  %v2710 = vadd.f32 %v2667, %v2709
  %v2711 = vpop.f32.mrb[0].mxu0
  %v2712 = vadd.f32 %v2669, %v2711
  %2713 = vdwg.mxu0
  %2714 = vmatprep.subr.bf16.mxu0 %v1882
  %2715 = vmatpush1.bf16.msra.mxu0 %v1881
  %2716 = vmatprep.subr.bf16.mxu0 %v1884
  %2717 = vmatpush1.bf16.msra.mxu0 %v1883
  %2718 = vmatprep.subr.bf16.mxu0 %v1886
  %2719 = vmatpush1.bf16.msra.mxu0 %v1885
  %2720 = vmatprep.subr.bf16.mxu0 %v1888
  %2721 = vmatpush1.bf16.msra.mxu0 %v1887
  %2722 = vmatprep.subr.bf16.mxu0 %v1890
  %2723 = vmatpush1.bf16.msra.mxu0 %v1889
  %2724 = vmatprep.subr.bf16.mxu0 %v1892
  %2725 = vmatpush1.bf16.msra.mxu0 %v1891
  %2726 = vmatprep.subr.bf16.mxu0 %v1894
  %2727 = vmatpush1.bf16.msra.mxu0 %v1893
  %2728 = vmatprep.subr.bf16.mxu0 %v1896
  %2729 = vmatpush1.bf16.msra.mxu0 %v1895
  %2730 = vmatprep.subr.bf16.mxu0 %v1898
  %2731 = vmatpush1.bf16.msra.mxu0 %v1897
  %2732 = vmatprep.subr.bf16.mxu0 %v1900
  %2733 = vmatpush1.bf16.msra.mxu0 %v1899
  %2734 = vmatprep.subr.bf16.mxu0 %v1902
  %2735 = vmatpush1.bf16.msra.mxu0 %v1901
  %2736 = vmatprep.subr.bf16.mxu0 %v1904
  %2737 = vmatpush1.bf16.msra.mxu0 %v1903
  %2738 = vmatprep.subr.bf16.mxu0 %v1906
  %2739 = vmatpush1.bf16.msra.mxu0 %v1905
  %2740 = vmatprep.subr.bf16.mxu0 %v1908
  %2741 = vmatpush1.bf16.msra.mxu0 %v1907
  %2742 = vmatprep.subr.bf16.mxu0 %v1910
  %2743 = vmatpush1.bf16.msra.mxu0 %v1909
  %2744 = vmatprep.subr.bf16.mxu0 %v1912
  %2745 = vmatpush1.bf16.msra.mxu0 %v1911
  %2746 = vmatprep.mubr.bf16.mxu0 %v542
  %2747 = vmatmul.mubr.bf16.gmra.mrb[0].mxu0 %v541
  %v2748 = vpop.f32.mrb[0].mxu0
  %v2749 = vadd.f32 %v2706, %v2748
  %v2750 = vpop.f32.mrb[0].mxu0
  %v2751 = vadd.f32 %v2708, %v2750
  %v2752 = vpop.f32.mrb[0].mxu0
  %v2753 = vadd.f32 %v2710, %v2752
  %v2754 = vpop.f32.mrb[0].mxu0
  %v2755 = vadd.f32 %v2712, %v2754
  %2756 = vdwg.mxu0
  %2757 = vmatprep.subr.bf16.mxu0 %v1914
  %2758 = vmatpush1.bf16.msra.mxu0 %v1913
  %2759 = vmatprep.subr.bf16.mxu0 %v1916
  %2760 = vmatpush1.bf16.msra.mxu0 %v1915
  %2761 = vmatprep.subr.bf16.mxu0 %v1918
  %2762 = vmatpush1.bf16.msra.mxu0 %v1917
  %2763 = vmatprep.subr.bf16.mxu0 %v1920
  %2764 = vmatpush1.bf16.msra.mxu0 %v1919
  %2765 = vmatprep.subr.bf16.mxu0 %v1922
  %2766 = vmatpush1.bf16.msra.mxu0 %v1921
  %2767 = vmatprep.subr.bf16.mxu0 %v1924
  %2768 = vmatpush1.bf16.msra.mxu0 %v1923
  %2769 = vmatprep.subr.bf16.mxu0 %v1926
  %2770 = vmatpush1.bf16.msra.mxu0 %v1925
  %2771 = vmatprep.subr.bf16.mxu0 %v1928
  %2772 = vmatpush1.bf16.msra.mxu0 %v1927
  %2773 = vmatprep.subr.bf16.mxu0 %v1930
  %2774 = vmatpush1.bf16.msra.mxu0 %v1929
  %2775 = vmatprep.subr.bf16.mxu0 %v1932
  %2776 = vmatpush1.bf16.msra.mxu0 %v1931
  %2777 = vmatprep.subr.bf16.mxu0 %v1934
  %2778 = vmatpush1.bf16.msra.mxu0 %v1933
  %2779 = vmatprep.subr.bf16.mxu0 %v1936
  %2780 = vmatpush1.bf16.msra.mxu0 %v1935
  %2781 = vmatprep.subr.bf16.mxu0 %v1938
  %2782 = vmatpush1.bf16.msra.mxu0 %v1937
  %2783 = vmatprep.subr.bf16.mxu0 %v1940
  %2784 = vmatpush1.bf16.msra.mxu0 %v1939
  %2785 = vmatprep.subr.bf16.mxu0 %v1942
  %2786 = vmatpush1.bf16.msra.mxu0 %v1941
  %2787 = vmatprep.subr.bf16.mxu0 %v1944
  %2788 = vmatpush1.bf16.msra.mxu0 %v1943
  %2789 = vmatprep.mubr.bf16.mxu0 %v544
  %2790 = vmatmul.mubr.bf16.gmra.mrb[0].mxu0 %v543
  %v2791 = vpop.f32.mrb[0].mxu0
  %v2792 = vadd.f32 %v2749, %v2791
  %v2793 = vpop.f32.mrb[0].mxu0
  %v2794 = vadd.f32 %v2751, %v2793
  %v2795 = vpop.f32.mrb[0].mxu0
  %v2796 = vadd.f32 %v2753, %v2795
  %v2797 = vpop.f32.mrb[0].mxu0
  %v2798 = vadd.f32 %v2755, %v2797
  %2799 = vdwg.mxu0
  %2800 = vmatprep.subr.bf16.mxu0 %v1946
  %2801 = vmatpush1.bf16.msra.mxu0 %v1945
  %2802 = vmatprep.subr.bf16.mxu0 %v1948
  %2803 = vmatpush1.bf16.msra.mxu0 %v1947
  %2804 = vmatprep.subr.bf16.mxu0 %v1950
  %2805 = vmatpush1.bf16.msra.mxu0 %v1949
  %2806 = vmatprep.subr.bf16.mxu0 %v1952
  %2807 = vmatpush1.bf16.msra.mxu0 %v1951
  %2808 = vmatprep.subr.bf16.mxu0 %v1954
  %2809 = vmatpush1.bf16.msra.mxu0 %v1953
  %2810 = vmatprep.subr.bf16.mxu0 %v1956
  %2811 = vmatpush1.bf16.msra.mxu0 %v1955
  %2812 = vmatprep.subr.bf16.mxu0 %v1958
  %2813 = vmatpush1.bf16.msra.mxu0 %v1957
  %2814 = vmatprep.subr.bf16.mxu0 %v1960
  %2815 = vmatpush1.bf16.msra.mxu0 %v1959
  %2816 = vmatprep.subr.bf16.mxu0 %v1962
  %2817 = vmatpush1.bf16.msra.mxu0 %v1961
  %2818 = vmatprep.subr.bf16.mxu0 %v1964
  %2819 = vmatpush1.bf16.msra.mxu0 %v1963
  %2820 = vmatprep.subr.bf16.mxu0 %v1966
  %2821 = vmatpush1.bf16.msra.mxu0 %v1965
  %2822 = vmatprep.subr.bf16.mxu0 %v1968
  %2823 = vmatpush1.bf16.msra.mxu0 %v1967
  %2824 = vmatprep.subr.bf16.mxu0 %v1970
  %2825 = vmatpush1.bf16.msra.mxu0 %v1969
  %2826 = vmatprep.subr.bf16.mxu0 %v1972
  %2827 = vmatpush1.bf16.msra.mxu0 %v1971
  %2828 = vmatprep.subr.bf16.mxu0 %v1974
  %2829 = vmatpush1.bf16.msra.mxu0 %v1973
  %2830 = vmatprep.subr.bf16.mxu0 %v1976
  %2831 = vmatpush1.bf16.msra.mxu0 %v1975
  %2832 = vmatprep.mubr.bf16.mxu0 %v546
  %2833 = vmatmul.mubr.bf16.gmra.mrb[0].mxu0 %v545
  %v2834 = vpop.f32.mrb[0].mxu0
  %v2835 = vadd.f32 %v2792, %v2834
  %v2836 = vpop.f32.mrb[0].mxu0
  %v2837 = vadd.f32 %v2794, %v2836
  %v2838 = vpop.f32.mrb[0].mxu0
  %v2839 = vadd.f32 %v2796, %v2838
  %v2840 = vpop.f32.mrb[0].mxu0
  %v2841 = vadd.f32 %v2798, %v2840
  %2842 = vdwg.mxu0
  %2843 = vmatprep.subr.bf16.mxu0 %v1978
  %2844 = vmatpush1.bf16.msra.mxu0 %v1977
  %2845 = vmatprep.subr.bf16.mxu0 %v1980
  %2846 = vmatpush1.bf16.msra.mxu0 %v1979
  %2847 = vmatprep.subr.bf16.mxu0 %v1982
  %2848 = vmatpush1.bf16.msra.mxu0 %v1981
  %2849 = vmatprep.subr.bf16.mxu0 %v1984
  %2850 = vmatpush1.bf16.msra.mxu0 %v1983
  %2851 = vmatprep.subr.bf16.mxu0 %v1986
  %2852 = vmatpush1.bf16.msra.mxu0 %v1985
  %2853 = vmatprep.subr.bf16.mxu0 %v1988
  %2854 = vmatpush1.bf16.msra.mxu0 %v1987
  %2855 = vmatprep.subr.bf16.mxu0 %v1990
  %2856 = vmatpush1.bf16.msra.mxu0 %v1989
  %2857 = vmatprep.subr.bf16.mxu0 %v1992
  %2858 = vmatpush1.bf16.msra.mxu0 %v1991
  %2859 = vmatprep.subr.bf16.mxu0 %v1994
  %2860 = vmatpush1.bf16.msra.mxu0 %v1993
  %2861 = vmatprep.subr.bf16.mxu0 %v1996
  %2862 = vmatpush1.bf16.msra.mxu0 %v1995
  %2863 = vmatprep.subr.bf16.mxu0 %v1998
  %2864 = vmatpush1.bf16.msra.mxu0 %v1997
  %2865 = vmatprep.subr.bf16.mxu0 %v2000
  %2866 = vmatpush1.bf16.msra.mxu0 %v1999
  %2867 = vmatprep.subr.bf16.mxu0 %v2002
  %2868 = vmatpush1.bf16.msra.mxu0 %v2001
  %2869 = vmatprep.subr.bf16.mxu0 %v2004
  %2870 = vmatpush1.bf16.msra.mxu0 %v2003
  %2871 = vmatprep.subr.bf16.mxu0 %v2006
  %2872 = vmatpush1.bf16.msra.mxu0 %v2005
  %2873 = vmatprep.subr.bf16.mxu0 %v2008
  %2874 = vmatpush1.bf16.msra.mxu0 %v2007
  %2875 = vmatprep.mubr.bf16.mxu0 %v548
  %2876 = vmatmul.mubr.bf16.gmra.mrb[0].mxu0 %v547
  %v2877 = vpop.f32.mrb[0].mxu0
  %v2878 = vadd.f32 %v2835, %v2877
  %v2879 = vpop.f32.mrb[0].mxu0
  %v2880 = vadd.f32 %v2837, %v2879
  %v2881 = vpop.f32.mrb[0].mxu0
  %v2882 = vadd.f32 %v2839, %v2881
  %v2883 = vpop.f32.mrb[0].mxu0
  %v2884 = vadd.f32 %v2841, %v2883
  %2885 = vdwg.mxu0
  %2886 = vmatprep.subr.bf16.mxu0 %v2010
  %2887 = vmatpush1.bf16.msra.mxu0 %v2009
  %2888 = vmatprep.subr.bf16.mxu0 %v2012
  %2889 = vmatpush1.bf16.msra.mxu0 %v2011
  %2890 = vmatprep.subr.bf16.mxu0 %v2014
  %2891 = vmatpush1.bf16.msra.mxu0 %v2013
  %2892 = vmatprep.subr.bf16.mxu0 %v2016
  %2893 = vmatpush1.bf16.msra.mxu0 %v2015
  %2894 = vmatprep.subr.bf16.mxu0 %v2018
  %2895 = vmatpush1.bf16.msra.mxu0 %v2017
  %2896 = vmatprep.subr.bf16.mxu0 %v2020
  %2897 = vmatpush1.bf16.msra.mxu0 %v2019
  %2898 = vmatprep.subr.bf16.mxu0 %v2022
  %2899 = vmatpush1.bf16.msra.mxu0 %v2021
  %2900 = vmatprep.subr.bf16.mxu0 %v2024
  %2901 = vmatpush1.bf16.msra.mxu0 %v2023
  %2902 = vmatprep.subr.bf16.mxu0 %v2026
  %2903 = vmatpush1.bf16.msra.mxu0 %v2025
  %2904 = vmatprep.subr.bf16.mxu0 %v2028
  %2905 = vmatpush1.bf16.msra.mxu0 %v2027
  %2906 = vmatprep.subr.bf16.mxu0 %v2030
  %2907 = vmatpush1.bf16.msra.mxu0 %v2029
  %2908 = vmatprep.subr.bf16.mxu0 %v2032
  %2909 = vmatpush1.bf16.msra.mxu0 %v2031
  %2910 = vmatprep.subr.bf16.mxu0 %v2034
  %2911 = vmatpush1.bf16.msra.mxu0 %v2033
  %2912 = vmatprep.subr.bf16.mxu0 %v2036
  %2913 = vmatpush1.bf16.msra.mxu0 %v2035
  %2914 = vmatprep.subr.bf16.mxu0 %v2038
  %2915 = vmatpush1.bf16.msra.mxu0 %v2037
  %2916 = vmatprep.subr.bf16.mxu0 %v2040
  %2917 = vmatpush1.bf16.msra.mxu0 %v2039
  %2918 = vmatprep.mubr.bf16.mxu0 %v550
  %2919 = vmatmul.mubr.bf16.gmra.mrb[0].mxu0 %v549
  %v2920 = vpop.f32.mrb[0].mxu0
  %v2921 = vadd.f32 %v2878, %v2920
  %v2922 = vpop.f32.mrb[0].mxu0
  %v2923 = vadd.f32 %v2880, %v2922
  %v2924 = vpop.f32.mrb[0].mxu0
  %v2925 = vadd.f32 %v2882, %v2924
  %v2926 = vpop.f32.mrb[0].mxu0
  %v2927 = vadd.f32 %v2884, %v2926
  %2928 = vdwg.mxu0
  %2929 = vmatprep.subr.bf16.mxu0 %v2042
  %2930 = vmatpush1.bf16.msra.mxu0 %v2041
  %2931 = vmatprep.subr.bf16.mxu0 %v2044
  %2932 = vmatpush1.bf16.msra.mxu0 %v2043
  %2933 = vmatprep.subr.bf16.mxu0 %v2046
  %2934 = vmatpush1.bf16.msra.mxu0 %v2045
  %2935 = vmatprep.subr.bf16.mxu0 %v2048
  %2936 = vmatpush1.bf16.msra.mxu0 %v2047
  %2937 = vmatprep.subr.bf16.mxu0 %v2050
  %2938 = vmatpush1.bf16.msra.mxu0 %v2049
  %2939 = vmatprep.subr.bf16.mxu0 %v2052
  %2940 = vmatpush1.bf16.msra.mxu0 %v2051
  %2941 = vmatprep.subr.bf16.mxu0 %v2054
  %2942 = vmatpush1.bf16.msra.mxu0 %v2053
  %2943 = vmatprep.subr.bf16.mxu0 %v2056
  %2944 = vmatpush1.bf16.msra.mxu0 %v2055
  %2945 = vmatprep.subr.bf16.mxu0 %v2058
  %2946 = vmatpush1.bf16.msra.mxu0 %v2057
  %2947 = vmatprep.subr.bf16.mxu0 %v2060
  %2948 = vmatpush1.bf16.msra.mxu0 %v2059
  %2949 = vmatprep.subr.bf16.mxu0 %v2062
  %2950 = vmatpush1.bf16.msra.mxu0 %v2061
  %2951 = vmatprep.subr.bf16.mxu0 %v2064
  %2952 = vmatpush1.bf16.msra.mxu0 %v2063
  %2953 = vmatprep.subr.bf16.mxu0 %v2066
  %2954 = vmatpush1.bf16.msra.mxu0 %v2065
  %2955 = vmatprep.subr.bf16.mxu0 %v2068
  %2956 = vmatpush1.bf16.msra.mxu0 %v2067
  %2957 = vmatprep.subr.bf16.mxu0 %v2070
  %2958 = vmatpush1.bf16.msra.mxu0 %v2069
  %2959 = vmatprep.subr.bf16.mxu0 %v2072
  %2960 = vmatpush1.bf16.msra.mxu0 %v2071
  %2961 = vmatprep.mubr.bf16.mxu0 %v552
  %2962 = vmatmul.mubr.bf16.gmra.mrb[0].mxu0 %v551
  %v2963 = vpop.f32.mrb[0].mxu0
  %v2964 = vadd.f32 %v2921, %v2963
  %v2965 = vpop.f32.mrb[0].mxu0
  %v2966 = vadd.f32 %v2923, %v2965
  %v2967 = vpop.f32.mrb[0].mxu0
  %v2968 = vadd.f32 %v2925, %v2967
  %v2969 = vpop.f32.mrb[0].mxu0
  %v2970 = vadd.f32 %v2927, %v2969
  %2971 = vdwg.mxu0
  %2972 = vmatprep.subr.bf16.mxu0 %v2074
  %2973 = vmatpush1.bf16.msra.mxu0 %v2073
  %2974 = vmatprep.subr.bf16.mxu0 %v2076
  %2975 = vmatpush1.bf16.msra.mxu0 %v2075
  %2976 = vmatprep.subr.bf16.mxu0 %v2078
  %2977 = vmatpush1.bf16.msra.mxu0 %v2077
  %2978 = vmatprep.subr.bf16.mxu0 %v2080
  %2979 = vmatpush1.bf16.msra.mxu0 %v2079
  %2980 = vmatprep.subr.bf16.mxu0 %v2082
  %2981 = vmatpush1.bf16.msra.mxu0 %v2081
  %2982 = vmatprep.subr.bf16.mxu0 %v2084
  %2983 = vmatpush1.bf16.msra.mxu0 %v2083
  %2984 = vmatprep.subr.bf16.mxu0 %v2086
  %2985 = vmatpush1.bf16.msra.mxu0 %v2085
  %2986 = vmatprep.subr.bf16.mxu0 %v2088
  %2987 = vmatpush1.bf16.msra.mxu0 %v2087
  %2988 = vmatprep.subr.bf16.mxu0 %v2090
  %2989 = vmatpush1.bf16.msra.mxu0 %v2089
  %2990 = vmatprep.subr.bf16.mxu0 %v2092
  %2991 = vmatpush1.bf16.msra.mxu0 %v2091
  %2992 = vmatprep.subr.bf16.mxu0 %v2094
  %2993 = vmatpush1.bf16.msra.mxu0 %v2093
  %2994 = vmatprep.subr.bf16.mxu0 %v2096
  %2995 = vmatpush1.bf16.msra.mxu0 %v2095
  %2996 = vmatprep.subr.bf16.mxu0 %v2098
  %2997 = vmatpush1.bf16.msra.mxu0 %v2097
  %2998 = vmatprep.subr.bf16.mxu0 %v2100
  %2999 = vmatpush1.bf16.msra.mxu0 %v2099
  %3000 = vmatprep.subr.bf16.mxu0 %v2102
  %3001 = vmatpush1.bf16.msra.mxu0 %v2101
  %3002 = vmatprep.subr.bf16.mxu0 %v2104
  %3003 = vmatpush1.bf16.msra.mxu0 %v2103
  %3004 = vmatprep.mubr.bf16.mxu0 %v554
  %3005 = vmatmul.mubr.bf16.gmra.mrb[0].mxu0 %v553
  %v3006 = vpop.f32.mrb[0].mxu0
  %v3007 = vadd.f32 %v2964, %v3006
  %v3008 = vpop.f32.mrb[0].mxu0
  %v3009 = vadd.f32 %v2966, %v3008
  %v3010 = vpop.f32.mrb[0].mxu0
  %v3011 = vadd.f32 %v2968, %v3010
  %v3012 = vpop.f32.mrb[0].mxu0
  %v3013 = vadd.f32 %v2970, %v3012
  %3014 = vdwg.mxu0
  %3015 = vmatprep.subr.bf16.mxu0 %v2106
  %3016 = vmatpush1.bf16.msra.mxu0 %v2105
  %3017 = vmatprep.subr.bf16.mxu0 %v2108
  %3018 = vmatpush1.bf16.msra.mxu0 %v2107
  %3019 = vmatprep.subr.bf16.mxu0 %v2110
  %3020 = vmatpush1.bf16.msra.mxu0 %v2109
  %3021 = vmatprep.subr.bf16.mxu0 %v2112
  %3022 = vmatpush1.bf16.msra.mxu0 %v2111
  %3023 = vmatprep.subr.bf16.mxu0 %v2114
  %3024 = vmatpush1.bf16.msra.mxu0 %v2113
  %3025 = vmatprep.subr.bf16.mxu0 %v2116
  %3026 = vmatpush1.bf16.msra.mxu0 %v2115
  %3027 = vmatprep.subr.bf16.mxu0 %v2118
  %3028 = vmatpush1.bf16.msra.mxu0 %v2117
  %3029 = vmatprep.subr.bf16.mxu0 %v2120
  %3030 = vmatpush1.bf16.msra.mxu0 %v2119
  %3031 = vmatprep.subr.bf16.mxu0 %v2122
  %3032 = vmatpush1.bf16.msra.mxu0 %v2121
  %3033 = vmatprep.subr.bf16.mxu0 %v2124
  %3034 = vmatpush1.bf16.msra.mxu0 %v2123
  %3035 = vmatprep.subr.bf16.mxu0 %v2126
  %3036 = vmatpush1.bf16.msra.mxu0 %v2125
  %3037 = vmatprep.subr.bf16.mxu0 %v2128
  %3038 = vmatpush1.bf16.msra.mxu0 %v2127
  %3039 = vmatprep.subr.bf16.mxu0 %v2130
  %3040 = vmatpush1.bf16.msra.mxu0 %v2129
  %3041 = vmatprep.subr.bf16.mxu0 %v2132
  %3042 = vmatpush1.bf16.msra.mxu0 %v2131
  %3043 = vmatprep.subr.bf16.mxu0 %v2134
  %3044 = vmatpush1.bf16.msra.mxu0 %v2133
  %3045 = vmatprep.subr.bf16.mxu0 %v2136
  %3046 = vmatpush1.bf16.msra.mxu0 %v2135
  %3047 = vmatprep.mubr.bf16.mxu0 %v556
  %3048 = vmatmul.mubr.bf16.gmra.mrb[0].mxu0 %v555
  %v3049 = vpop.f32.mrb[0].mxu0
  %v3050 = vadd.f32 %v3007, %v3049
  %v3051 = vpop.f32.mrb[0].mxu0
  %v3052 = vadd.f32 %v3009, %v3051
  %v3053 = vpop.f32.mrb[0].mxu0
  %v3054 = vadd.f32 %v3011, %v3053
  %v3055 = vpop.f32.mrb[0].mxu0
  %v3056 = vadd.f32 %v3013, %v3055
  %3057 = vdwg.mxu0
  %3058 = vmatprep.subr.bf16.mxu0 %v2138
  %3059 = vmatpush1.bf16.msra.mxu0 %v2137
  %3060 = vmatprep.subr.bf16.mxu0 %v2140
  %3061 = vmatpush1.bf16.msra.mxu0 %v2139
  %3062 = vmatprep.subr.bf16.mxu0 %v2142
  %3063 = vmatpush1.bf16.msra.mxu0 %v2141
  %3064 = vmatprep.subr.bf16.mxu0 %v2144
  %3065 = vmatpush1.bf16.msra.mxu0 %v2143
  %3066 = vmatprep.subr.bf16.mxu0 %v2146
  %3067 = vmatpush1.bf16.msra.mxu0 %v2145
  %3068 = vmatprep.subr.bf16.mxu0 %v2148
  %3069 = vmatpush1.bf16.msra.mxu0 %v2147
  %3070 = vmatprep.subr.bf16.mxu0 %v2150
  %3071 = vmatpush1.bf16.msra.mxu0 %v2149
  %3072 = vmatprep.subr.bf16.mxu0 %v2152
  %3073 = vmatpush1.bf16.msra.mxu0 %v2151
  %3074 = vmatprep.subr.bf16.mxu0 %v2154
  %3075 = vmatpush1.bf16.msra.mxu0 %v2153
  %3076 = vmatprep.subr.bf16.mxu0 %v2156
  %3077 = vmatpush1.bf16.msra.mxu0 %v2155
  %3078 = vmatprep.subr.bf16.mxu0 %v2158
  %3079 = vmatpush1.bf16.msra.mxu0 %v2157
  %3080 = vmatprep.subr.bf16.mxu0 %v2160
  %3081 = vmatpush1.bf16.msra.mxu0 %v2159
  %3082 = vmatprep.subr.bf16.mxu0 %v2162
  %3083 = vmatpush1.bf16.msra.mxu0 %v2161
  %3084 = vmatprep.subr.bf16.mxu0 %v2164
  %3085 = vmatpush1.bf16.msra.mxu0 %v2163
  %3086 = vmatprep.subr.bf16.mxu0 %v2166
  %3087 = vmatpush1.bf16.msra.mxu0 %v2165
  %3088 = vmatprep.subr.bf16.mxu0 %v2168
  %3089 = vmatpush1.bf16.msra.mxu0 %v2167
  %3090 = vmatprep.mubr.bf16.mxu0 %v558
  %3091 = vmatmul.mubr.bf16.gmra.mrb[0].mxu0 %v557
  %v3092 = vpop.f32.mrb[0].mxu0
  %v3093 = vadd.f32 %v3050, %v3092
  %v3094 = vpop.f32.mrb[0].mxu0
  %v3095 = vadd.f32 %v3052, %v3094
  %v3096 = vpop.f32.mrb[0].mxu0
  %v3097 = vadd.f32 %v3054, %v3096
  %v3098 = vpop.f32.mrb[0].mxu0
  %v3099 = vadd.f32 %v3056, %v3098
  %3100 = vdwg.mxu0
  %3101 = vmatprep.subr.bf16.mxu0 %v2170
  %3102 = vmatpush1.bf16.msra.mxu0 %v2169
  %3103 = vmatprep.subr.bf16.mxu0 %v2172
  %3104 = vmatpush1.bf16.msra.mxu0 %v2171
  %3105 = vmatprep.subr.bf16.mxu0 %v2174
  %3106 = vmatpush1.bf16.msra.mxu0 %v2173
  %3107 = vmatprep.subr.bf16.mxu0 %v2176
  %3108 = vmatpush1.bf16.msra.mxu0 %v2175
  %3109 = vmatprep.subr.bf16.mxu0 %v2178
  %3110 = vmatpush1.bf16.msra.mxu0 %v2177
  %3111 = vmatprep.subr.bf16.mxu0 %v2180
  %3112 = vmatpush1.bf16.msra.mxu0 %v2179
  %3113 = vmatprep.subr.bf16.mxu0 %v2182
  %3114 = vmatpush1.bf16.msra.mxu0 %v2181
  %3115 = vmatprep.subr.bf16.mxu0 %v2184
  %3116 = vmatpush1.bf16.msra.mxu0 %v2183
  %3117 = vmatprep.subr.bf16.mxu0 0
  %3118 = vmatpush1.bf16.msra.mxu0 0
  %3119 = vmatprep.subr.bf16.mxu0 0
  %3120 = vmatpush1.bf16.msra.mxu0 0
  %3121 = vmatprep.subr.bf16.mxu0 0
  %3122 = vmatpush1.bf16.msra.mxu0 0
  %3123 = vmatprep.subr.bf16.mxu0 0
  %3124 = vmatpush1.bf16.msra.mxu0 0
  %3125 = vmatprep.subr.bf16.mxu0 0
  %3126 = vmatpush1.bf16.msra.mxu0 0
  %3127 = vmatprep.subr.bf16.mxu0 0
  %3128 = vmatpush1.bf16.msra.mxu0 0
  %3129 = vmatprep.subr.bf16.mxu0 0
  %3130 = vmatpush1.bf16.msra.mxu0 0
  %3131 = vmatprep.subr.bf16.mxu0 0
  %3132 = vmatpush1.bf16.msra.mxu0 0
  %3133 = vmatprep.mubr.bf16.mxu0 0
  %3134 = vmatmul.mubr.bf16.gmra.mrb[0].mxu0 %v559
  %v3135 = vpop.f32.mrb[0].mxu0
  %v3136 = vadd.f32 %v3093, %v3135
  %v3137 = vpop.f32.mrb[0].mxu0
  %v3138 = vadd.f32 %v3095, %v3137
  %v3139 = vpop.f32.mrb[0].mxu0
  %v3140 = vadd.f32 %v3097, %v3139
  %v3141 = vpop.f32.mrb[0].mxu0
  %v3142 = vadd.f32 %v3099, %v3141
  %3143 = vdwg.mxu0
  %v3144 = vmax.f32 %v3136, 0.0
  %v3145 = vmax.f32 %v3138, 0.0
  %v3146 = vmax.f32 %v3140, 0.0
  %v3147 = vmax.f32 %v3142, 0.0
  %v3148 = vpack.c.bf16 %v3146, %v3144
  %v3149 = vpack.c.bf16 %v3147, %v3145
  %v3150 = vld [vmem:[%s3] sm:$0xf]
  %v3151 = vld [vmem:[%s3 + $0x4] sm:$0xf]
  %v3152 = vld [vmem:[%s3 + $0x8] sm:$0xf]
  %v3153 = vld [vmem:[%s3 + $0xc] sm:$0xf]
  %v3154 = vld [vmem:[%s3 + $0x10] sm:$0xf]
  %v3155 = vld [vmem:[%s3 + $0x14] sm:$0xf]
  %v3156 = vld [vmem:[%s3 + $0x18] sm:$0xf]
  %v3157 = vld [vmem:[%s3 + $0x1c] sm:$0xf]
  %v3158 = vld [vmem:[%s3 + $0x20] sm:$0xf]
  %v3159 = vld [vmem:[%s3 + $0x24] sm:$0xf]
  %v3160 = vld [vmem:[%s3 + $0x28] sm:$0xf]
  %v3161 = vld [vmem:[%s3 + $0x2c] sm:$0xf]
  %v3162 = vld [vmem:[%s3 + $0x30] sm:$0xf]
  %v3163 = vld [vmem:[%s3 + $0x34] sm:$0xf]
  %v3164 = vld [vmem:[%s3 + $0x38] sm:$0xf]
  %v3165 = vld [vmem:[%s3 + $0x3c] sm:$0xf]
  %v3166 = vld [vmem:[%s3 + $0x40] sm:$0xf]
  %v3167 = vld [vmem:[%s3 + $0x44] sm:$0xf]
  %v3168 = vld [vmem:[%s3 + $0x48] sm:$0xf]
  %v3169 = vld [vmem:[%s3 + $0x4c] sm:$0xf]
  %v3170 = vld [vmem:[%s3 + $0x50] sm:$0xf]
  %v3171 = vld [vmem:[%s3 + $0x54] sm:$0xf]
  %v3172 = vld [vmem:[%s3 + $0x58] sm:$0xf]
  %v3173 = vld [vmem:[%s3 + $0x5c] sm:$0xf]
  %v3174 = vld [vmem:[%s3 + $0x60] sm:$0xf]
  %v3175 = vld [vmem:[%s3 + $0x64] sm:$0xf]
  %v3176 = vld [vmem:[%s3 + $0x68] sm:$0xf]
  %v3177 = vld [vmem:[%s3 + $0x6c] sm:$0xf]
  %v3178 = vld [vmem:[%s3 + $0x70] sm:$0xf]
  %v3179 = vld [vmem:[%s3 + $0x74] sm:$0xf]
  %v3180 = vld [vmem:[%s3 + $0x78] sm:$0xf]
  %v3181 = vld [vmem:[%s3 + $0x7c] sm:$0xf]
  %v3182 = vld [vmem:[%s4] sm:$0x1]
  %v3184 = vlaneseq
  %v3185 = vshrl.u32 %v3184, 7
  %v3186 = vsub.s32 0, %v3185
  %v3187 = vrot.slane %v3182, %v3186
  %v3221 = vunpack.c.l.b16 %v3150
  %v3222 = vunpack.c.l.b16 %v3151
  %v3223 = vunpack.c.l.b16 %v3152
  %v3224 = vunpack.c.l.b16 %v3153
  %v3225 = vunpack.c.l.b16 %v3154
  %v3226 = vunpack.c.l.b16 %v3155
  %v3227 = vunpack.c.l.b16 %v3156
  %v3228 = vunpack.c.l.b16 %v3157
  %v3229 = vunpack.c.l.b16 %v3158
  %v3230 = vunpack.c.l.b16 %v3159
  %v3231 = vunpack.c.l.b16 %v3160
  %v3232 = vunpack.c.l.b16 %v3161
  %v3233 = vunpack.c.l.b16 %v3162
  %v3234 = vunpack.c.l.b16 %v3163
  %v3235 = vunpack.c.l.b16 %v3164
  %v3236 = vunpack.c.l.b16 %v3165
  %v3237 = vunpack.c.l.b16 %v3166
  %v3238 = vunpack.c.l.b16 %v3167
  %v3239 = vunpack.c.l.b16 %v3168
  %v3240 = vunpack.c.l.b16 %v3169
  %v3241 = vunpack.c.l.b16 %v3170
  %v3242 = vunpack.c.l.b16 %v3171
  %v3243 = vunpack.c.l.b16 %v3172
  %v3244 = vunpack.c.l.b16 %v3173
  %v3245 = vunpack.c.l.b16 %v3174
  %v3246 = vunpack.c.l.b16 %v3175
  %v3247 = vunpack.c.l.b16 %v3176
  %v3248 = vunpack.c.l.b16 %v3177
  %v3249 = vunpack.c.l.b16 %v3178
  %v3250 = vunpack.c.l.b16 %v3179
  %v3251 = vunpack.c.l.b16 %v3180
  %v3252 = vunpack.c.l.b16 %v3181
  %v3253 = vpack.c.b16 %v3222, %v3221
  %v3254 = vpack.c.b16 %v3224, %v3223
  %v3255 = vpack.c.b16 %v3226, %v3225
  %v3256 = vpack.c.b16 %v3228, %v3227
  %v3257 = vpack.c.b16 %v3230, %v3229
  %v3258 = vpack.c.b16 %v3232, %v3231
  %v3259 = vpack.c.b16 %v3234, %v3233
  %v3260 = vpack.c.b16 %v3236, %v3235
  %v3261 = vpack.c.b16 %v3238, %v3237
  %v3262 = vpack.c.b16 %v3240, %v3239
  %v3263 = vpack.c.b16 %v3242, %v3241
  %v3264 = vpack.c.b16 %v3244, %v3243
  %v3265 = vpack.c.b16 %v3246, %v3245
  %v3266 = vpack.c.b16 %v3248, %v3247
  %v3267 = vpack.c.b16 %v3250, %v3249
  %v3268 = vpack.c.b16 %v3252, %v3251
  %3285 = vmatprep.subr.bf16.mxu0 0
  %3286 = vmatpush1.bf16.msra.mxu0 %v3253
  %3287 = vmatprep.subr.bf16.mxu0 0
  %3288 = vmatpush1.bf16.msra.mxu0 %v3254
  %3289 = vmatprep.subr.bf16.mxu0 0
  %3290 = vmatpush1.bf16.msra.mxu0 %v3255
  %3291 = vmatprep.subr.bf16.mxu0 0
  %3292 = vmatpush1.bf16.msra.mxu0 %v3256
  %3293 = vmatprep.subr.bf16.mxu0 0
  %3294 = vmatpush1.bf16.msra.mxu0 %v3257
  %3295 = vmatprep.subr.bf16.mxu0 0
  %3296 = vmatpush1.bf16.msra.mxu0 %v3258
  %3297 = vmatprep.subr.bf16.mxu0 0
  %3298 = vmatpush1.bf16.msra.mxu0 %v3259
  %3299 = vmatprep.subr.bf16.mxu0 0
  %3300 = vmatpush1.bf16.msra.mxu0 %v3260
  %3301 = vmatprep.subr.bf16.mxu0 0
  %3302 = vmatpush1.bf16.msra.mxu0 %v3261
  %3303 = vmatprep.subr.bf16.mxu0 0
  %3304 = vmatpush1.bf16.msra.mxu0 %v3262
  %3305 = vmatprep.subr.bf16.mxu0 0
  %3306 = vmatpush1.bf16.msra.mxu0 %v3263
  %3307 = vmatprep.subr.bf16.mxu0 0
  %3308 = vmatpush1.bf16.msra.mxu0 %v3264
  %3309 = vmatprep.subr.bf16.mxu0 0
  %3310 = vmatpush1.bf16.msra.mxu0 %v3265
  %3311 = vmatprep.subr.bf16.mxu0 0
  %3312 = vmatpush1.bf16.msra.mxu0 %v3266
  %3313 = vmatprep.subr.bf16.mxu0 0
  %3314 = vmatpush1.bf16.msra.mxu0 %v3267
  %3315 = vmatprep.subr.bf16.mxu0 0
  %3316 = vmatpush1.bf16.msra.mxu0 %v3268
  %3317 = vmatprep.mubr.bf16.mxu0 %v3149
  %3318 = vmatmul.mubr.bf16.gmra.mrb[0].mxu0 %v3148
  %v3319 = vpop.f32.mrb[0].mxu0
  %v3320 = vadd.f32 %v3187, %v3319
  %v3321 = vpop.f32.mrb[0].mxu0
  %v3322 = vpop.f32.mrb[0].mxu0
  %v3323 = vadd.f32 %v3187, %v3322
  %v3324 = vpop.f32.mrb[0].mxu0
  %3325 = vdwg.mxu0
  %3326 = vst [vmem:[%s5] sm:$0xff] %v3320
  %3327 = vst [vmem:[%s5 + $0x8] sm:$0xff] %v3323
  // Predicated region
  $region22: #{qnetwork_forward.5} parent=0 // pred_check
    _
  $region23: #{qnetwork_forward.5} parent=0 // pred_check_branch
    %3329 = sbr.rel (0) target = $region25
  $region24: #{qnetwork_forward.5} parent=0 // pred_region
    _
  $region25: #{qnetwork_forward.5} parent=0 // pred_fallthru
    _
  // Predicated region
  $region26: #{qnetwork_forward.5} parent=0 // pred_check
    _
  $region27: #{qnetwork_forward.5} parent=0 // pred_check_branch
    %3331 = sbr.rel (0) target = $region29
  $region28: #{qnetwork_forward.5} parent=0 // pred_region
    _
  $region29: #{qnetwork_forward.5} parent=0 // pred_fallthru
    _

</llo_original>
